<compile_context>
chip_gen: v7x
topology: tpu7x:2x2x1
jax: 0.10.0
libtpu: 0.0.40
codegen_flags: <defaults>
</compile_context>

<pallas_src>
import numpy as np
import jax
import jax.numpy as jnp
from jax.experimental import pallas as pl
from jax.experimental.pallas import tpu as pltpu

BN_EPS = 1e-5
VMEM_LIMIT_BYTES = 32 * 1024 * 1024   # fits with headroom under v7x's 64 MiB VMEM


# ----------------------------- kernel helpers -----------------------------

def _bn(x):
    """BatchNorm1d, training-mode (biased) batch stats, gamma=1 / beta=0.
    Normalizes over all leading axes in ONE pass (sum and sum-of-squares)."""
    red = tuple(range(x.ndim - 1))
    n = 1.0
    for ax in red:
        n *= x.shape[ax]
    s, q = x, x * x
    for ax in reversed(red):
        s = jnp.sum(s, axis=ax, keepdims=True)
        q = jnp.sum(q, axis=ax, keepdims=True)
    mean = s * (1.0 / n)
    var = jnp.maximum(q * (1.0 / n) - mean * mean, 0.0)
    return (x - mean) * jax.lax.rsqrt(var + BN_EPS)


def _cheb(lhat, x, w, b, K):
    """sum_k T_k(Lhat) x W_k + b for one graph.  Propagations run bf16 on the MXU
    with f32 accumulation; all K Chebyshev terms are applied with one wide
    (K*cin)-contraction matmul."""
    def prop(t):
        return jnp.dot(lhat, t.astype(jnp.bfloat16),
                       preferred_element_type=jnp.float32)

    txs = [x]
    if K > 1:
        t_prev, t_cur = x, prop(x)
        txs.append(t_cur)
        for _ in range(2, K):
            t_next = 2.0 * prop(t_cur) - t_prev
            txs.append(t_next)
            t_prev, t_cur = t_cur, t_next
    t_all = txs[0] if K == 1 else jnp.concatenate(txs, axis=-1)   # (A, K*cin)
    return jnp.dot(t_all, w, preferred_element_type=jnp.float32) + b


# ----------------------------- Pallas kernels -----------------------------

def make_conv_stack_kernel(K):
    """Full deformed-structure conv stack, grid = (num_layers, num_graphs).

    Per step: ChebConv for one graph (one Lhat block).  At the last graph of a
    layer: cross-graph BN -> tanh -> BN over the VMEM-resident activations.
    At the very last step: fused split + adaptive-average-pool epilogue.
    """
    def kernel(lhat_ref, x0_ref, w_ref, b_ref, pool_ref, o_ref, act_ref):
        l = pl.program_id(0)
        b = pl.program_id(1)
        n_l = pl.num_programs(0)
        n_b = pl.num_programs(1)

        # Layer-0 seed: copy the (channel-padded) coordinates into the scratch.
        @pl.when(l == 0)
        def _seed():
            act_ref[b] = x0_ref[0]

        y = _cheb(lhat_ref[0], act_ref[b], w_ref[0], b_ref[0], K)
        act_ref[b] = y          # layer-l input for graph b is no longer needed

        # Finalize the layer once every graph's conv output is in VMEM.
        @pl.when(b == n_b - 1)
        def _finalize_layer():
            z = _bn(jnp.tanh(_bn(act_ref[...])))
            act_ref[...] = z    # dropout(p=0.15) is the identity in eval mode

        @pl.when(jnp.logical_and(b == n_b - 1, l == n_l - 1))
        def _emit_pooled():
            z = act_ref[...]
            o_ref[...] = jnp.einsum("bwa,bah->bwh", pool_ref[...],
                                    z.astype(jnp.bfloat16),
                                    preferred_element_type=jnp.float32)
    return kernel


def make_ref_stack_kernel(K):
    """Reference-structure conv stack, grid = (num_ref_layers,).

    Lhat_ref stays VMEM-resident across all layers (constant index map); the
    output block is used as the inter-layer carry.  The epilogue fuses the
    residue-only (batch-independent) part of the phase head:
        Uh_S = ((z @ W1a^T + b1) @ W2a^T + b2) @ (W0h^T * (1 + eps)^-0.5).
    """
    def kernel(lhat_ref, x0_ref, w_ref, b_ref,
               w1a_ref, b1_ref, w2a_ref, b2_ref, w0h_ref, o_ref):
        l = pl.program_id(0)
        n_l = pl.num_programs(0)

        @pl.when(l == 0)
        def _seed():
            o_ref[...] = x0_ref[...]

        y = _cheb(lhat_ref[...], o_ref[...], w_ref[0], b_ref[0], K)
        z = _bn(jnp.tanh(y))                    # ChebConv -> tanh -> BN(batch stats)
        o_ref[...] = z

        @pl.when(l == n_l - 1)
        def _phase_head_residue_part():
            s = jnp.dot(z, w1a_ref[...], preferred_element_type=jnp.float32) + b1_ref[...]
            s = jnp.dot(s, w2a_ref[...], preferred_element_type=jnp.float32) + b2_ref[...]
            o_ref[...] = jnp.dot(s, w0h_ref[...], preferred_element_type=jnp.float32)
    return kernel


def phase_head_kernel(uhs_ref, bb_ref, sc_ref, mbb_ref, msc_ref,
                      w1h_ref, b1h_ref, o_ref):
    """Per-graph remainder of phase1 -> phase2 -> MLP head.

    The residue-only slab uhs = Uh_S is precomputed once (ref-stack epilogue);
    the per-graph weights are pre-folded on the host, so this is just two tiny
    row matmuls, a broadcast add + ReLU, and the (R, H) x (H, 3) output matmul.
    """
    uhg = (jnp.dot(bb_ref[0], mbb_ref[...], preferred_element_type=jnp.float32)
           + jnp.dot(sc_ref[0], msc_ref[...], preferred_element_type=jnp.float32))
    h = jnp.maximum(uhs_ref[...] + uhg, 0.0)
    # TODO(synk): output last dim = 3 -> masked stores; a lane-dense (3, R) layout
    # is only worth it if this shows in a profile (bytes here are tiny).
    o_ref[0] = (jnp.dot(h, w1h_ref[...], preferred_element_type=jnp.float32)
                + b1h_ref[...])


# ----------------------------- Pallas wrappers -----------------------------

def conv_stack(lhat_blocks, x0, w_stack, b_stack, pool_mats):
    bsz, a, h = x0.shape
    n_layers, kh, _ = w_stack.shape
    K = kh // h
    w2 = pool_mats.shape[1]
    return pl.pallas_call(
        make_conv_stack_kernel(K),
        out_shape=jax.ShapeDtypeStruct((bsz, w2, h), jnp.float32),
        grid=(n_layers, bsz),
        in_specs=[
            pl.BlockSpec((1, a, a), lambda l, b: (b, 0, 0)),     # per-graph Lhat
            pl.BlockSpec((1, a, h), lambda l, b: (b, 0, 0)),     # padded coords
            pl.BlockSpec((1, kh, h), lambda l, b: (l, 0, 0)),    # layer weights
            pl.BlockSpec((1, 1, h), lambda l, b: (l, 0, 0)),     # layer bias
            pl.BlockSpec((bsz, w2, a), lambda l, b: (0, 0, 0)),  # pooling matrices
        ],
        out_specs=pl.BlockSpec((bsz, w2, h), lambda l, b: (0, 0, 0)),
        scratch_shapes=[pltpu.VMEM((bsz, a, h), jnp.float32)],
        compiler_params=pltpu.CompilerParams(
            dimension_semantics=("arbitrary", "arbitrary"),
            vmem_limit_bytes=VMEM_LIMIT_BYTES),
    )(lhat_blocks, x0, w_stack, b_stack, pool_mats)


def ref_stack(lhat_ref_mat, xref0, w_stack, b_stack, w1a_t, b1, w2a_t, b2, w0h_t):
    r, h = xref0.shape
    n_layers, kh, _ = w_stack.shape
    K = kh // h
    return pl.pallas_call(
        make_ref_stack_kernel(K),
        out_shape=jax.ShapeDtypeStruct((r, h), jnp.float32),
        grid=(n_layers,),
        in_specs=[
            pl.BlockSpec((r, r), lambda l: (0, 0)),      # Lhat resident across layers
            pl.BlockSpec((r, h), lambda l: (0, 0)),
            pl.BlockSpec((1, kh, h), lambda l: (l, 0, 0)),
            pl.BlockSpec((1, 1, h), lambda l: (l, 0, 0)),
            pl.BlockSpec((h, h), lambda l: (0, 0)),
            pl.BlockSpec((1, h), lambda l: (0, 0)),
            pl.BlockSpec((h, h), lambda l: (0, 0)),
            pl.BlockSpec((1, h), lambda l: (0, 0)),
            pl.BlockSpec((h, h), lambda l: (0, 0)),
        ],
        out_specs=pl.BlockSpec((r, h), lambda l: (0, 0)),
        compiler_params=pltpu.CompilerParams(
            dimension_semantics=("arbitrary",),
            vmem_limit_bytes=VMEM_LIMIT_BYTES),
    )(lhat_ref_mat, xref0, w_stack, b_stack, w1a_t, b1, w2a_t, b2, w0h_t)


def phase_head(uhs, bb_flat, sc_flat, m_bb, m_sc, w1h_t, b1h):
    r, h = uhs.shape
    bsz, wh = bb_flat.shape
    out = pl.pallas_call(
        phase_head_kernel,
        out_shape=jax.ShapeDtypeStruct((bsz, r, 3), jnp.float32),
        grid=(bsz,),
        in_specs=[
            pl.BlockSpec((r, h), lambda b: (0, 0)),         # residue slab (resident)
            pl.BlockSpec((1, 1, wh), lambda b: (b, 0, 0)),  # backbone row of graph b
            pl.BlockSpec((1, 1, wh), lambda b: (b, 0, 0)),  # side-chain row
            pl.BlockSpec((wh, h), lambda b: (0, 0)),
            pl.BlockSpec((wh, h), lambda b: (0, 0)),
            pl.BlockSpec((h, 3), lambda b: (0, 0)),
            pl.BlockSpec((1, 3), lambda b: (0, 0)),
        ],
        out_specs=pl.BlockSpec((1, r, 3), lambda b: (b, 0, 0)),
        compiler_params=pltpu.CompilerParams(
            dimension_semantics=("parallel",),          # megacore over graphs (v7x)
            vmem_limit_bytes=VMEM_LIMIT_BYTES),
    )(uhs, bb_flat.reshape(bsz, 1, wh), sc_flat.reshape(bsz, 1, wh),
      m_bb, m_sc, w1h_t, b1h)
    return out.reshape(bsz * r, 3)


# ----------------------------- model plumbing -----------------------------

def make_lhat(edge_index, num_nodes):
    """Scaled normalized Laplacian used by ChebConv (sym norm, lambda_max=2):
       Lhat = (2/lmax) L - I = -D^{-1/2} A D^{-1/2}."""
    row, col = np.asarray(edge_index)
    a = np.zeros((num_nodes, num_nodes), np.float32)
    a[row, col] = 1.0
    np.fill_diagonal(a, 0.0)                       # remove_self_loops
    deg = a.sum(axis=1)
    dinv = np.where(deg > 0, 1.0 / np.sqrt(np.maximum(deg, 1e-12)), 0.0)
    return -(dinv[:, None] * a * dinv[None, :]).astype(np.float32)


def make_lhat_blocks(edge_index, batch_np):
    """Per-graph diagonal blocks of Lhat (cross-graph blocks are structurally
    zero for a batched graph), stored in bf16 for the MXU."""
    n = batch_np.size
    bsz = int(np.unique(batch_np).size)
    a = n // bsz
    lhat = make_lhat(edge_index, n)
    blocks = np.stack([lhat[g * a:(g + 1) * a, g * a:(g + 1) * a]
                       for g in range(bsz)], axis=0)
    return jnp.asarray(blocks, jnp.bfloat16)


def make_pool_mats(mask_np, batch_np, window):
    """Per-graph pooling matrix (B, 2W, A): rows [0, W) average backbone atoms
    into exact AdaptiveAvgPool2d bins, rows [W, 2W) the side-chain atoms."""
    bsz = int(np.unique(batch_np).size)
    a = mask_np.size // bsz
    p = np.zeros((bsz, 2 * window, a), np.float32)
    for g in range(bsz):
        m = mask_np[g * a:(g + 1) * a]
        for half, idx in enumerate((np.nonzero(m)[0], np.nonzero(~m)[0])):
            n = idx.size
            for i in range(window):
                s = (i * n) // window
                e = -((-(i + 1) * n) // window)    # ceil((i+1)*n / window)
                p[g, half * window + i, idx[s:e]] = 1.0 / (e - s)
    return jnp.asarray(p, jnp.bfloat16)


def init_params(key, hiddens_dims, K, window_size, num_layers, mlp_layers):
    assert mlp_layers == 2, "MLP head implemented for nlayer=2"
    H, W = hiddens_dims, window_size
    ks = iter(jax.random.split(key, 64))

    def w(shape, scale=0.1):
        return scale * jax.random.normal(next(ks), shape, jnp.float32)

    params = {"convs": [], "convRef": []}
    cin = 3
    for _ in range(num_layers):
        params["convs"].append((w((K, cin, H)), w((1, H))))
        cin = H
    cin = 3
    for _ in range(num_layers + 1):
        params["convRef"].append((w((K, cin, H)), w((1, H))))
        cin = H
    params["mlp_w"] = w((H, (W + 1) * H));        params["mlp_b"] = w((1, H))
    params["mlpPhase2_w"] = w((H, (W + 1) * H));  params["mlpPhase2_b"] = w((1, H))
    params["rep2_w0"] = w((H, H))                      # Linear(H, H, bias=False)
    params["rep2_w1"] = w((3, H)); params["rep2_b1"] = w((1, 3))
    # mlpRep1 / mlp2 / mlpPhase22 exist in __init__ but are unused in forward.
    return params


def _stack_cheb_weights(layer_params, h):
    """Stack per-layer ChebConv weights as (L, K*h, h); the first layer's cin
    (=3) is zero-padded to h (the activation is zero-padded to match)."""
    ws, bs = [], []
    for wk, bk in layer_params:
        K, cin, hh = wk.shape
        if cin < h:
            wk = jnp.pad(wk, ((0, 0), (0, h - cin), (0, 0)))
        ws.append(wk.reshape(K * h, hh))
        bs.append(bk.reshape(1, hh))
    return jnp.stack(ws, axis=0), jnp.stack(bs, axis=0)


def prepare_params(params, hiddens, window):
    """One-time host-side weight prep: PyTorch-style (out, in) -> pre-transposed,
    concat-Linear split, BN-eval scale folded into W0h, per-graph head weights
    folded so the phase-head kernel does minimal work."""
    H = hiddens
    inv = (1.0 + BN_EPS) ** -0.5                   # BatchNorm1d eval, stats (0, 1)
    w_conv, b_conv = _stack_cheb_weights(params["convs"], H)
    w_ref, b_ref = _stack_cheb_weights(params["convRef"], H)
    w1a_t = params["mlp_w"][:, :H].T
    w1b_t = params["mlp_w"][:, H:].T
    w2a_t = params["mlpPhase2_w"][:, :H].T
    w2b_t = params["mlpPhase2_w"][:, H:].T
    w0h_t = params["rep2_w0"].T * inv
    return dict(
        w_conv=w_conv, b_conv=b_conv, w_ref=w_ref, b_ref=b_ref,
        w1a_t=w1a_t, b1=params["mlp_b"], w2a_t=w2a_t, b2=params["mlpPhase2_b"],
        w0h_t=w0h_t,
        m_bb=w1b_t @ w2a_t @ w0h_t,                # (W*H, H): backbone -> hidden
        m_sc=w2b_t @ w0h_t,                        # (W*H, H): side-chain -> hidden
        w1h_t=params["rep2_w1"].T, b1h=params["rep2_b1"],
    )


def hno_forward(prep, x, lhat_blocks, pool_mats, xref, lhat_ref_mat):
    bsz, a, _ = lhat_blocks.shape
    h = prep["w_conv"].shape[-1]

    # ---- deformed-structure conv stack (all layers, BN/tanh/BN, split + pool) ----
    xb = jnp.pad(x.reshape(bsz, a, -1), ((0, 0), (0, 0), (0, h - x.shape[-1])))
    pooled = conv_stack(lhat_blocks, xb, prep["w_conv"], prep["b_conv"], pool_mats)

    w = pooled.shape[1] // 2
    x_backbone = pooled[:, :w, :]
    x_schain = pooled[:, w:, :]
    bb_flat = x_backbone.reshape(bsz, -1)
    sc_flat = x_schain.reshape(bsz, -1)

    # ---- reference-structure conv stack + residue-only phase-head slab ----
    xr0 = jnp.pad(xref, ((0, 0), (0, h - xref.shape[-1])))
    uhs = ref_stack(lhat_ref_mat, xr0, prep["w_ref"], prep["b_ref"],
                    prep["w1a_t"], prep["b1"], prep["w2a_t"], prep["b2"],
                    prep["w0h_t"])

    # ---- per-graph phase head ----
    result = phase_head(uhs, bb_flat, sc_flat,
                        prep["m_bb"], prep["m_sc"], prep["w1h_t"], prep["b1h"])
    return result, x_backbone, x_schain


# ----------------------------- driver -----------------------------

def ring_edges(num_nodes_per_graph, num_graphs=1):
    rows, cols = [], []
    for g in range(num_graphs):
        base = g * num_nodes_per_graph
        for i in range(num_nodes_per_graph):
            j = (i + 1) % num_nodes_per_graph
            rows += [base + i, base + j]
            cols += [base + j, base + i]
    return np.array([rows, cols], dtype=np.int64)


if __name__ == "__main__":
    # Small shapes standing in for the real model (num_residues=2191 in the
    # original module is replaced by a small synthetic reference structure).
    HIDDENS = 32
    K = 3
    WINDOW = 4
    NUM_LAYERS = 2
    MLP_LAYERS = 2
    NUM_RESIDUES = 64
    B = 2                       # number of graphs in the batch
    ATOMS_PER_GRAPH = 48        # 24 backbone + 24 side-chain atoms per graph
    N = B * ATOMS_PER_GRAPH

    key = jax.random.PRNGKey(0)
    k_x, k_ref, k_params = jax.random.split(key, 3)

    x = jax.random.normal(k_x, (N, 3), jnp.float32)                   # atom coords
    xref = jax.random.normal(k_ref, (NUM_RESIDUES, 3), jnp.float32)   # dataRef.x

    edge_index = ring_edges(ATOMS_PER_GRAPH, B)
    edge_index_ref = ring_edges(NUM_RESIDUES, 1)

    mask_np = np.tile(np.concatenate([np.ones(24, bool), np.zeros(24, bool)]), B)
    batch_np = np.repeat(np.arange(B), ATOMS_PER_GRAPH)

    lhat_blocks = make_lhat_blocks(edge_index, batch_np)              # (B, A, A) bf16
    lhat_ref_mat = jnp.asarray(make_lhat(edge_index_ref, NUM_RESIDUES),
                               jnp.bfloat16)                          # (R, R) bf16
    pool_mats = make_pool_mats(mask_np, batch_np, WINDOW)             # (B, 2W, A) bf16

    params = init_params(k_params, HIDDENS, K, WINDOW, NUM_LAYERS, MLP_LAYERS)
    prep = prepare_params(params, HIDDENS, WINDOW)   # one-time host-side weight prep

    fwd = jax.jit(hno_forward)
    result, x_backbone, x_schain = fwd(
        prep, x, lhat_blocks, pool_mats, xref, lhat_ref_mat)

    jax.block_until_ready((result, x_backbone, x_schain))
    assert result.shape == (B * NUM_RESIDUES, 3)
    assert x_backbone.shape == (B, WINDOW, HIDDENS)
    assert x_schain.shape == (B, WINDOW, HIDDENS)
    assert bool(jnp.all(jnp.isfinite(result)))
    print("KERNEL_OK")
</pallas_src>

<mosaic_0001>
module attributes {stable_mosaic.version = 11 : i64} {
  func.func @kernel(%arg0: i32, %arg1: i32, %arg2: memref<1x48x48xbf16, #tpu.memory_space<vmem>>, %arg3: memref<1x48x32xf32, #tpu.memory_space<vmem>>, %arg4: memref<1x96x32xf32, #tpu.memory_space<vmem>>, %arg5: memref<1x1x32xf32, #tpu.memory_space<vmem>>, %arg6: memref<2x8x48xbf16, #tpu.memory_space<vmem>>, %arg7: memref<2x8x32xf32, #tpu.memory_space<vmem>>, %arg8: memref<2x48x32xf32, #tpu.memory_space<vmem>>) attributes {dimension_semantics = [#tpu.dimension_semantics<arbitrary>, #tpu.dimension_semantics<arbitrary>], iteration_bounds = array<i64: 2, 2>, scalar_prefetch = 0 : i64, scratch_operands = 1 : i64, tpu.core_type = #tpu.core_type<tc>, window_params = [{transform_indices = @transform_0, window_bounds = array<i64: 1, 48, 48>}, {transform_indices = @transform_1, window_bounds = array<i64: 1, 48, 32>}, {transform_indices = @transform_2, window_bounds = array<i64: 1, 96, 32>}, {transform_indices = @transform_3, window_bounds = array<i64: 1, 1, 32>}, {pipeline_mode = #tpu.pipeline_mode<synchronous>, transform_indices = @transform_4, window_bounds = array<i64: 2, 8, 48>}, {pipeline_mode = #tpu.pipeline_mode<synchronous>, transform_indices = @transform_5, window_bounds = array<i64: 2, 8, 32>}]} {
    %c0_i32 = arith.constant 0 : i32
    %0 = arith.cmpi eq, %arg0, %c0_i32 : i32
    %1 = arith.extui %0 : i1 to i32
    %c0_i32_0 = arith.constant 0 : i32
    %2 = arith.cmpi ne, %1, %c0_i32_0 : i32
    scf.if %2 {
      %c0_20 = arith.constant 0 : index
      %c0_21 = arith.constant 0 : index
      %c0_22 = arith.constant 0 : index
      %35 = vector.load %arg3[%c0_20, %c0_21, %c0_22] : memref<1x48x32xf32, #tpu.memory_space<vmem>>, vector<1x48x32xf32>
      %36 = vector.shape_cast %35 : vector<1x48x32xf32> to vector<48x32xf32>
      %37 = arith.index_cast %arg1 : i32 to index
      %c0_23 = arith.constant 0 : index
      %c0_24 = arith.constant 0 : index
      %38 = vector.load %arg8[%37, %c0_23, %c0_24] : memref<2x48x32xf32, #tpu.memory_space<vmem>>, vector<1x48x32xf32>
      %39 = vector.shape_cast %38 : vector<1x48x32xf32> to vector<48x32xf32>
      %40 = vector.shape_cast %36 : vector<48x32xf32> to vector<1x48x32xf32>
      tpu.vector_store %arg8[%37, %c0_23, %c0_24], %40 {strides = array<i32>} : memref<2x48x32xf32, #tpu.memory_space<vmem>>, vector<1x48x32xf32>,
    } else {
    }
    %c0 = arith.constant 0 : index
    %c0_1 = arith.constant 0 : index
    %c0_2 = arith.constant 0 : index
    %3 = vector.load %arg2[%c0, %c0_1, %c0_2] : memref<1x48x48xbf16, #tpu.memory_space<vmem>>, vector<1x48x48xbf16>
    %4 = vector.shape_cast %3 : vector<1x48x48xbf16> to vector<48x48xbf16>
    %5 = arith.index_cast %arg1 : i32 to index
    %c0_3 = arith.constant 0 : index
    %c0_4 = arith.constant 0 : index
    %6 = vector.load %arg8[%5, %c0_3, %c0_4] : memref<2x48x32xf32, #tpu.memory_space<vmem>>, vector<1x48x32xf32>
    %7 = vector.shape_cast %6 : vector<1x48x32xf32> to vector<48x32xf32>
    %c0_5 = arith.constant 0 : index
    %c0_6 = arith.constant 0 : index
    %c0_7 = arith.constant 0 : index
    %8 = vector.load %arg4[%c0_5, %c0_6, %c0_7] : memref<1x96x32xf32, #tpu.memory_space<vmem>>, vector<1x96x32xf32>
    %9 = vector.shape_cast %8 : vector<1x96x32xf32> to vector<96x32xf32>
    %c0_8 = arith.constant 0 : index
    %c0_9 = arith.constant 0 : index
    %c0_10 = arith.constant 0 : index
    %10 = vector.load %arg5[%c0_8, %c0_9, %c0_10] : memref<1x1x32xf32, #tpu.memory_space<vmem>>, vector<1x1x32xf32>
    %11 = vector.shape_cast %10 : vector<1x1x32xf32> to vector<1x32xf32>
    %12 = arith.truncf %7 : vector<48x32xf32> to vector<48x32xbf16>
    %cst = arith.constant dense<0.000000e+00> : vector<48x32xf32>
    %13 = tpu.matmul %4, %12, %cst {dimension_numbers = #tpu.dot_dimension_numbers<[1], [0], [0], [1], [0, 0, 1, 1], [], []>} : vector<48x48xbf16>, vector<48x32xbf16>, vector<48x32xf32> -> vector<48x32xf32>
    %14 = arith.truncf %13 : vector<48x32xf32> to vector<48x32xbf16>
    %cst_11 = arith.constant dense<0.000000e+00> : vector<48x32xf32>
    %15 = tpu.matmul %4, %14, %cst_11 {dimension_numbers = #tpu.dot_dimension_numbers<[1], [0], [0], [1], [0, 0, 1, 1], [], []>} : vector<48x48xbf16>, vector<48x32xbf16>, vector<48x32xf32> -> vector<48x32xf32>
    %cst_12 = arith.constant 2.000000e+00 : f32
    %16 = vector.broadcast %cst_12 : f32 to vector<48x32xf32>
    %17 = arith.mulf %16, %15 : vector<48x32xf32>
    %18 = arith.subf %17, %7 : vector<48x32xf32>
    %19 = tpu.concatenate %7, %13, %18 in 1 : vector<48x32xf32>, vector<48x32xf32>, vector<48x32xf32> -> vector<48x96xf32>
    %cst_13 = arith.constant dense<0.000000e+00> : vector<48x32xf32>
    %20 = tpu.matmul %19, %9, %cst_13 {dimension_numbers = #tpu.dot_dimension_numbers<[1], [0], [0], [1], [0, 0, 1, 1], [], []>} : vector<48x96xf32>, vector<96x32xf32>, vector<48x32xf32> -> vector<48x32xf32>
    %21 = vector.broadcast %11 : vector<1x32xf32> to vector<48x32xf32>
    %22 = arith.addf %20, %21 : vector<48x32xf32>
    %23 = arith.index_cast %arg1 : i32 to index
    %c0_14 = arith.constant 0 : index
    %c0_15 = arith.constant 0 : index
    %24 = vector.load %arg8[%23, %c0_14, %c0_15] : memref<2x48x32xf32, #tpu.memory_space<vmem>>, vector<1x48x32xf32>
    %25 = vector.shape_cast %24 : vector<1x48x32xf32> to vector<48x32xf32>
    %26 = vector.shape_cast %22 : vector<48x32xf32> to vector<1x48x32xf32>
    tpu.vector_store %arg8[%23, %c0_14, %c0_15], %26 {strides = array<i32>} : memref<2x48x32xf32, #tpu.memory_space<vmem>>, vector<1x48x32xf32>,
    %c1_i32 = arith.constant 1 : i32
    %27 = arith.cmpi eq, %arg1, %c1_i32 : i32
    %28 = arith.extui %27 : i1 to i32
    %c0_i32_16 = arith.constant 0 : i32
    %29 = arith.cmpi ne, %28, %c0_i32_16 : i32
    scf.if %29 {
      %c0_20 = arith.constant 0 : index
      %c0_21 = arith.constant 0 : index
      %c0_22 = arith.constant 0 : index
      %35 = vector.load %arg8[%c0_20, %c0_21, %c0_22] : memref<2x48x32xf32, #tpu.memory_space<vmem>>, vector<2x48x32xf32>
      %36 = arith.mulf %35, %35 : vector<2x48x32xf32>
      %cst_23 = arith.constant dense<0.000000e+00> : vector<2x32xf32>
      %37 = vector.multi_reduction <add>, %35, %cst_23 [1] : vector<2x48x32xf32> to vector<2x32xf32>
      %38 = vector.shape_cast %37 : vector<2x32xf32> to vector<2x1x32xf32>
      %cst_24 = arith.constant dense<0.000000e+00> : vector<2x32xf32>
      %39 = vector.multi_reduction <add>, %36, %cst_24 [1] : vector<2x48x32xf32> to vector<2x32xf32>
      %40 = vector.shape_cast %39 : vector<2x32xf32> to vector<2x1x32xf32>
      %cst_25 = arith.constant dense<0.000000e+00> : vector<1x32xf32>
      %41 = vector.multi_reduction <add>, %38, %cst_25 [0] : vector<2x1x32xf32> to vector<1x32xf32>
      %42 = vector.shape_cast %41 : vector<1x32xf32> to vector<1x1x32xf32>
      %cst_26 = arith.constant dense<0.000000e+00> : vector<1x32xf32>
      %43 = vector.multi_reduction <add>, %40, %cst_26 [0] : vector<2x1x32xf32> to vector<1x32xf32>
      %44 = vector.shape_cast %43 : vector<1x32xf32> to vector<1x1x32xf32>
      %cst_27 = arith.constant 0.010416667 : f32
      %45 = vector.broadcast %cst_27 : f32 to vector<1x1x32xf32>
      %46 = arith.mulf %42, %45 : vector<1x1x32xf32>
      %cst_28 = arith.constant 0.010416667 : f32
      %47 = vector.broadcast %cst_28 : f32 to vector<1x1x32xf32>
      %48 = arith.mulf %44, %47 : vector<1x1x32xf32>
      %49 = arith.mulf %46, %46 : vector<1x1x32xf32>
      %50 = arith.subf %48, %49 : vector<1x1x32xf32>
      %cst_29 = arith.constant 0.000000e+00 : f32
      %51 = vector.broadcast %cst_29 : f32 to vector<1x1x32xf32>
      %52 = arith.maximumf %50, %51 : vector<1x1x32xf32>
      %53 = vector.broadcast %46 : vector<1x1x32xf32> to vector<2x48x32xf32>
      %54 = arith.subf %35, %53 : vector<2x48x32xf32>
      %cst_30 = arith.constant 9.99999974E-6 : f32
      %55 = vector.broadcast %cst_30 : f32 to vector<1x1x32xf32>
      %56 = arith.addf %52, %55 : vector<1x1x32xf32>
      %57 = math.rsqrt %56 : vector<1x1x32xf32>
      %58 = vector.broadcast %57 : vector<1x1x32xf32> to vector<2x48x32xf32>
      %59 = arith.mulf %54, %58 : vector<2x48x32xf32>
      %60 = math.tanh %59 : vector<2x48x32xf32>
      %61 = arith.mulf %60, %60 : vector<2x48x32xf32>
      %cst_31 = arith.constant dense<0.000000e+00> : vector<2x32xf32>
      %62 = vector.multi_reduction <add>, %60, %cst_31 [1] : vector<2x48x32xf32> to vector<2x32xf32>
      %63 = vector.shape_cast %62 : vector<2x32xf32> to vector<2x1x32xf32>
      %cst_32 = arith.constant dense<0.000000e+00> : vector<2x32xf32>
      %64 = vector.multi_reduction <add>, %61, %cst_32 [1] : vector<2x48x32xf32> to vector<2x32xf32>
      %65 = vector.shape_cast %64 : vector<2x32xf32> to vector<2x1x32xf32>
      %cst_33 = arith.constant dense<0.000000e+00> : vector<1x32xf32>
      %66 = vector.multi_reduction <add>, %63, %cst_33 [0] : vector<2x1x32xf32> to vector<1x32xf32>
      %67 = vector.shape_cast %66 : vector<1x32xf32> to vector<1x1x32xf32>
      %cst_34 = arith.constant dense<0.000000e+00> : vector<1x32xf32>
      %68 = vector.multi_reduction <add>, %65, %cst_34 [0] : vector<2x1x32xf32> to vector<1x32xf32>
      %69 = vector.shape_cast %68 : vector<1x32xf32> to vector<1x1x32xf32>
      %cst_35 = arith.constant 0.010416667 : f32
      %70 = vector.broadcast %cst_35 : f32 to vector<1x1x32xf32>
      %71 = arith.mulf %67, %70 : vector<1x1x32xf32>
      %cst_36 = arith.constant 0.010416667 : f32
      %72 = vector.broadcast %cst_36 : f32 to vector<1x1x32xf32>
      %73 = arith.mulf %69, %72 : vector<1x1x32xf32>
      %74 = arith.mulf %71, %71 : vector<1x1x32xf32>
      %75 = arith.subf %73, %74 : vector<1x1x32xf32>
      %cst_37 = arith.constant 0.000000e+00 : f32
      %76 = vector.broadcast %cst_37 : f32 to vector<1x1x32xf32>
      %77 = arith.maximumf %75, %76 : vector<1x1x32xf32>
      %78 = vector.broadcast %71 : vector<1x1x32xf32> to vector<2x48x32xf32>
      %79 = arith.subf %60, %78 : vector<2x48x32xf32>
      %cst_38 = arith.constant 9.99999974E-6 : f32
      %80 = vector.broadcast %cst_38 : f32 to vector<1x1x32xf32>
      %81 = arith.addf %77, %80 : vector<1x1x32xf32>
      %82 = math.rsqrt %81 : vector<1x1x32xf32>
      %83 = vector.broadcast %82 : vector<1x1x32xf32> to vector<2x48x32xf32>
      %84 = arith.mulf %79, %83 : vector<2x48x32xf32>
      %c0_39 = arith.constant 0 : index
      %c0_40 = arith.constant 0 : index
      %c0_41 = arith.constant 0 : index
      %85 = vector.load %arg8[%c0_39, %c0_40, %c0_41] : memref<2x48x32xf32, #tpu.memory_space<vmem>>, vector<2x48x32xf32>
      tpu.vector_store %arg8[%c0_39, %c0_40, %c0_41], %84 {strides = array<i32>} : memref<2x48x32xf32, #tpu.memory_space<vmem>>, vector<2x48x32xf32>,
    } else {
    }
    %c1_i32_17 = arith.constant 1 : i32
    %30 = arith.cmpi eq, %arg1, %c1_i32_17 : i32
    %c1_i32_18 = arith.constant 1 : i32
    %31 = arith.cmpi eq, %arg0, %c1_i32_18 : i32
    %32 = arith.andi %30, %31 : i1
    %33 = arith.extui %32 : i1 to i32
    %c0_i32_19 = arith.constant 0 : i32
    %34 = arith.cmpi ne, %33, %c0_i32_19 : i32
    scf.if %34 {
      %c0_20 = arith.constant 0 : index
      %c0_21 = arith.constant 0 : index
      %c0_22 = arith.constant 0 : index
      %35 = vector.load %arg8[%c0_20, %c0_21, %c0_22] : memref<2x48x32xf32, #tpu.memory_space<vmem>>, vector<2x48x32xf32>
      %c0_23 = arith.constant 0 : index
      %c0_24 = arith.constant 0 : index
      %c0_25 = arith.constant 0 : index
      %36 = vector.load %arg6[%c0_23, %c0_24, %c0_25] : memref<2x8x48xbf16, #tpu.memory_space<vmem>>, vector<2x8x48xbf16>
      %37 = arith.truncf %35 : vector<2x48x32xf32> to vector<2x48x32xbf16>
      "tpu.trace_start"() <{level = 10 : i32, message = "bwa,bah->bwh"}> : () -> ()
      %cst_26 = arith.constant dense<0.000000e+00> : vector<2x8x32xf32>
      %38 = tpu.matmul %36, %37, %cst_26 {dimension_numbers = #tpu.dot_dimension_numbers<[2], [1], [1], [2], [0, 0, 0, 1, 1, 2], [0], [0]>} : vector<2x8x48xbf16>, vector<2x48x32xbf16>, vector<2x8x32xf32> -> vector<2x8x32xf32>
      "tpu.trace_stop"() : () -> ()
      %c0_27 = arith.constant 0 : index
      %c0_28 = arith.constant 0 : index
      %c0_29 = arith.constant 0 : index
      %39 = vector.load %arg7[%c0_27, %c0_28, %c0_29] : memref<2x8x32xf32, #tpu.memory_space<vmem>>, vector<2x8x32xf32>
      tpu.vector_store %arg7[%c0_27, %c0_28, %c0_29], %38 {strides = array<i32>} : memref<2x8x32xf32, #tpu.memory_space<vmem>>, vector<2x8x32xf32>,
    } else {
    }
    return
  }
  func.func @transform_0(%arg0: i32, %arg1: i32) -> (i32, i32, i32) {
    %c0_i32 = arith.constant 0 : i32
    %c0_i32_0 = arith.constant 0 : i32
    %c0_i32_1 = arith.constant 0 : i32
    return %arg1, %c0_i32, %c0_i32_0 : i32, i32, i32
  }
  func.func @transform_1(%arg0: i32, %arg1: i32) -> (i32, i32, i32) {
    %c0_i32 = arith.constant 0 : i32
    %c0_i32_0 = arith.constant 0 : i32
    %c0_i32_1 = arith.constant 0 : i32
    return %arg1, %c0_i32, %c0_i32_0 : i32, i32, i32
  }
  func.func @transform_2(%arg0: i32, %arg1: i32) -> (i32, i32, i32) {
    %c0_i32 = arith.constant 0 : i32
    %c0_i32_0 = arith.constant 0 : i32
    %c0_i32_1 = arith.constant 0 : i32
    return %arg0, %c0_i32, %c0_i32_0 : i32, i32, i32
  }
  func.func @transform_3(%arg0: i32, %arg1: i32) -> (i32, i32, i32) {
    %c0_i32 = arith.constant 0 : i32
    %c0_i32_0 = arith.constant 0 : i32
    %c0_i32_1 = arith.constant 0 : i32
    return %arg0, %c0_i32, %c0_i32_0 : i32, i32, i32
  }
  func.func @transform_4(%arg0: i32, %arg1: i32) -> (i32, i32, i32) {
    %c0_i32 = arith.constant 0 : i32
    %c0_i32_0 = arith.constant 0 : i32
    %c0_i32_1 = arith.constant 0 : i32
    %c0_i32_2 = arith.constant 0 : i32
    return %c0_i32, %c0_i32_0, %c0_i32_1 : i32, i32, i32
  }
  func.func @transform_5(%arg0: i32, %arg1: i32) -> (i32, i32, i32) {
    %c0_i32 = arith.constant 0 : i32
    %c0_i32_0 = arith.constant 0 : i32
    %c0_i32_1 = arith.constant 0 : i32
    %c0_i32_2 = arith.constant 0 : i32
    return %c0_i32, %c0_i32_0, %c0_i32_1 : i32, i32, i32
  }
}

module attributes {stable_mosaic.version = 11 : i64} {
  func.func @kernel(%arg0: i32, %arg1: memref<64x64xbf16, #tpu.memory_space<vmem>>, %arg2: memref<64x32xf32, #tpu.memory_space<vmem>>, %arg3: memref<1x96x32xf32, #tpu.memory_space<vmem>>, %arg4: memref<1x1x32xf32, #tpu.memory_space<vmem>>, %arg5: memref<32x32xf32, #tpu.memory_space<vmem>>, %arg6: memref<1x32xf32, #tpu.memory_space<vmem>>, %arg7: memref<32x32xf32, #tpu.memory_space<vmem>>, %arg8: memref<1x32xf32, #tpu.memory_space<vmem>>, %arg9: memref<32x32xf32, #tpu.memory_space<vmem>>, %arg10: memref<64x32xf32, #tpu.memory_space<vmem>>) attributes {dimension_semantics = [#tpu.dimension_semantics<arbitrary>], iteration_bounds = array<i64: 3>, scalar_prefetch = 0 : i64, scratch_operands = 0 : i64, tpu.core_type = #tpu.core_type<tc>, window_params = [{pipeline_mode = #tpu.pipeline_mode<synchronous>, transform_indices = @transform_0, window_bounds = array<i64: 64, 64>}, {pipeline_mode = #tpu.pipeline_mode<synchronous>, transform_indices = @transform_1, window_bounds = array<i64: 64, 32>}, {transform_indices = @transform_2, window_bounds = array<i64: 1, 96, 32>}, {transform_indices = @transform_3, window_bounds = array<i64: 1, 1, 32>}, {pipeline_mode = #tpu.pipeline_mode<synchronous>, transform_indices = @transform_4, window_bounds = array<i64: 32, 32>}, {pipeline_mode = #tpu.pipeline_mode<synchronous>, transform_indices = @transform_5, window_bounds = array<i64: 1, 32>}, {pipeline_mode = #tpu.pipeline_mode<synchronous>, transform_indices = @transform_6, window_bounds = array<i64: 32, 32>}, {pipeline_mode = #tpu.pipeline_mode<synchronous>, transform_indices = @transform_7, window_bounds = array<i64: 1, 32>}, {pipeline_mode = #tpu.pipeline_mode<synchronous>, transform_indices = @transform_8, window_bounds = array<i64: 32, 32>}, {pipeline_mode = #tpu.pipeline_mode<synchronous>, transform_indices = @transform_9, window_bounds = array<i64: 64, 32>}]} {
    %c0_i32 = arith.constant 0 : i32
    %0 = arith.cmpi eq, %arg0, %c0_i32 : i32
    %1 = arith.extui %0 : i1 to i32
    %c0_i32_0 = arith.constant 0 : i32
    %2 = arith.cmpi ne, %1, %c0_i32_0 : i32
    scf.if %2 {
      %c0_22 = arith.constant 0 : index
      %c0_23 = arith.constant 0 : index
      %45 = vector.load %arg2[%c0_22, %c0_23] : memref<64x32xf32, #tpu.memory_space<vmem>>, vector<64x32xf32>
      %c0_24 = arith.constant 0 : index
      %c0_25 = arith.constant 0 : index
      %46 = vector.load %arg10[%c0_24, %c0_25] : memref<64x32xf32, #tpu.memory_space<vmem>>, vector<64x32xf32>
      tpu.vector_store %arg10[%c0_24, %c0_25], %45 {strides = array<i32>} : memref<64x32xf32, #tpu.memory_space<vmem>>, vector<64x32xf32>,
    } else {
    }
    %c0 = arith.constant 0 : index
    %c0_1 = arith.constant 0 : index
    %3 = vector.load %arg1[%c0, %c0_1] : memref<64x64xbf16, #tpu.memory_space<vmem>>, vector<64x64xbf16>
    %c0_2 = arith.constant 0 : index
    %c0_3 = arith.constant 0 : index
    %4 = vector.load %arg10[%c0_2, %c0_3] : memref<64x32xf32, #tpu.memory_space<vmem>>, vector<64x32xf32>
    %c0_4 = arith.constant 0 : index
    %c0_5 = arith.constant 0 : index
    %c0_6 = arith.constant 0 : index
    %5 = vector.load %arg3[%c0_4, %c0_5, %c0_6] : memref<1x96x32xf32, #tpu.memory_space<vmem>>, vector<1x96x32xf32>
    %6 = vector.shape_cast %5 : vector<1x96x32xf32> to vector<96x32xf32>
    %c0_7 = arith.constant 0 : index
    %c0_8 = arith.constant 0 : index
    %c0_9 = arith.constant 0 : index
    %7 = vector.load %arg4[%c0_7, %c0_8, %c0_9] : memref<1x1x32xf32, #tpu.memory_space<vmem>>, vector<1x1x32xf32>
    %8 = vector.shape_cast %7 : vector<1x1x32xf32> to vector<1x32xf32>
    %9 = arith.truncf %4 : vector<64x32xf32> to vector<64x32xbf16>
    %cst = arith.constant dense<0.000000e+00> : vector<64x32xf32>
    %10 = tpu.matmul %3, %9, %cst {dimension_numbers = #tpu.dot_dimension_numbers<[1], [0], [0], [1], [0, 0, 1, 1], [], []>} : vector<64x64xbf16>, vector<64x32xbf16>, vector<64x32xf32> -> vector<64x32xf32>
    %11 = arith.truncf %10 : vector<64x32xf32> to vector<64x32xbf16>
    %cst_10 = arith.constant dense<0.000000e+00> : vector<64x32xf32>
    %12 = tpu.matmul %3, %11, %cst_10 {dimension_numbers = #tpu.dot_dimension_numbers<[1], [0], [0], [1], [0, 0, 1, 1], [], []>} : vector<64x64xbf16>, vector<64x32xbf16>, vector<64x32xf32> -> vector<64x32xf32>
    %cst_11 = arith.constant 2.000000e+00 : f32
    %13 = vector.broadcast %cst_11 : f32 to vector<64x32xf32>
    %14 = arith.mulf %13, %12 : vector<64x32xf32>
    %15 = arith.subf %14, %4 : vector<64x32xf32>
    %16 = tpu.concatenate %4, %10, %15 in 1 : vector<64x32xf32>, vector<64x32xf32>, vector<64x32xf32> -> vector<64x96xf32>
    %cst_12 = arith.constant dense<0.000000e+00> : vector<64x32xf32>
    %17 = tpu.matmul %16, %6, %cst_12 {dimension_numbers = #tpu.dot_dimension_numbers<[1], [0], [0], [1], [0, 0, 1, 1], [], []>} : vector<64x96xf32>, vector<96x32xf32>, vector<64x32xf32> -> vector<64x32xf32>
    %18 = vector.broadcast %8 : vector<1x32xf32> to vector<64x32xf32>
    %19 = arith.addf %17, %18 : vector<64x32xf32>
    %20 = math.tanh %19 : vector<64x32xf32>
    %21 = arith.mulf %20, %20 : vector<64x32xf32>
    %cst_13 = arith.constant dense<0.000000e+00> : vector<32xf32>
    %22 = vector.multi_reduction <add>, %20, %cst_13 [0] : vector<64x32xf32> to vector<32xf32>
    %23 = vector.shape_cast %22 : vector<32xf32> to vector<1x32xf32>
    %cst_14 = arith.constant dense<0.000000e+00> : vector<32xf32>
    %24 = vector.multi_reduction <add>, %21, %cst_14 [0] : vector<64x32xf32> to vector<32xf32>
    %25 = vector.shape_cast %24 : vector<32xf32> to vector<1x32xf32>
    %cst_15 = arith.constant 1.562500e-02 : f32
    %26 = vector.broadcast %cst_15 : f32 to vector<1x32xf32>
    %27 = arith.mulf %23, %26 : vector<1x32xf32>
    %cst_16 = arith.constant 1.562500e-02 : f32
    %28 = vector.broadcast %cst_16 : f32 to vector<1x32xf32>
    %29 = arith.mulf %25, %28 : vector<1x32xf32>
    %30 = arith.mulf %27, %27 : vector<1x32xf32>
    %31 = arith.subf %29, %30 : vector<1x32xf32>
    %cst_17 = arith.constant 0.000000e+00 : f32
    %32 = vector.broadcast %cst_17 : f32 to vector<1x32xf32>
    %33 = arith.maximumf %31, %32 : vector<1x32xf32>
    %34 = vector.broadcast %27 : vector<1x32xf32> to vector<64x32xf32>
    %35 = arith.subf %20, %34 : vector<64x32xf32>
    %cst_18 = arith.constant 9.99999974E-6 : f32
    %36 = vector.broadcast %cst_18 : f32 to vector<1x32xf32>
    %37 = arith.addf %33, %36 : vector<1x32xf32>
    %38 = math.rsqrt %37 : vector<1x32xf32>
    %39 = vector.broadcast %38 : vector<1x32xf32> to vector<64x32xf32>
    %40 = arith.mulf %35, %39 : vector<64x32xf32>
    %c0_19 = arith.constant 0 : index
    %c0_20 = arith.constant 0 : index
    %41 = vector.load %arg10[%c0_19, %c0_20] : memref<64x32xf32, #tpu.memory_space<vmem>>, vector<64x32xf32>
    tpu.vector_store %arg10[%c0_19, %c0_20], %40 {strides = array<i32>} : memref<64x32xf32, #tpu.memory_space<vmem>>, vector<64x32xf32>,
    %c2_i32 = arith.constant 2 : i32
    %42 = arith.cmpi eq, %arg0, %c2_i32 : i32
    %43 = arith.extui %42 : i1 to i32
    %c0_i32_21 = arith.constant 0 : i32
    %44 = arith.cmpi ne, %43, %c0_i32_21 : i32
    scf.if %44 {
      %c0_22 = arith.constant 0 : index
      %c0_23 = arith.constant 0 : index
      %45 = vector.load %arg5[%c0_22, %c0_23] : memref<32x32xf32, #tpu.memory_space<vmem>>, vector<32x32xf32>
      %cst_24 = arith.constant dense<0.000000e+00> : vector<64x32xf32>
      %46 = tpu.matmul %40, %45, %cst_24 {dimension_numbers = #tpu.dot_dimension_numbers<[1], [0], [0], [1], [0, 0, 1, 1], [], []>} : vector<64x32xf32>, vector<32x32xf32>, vector<64x32xf32> -> vector<64x32xf32>
      %c0_25 = arith.constant 0 : index
      %c0_26 = arith.constant 0 : index
      %47 = vector.load %arg6[%c0_25, %c0_26] : memref<1x32xf32, #tpu.memory_space<vmem>>, vector<1x32xf32>
      %48 = vector.broadcast %47 : vector<1x32xf32> to vector<64x32xf32>
      %49 = arith.addf %46, %48 : vector<64x32xf32>
      %c0_27 = arith.constant 0 : index
      %c0_28 = arith.constant 0 : index
      %50 = vector.load %arg7[%c0_27, %c0_28] : memref<32x32xf32, #tpu.memory_space<vmem>>, vector<32x32xf32>
      %cst_29 = arith.constant dense<0.000000e+00> : vector<64x32xf32>
      %51 = tpu.matmul %49, %50, %cst_29 {dimension_numbers = #tpu.dot_dimension_numbers<[1], [0], [0], [1], [0, 0, 1, 1], [], []>} : vector<64x32xf32>, vector<32x32xf32>, vector<64x32xf32> -> vector<64x32xf32>
      %c0_30 = arith.constant 0 : index
      %c0_31 = arith.constant 0 : index
      %52 = vector.load %arg8[%c0_30, %c0_31] : memref<1x32xf32, #tpu.memory_space<vmem>>, vector<1x32xf32>
      %53 = vector.broadcast %52 : vector<1x32xf32> to vector<64x32xf32>
      %54 = arith.addf %51, %53 : vector<64x32xf32>
      %c0_32 = arith.constant 0 : index
      %c0_33 = arith.constant 0 : index
      %55 = vector.load %arg9[%c0_32, %c0_33] : memref<32x32xf32, #tpu.memory_space<vmem>>, vector<32x32xf32>
      %cst_34 = arith.constant dense<0.000000e+00> : vector<64x32xf32>
      %56 = tpu.matmul %54, %55, %cst_34 {dimension_numbers = #tpu.dot_dimension_numbers<[1], [0], [0], [1], [0, 0, 1, 1], [], []>} : vector<64x32xf32>, vector<32x32xf32>, vector<64x32xf32> -> vector<64x32xf32>
      %c0_35 = arith.constant 0 : index
      %c0_36 = arith.constant 0 : index
      %57 = vector.load %arg10[%c0_35, %c0_36] : memref<64x32xf32, #tpu.memory_space<vmem>>, vector<64x32xf32>
      tpu.vector_store %arg10[%c0_35, %c0_36], %56 {strides = array<i32>} : memref<64x32xf32, #tpu.memory_space<vmem>>, vector<64x32xf32>,
    } else {
    }
    return
  }
  func.func @transform_0(%arg0: i32) -> (i32, i32) {
    %c0_i32 = arith.constant 0 : i32
    %c0_i32_0 = arith.constant 0 : i32
    %c0_i32_1 = arith.constant 0 : i32
    return %c0_i32, %c0_i32_0 : i32, i32
  }
  func.func @transform_1(%arg0: i32) -> (i32, i32) {
    %c0_i32 = arith.constant 0 : i32
    %c0_i32_0 = arith.constant 0 : i32
    %c0_i32_1 = arith.constant 0 : i32
    return %c0_i32, %c0_i32_0 : i32, i32
  }
  func.func @transform_2(%arg0: i32) -> (i32, i32, i32) {
    %c0_i32 = arith.constant 0 : i32
    %c0_i32_0 = arith.constant 0 : i32
    %c0_i32_1 = arith.constant 0 : i32
    return %arg0, %c0_i32, %c0_i32_0 : i32, i32, i32
  }
  func.func @transform_3(%arg0: i32) -> (i32, i32, i32) {
    %c0_i32 = arith.constant 0 : i32
    %c0_i32_0 = arith.constant 0 : i32
    %c0_i32_1 = arith.constant 0 : i32
    return %arg0, %c0_i32, %c0_i32_0 : i32, i32, i32
  }
  func.func @transform_4(%arg0: i32) -> (i32, i32) {
    %c0_i32 = arith.constant 0 : i32
    %c0_i32_0 = arith.constant 0 : i32
    %c0_i32_1 = arith.constant 0 : i32
    return %c0_i32, %c0_i32_0 : i32, i32
  }
  func.func @transform_5(%arg0: i32) -> (i32, i32) {
    %c0_i32 = arith.constant 0 : i32
    %c0_i32_0 = arith.constant 0 : i32
    %c0_i32_1 = arith.constant 0 : i32
    return %c0_i32, %c0_i32_0 : i32, i32
  }
  func.func @transform_6(%arg0: i32) -> (i32, i32) {
    %c0_i32 = arith.constant 0 : i32
    %c0_i32_0 = arith.constant 0 : i32
    %c0_i32_1 = arith.constant 0 : i32
    return %c0_i32, %c0_i32_0 : i32, i32
  }
  func.func @transform_7(%arg0: i32) -> (i32, i32) {
    %c0_i32 = arith.constant 0 : i32
    %c0_i32_0 = arith.constant 0 : i32
    %c0_i32_1 = arith.constant 0 : i32
    return %c0_i32, %c0_i32_0 : i32, i32
  }
  func.func @transform_8(%arg0: i32) -> (i32, i32) {
    %c0_i32 = arith.constant 0 : i32
    %c0_i32_0 = arith.constant 0 : i32
    %c0_i32_1 = arith.constant 0 : i32
    return %c0_i32, %c0_i32_0 : i32, i32
  }
  func.func @transform_9(%arg0: i32) -> (i32, i32) {
    %c0_i32 = arith.constant 0 : i32
    %c0_i32_0 = arith.constant 0 : i32
    %c0_i32_1 = arith.constant 0 : i32
    return %c0_i32, %c0_i32_0 : i32, i32
  }
}

module attributes {stable_mosaic.version = 11 : i64} {
  func.func @phase_head_kernel(%arg0: i32, %arg1: memref<64x32xf32, #tpu.memory_space<vmem>>, %arg2: memref<1x1x128xf32, #tpu.memory_space<vmem>>, %arg3: memref<1x1x128xf32, #tpu.memory_space<vmem>>, %arg4: memref<128x32xf32, #tpu.memory_space<vmem>>, %arg5: memref<128x32xf32, #tpu.memory_space<vmem>>, %arg6: memref<32x3xf32, #tpu.memory_space<vmem>>, %arg7: memref<1x3xf32, #tpu.memory_space<vmem>>, %arg8: memref<1x64x3xf32, #tpu.memory_space<vmem>>) attributes {dimension_semantics = [#tpu.dimension_semantics<parallel>], iteration_bounds = array<i64: 2>, scalar_prefetch = 0 : i64, scratch_operands = 0 : i64, tpu.core_type = #tpu.core_type<tc>, window_params = [{pipeline_mode = #tpu.pipeline_mode<synchronous>, transform_indices = @transform_0, window_bounds = array<i64: 64, 32>}, {transform_indices = @transform_1, window_bounds = array<i64: 1, 1, 128>}, {transform_indices = @transform_2, window_bounds = array<i64: 1, 1, 128>}, {pipeline_mode = #tpu.pipeline_mode<synchronous>, transform_indices = @transform_3, window_bounds = array<i64: 128, 32>}, {pipeline_mode = #tpu.pipeline_mode<synchronous>, transform_indices = @transform_4, window_bounds = array<i64: 128, 32>}, {pipeline_mode = #tpu.pipeline_mode<synchronous>, transform_indices = @transform_5, window_bounds = array<i64: 32, 3>}, {pipeline_mode = #tpu.pipeline_mode<synchronous>, transform_indices = @transform_6, window_bounds = array<i64: 1, 3>}, {transform_indices = @transform_7, window_bounds = array<i64: 1, 64, 3>}]} {
    %c0 = arith.constant 0 : index
    %c0_0 = arith.constant 0 : index
    %c0_1 = arith.constant 0 : index
    %0 = vector.load %arg2[%c0, %c0_0, %c0_1] : memref<1x1x128xf32, #tpu.memory_space<vmem>>, vector<1x1x128xf32>
    %1 = vector.shape_cast %0 : vector<1x1x128xf32> to vector<1x128xf32>
    %c0_2 = arith.constant 0 : index
    %c0_3 = arith.constant 0 : index
    %2 = vector.load %arg4[%c0_2, %c0_3] : memref<128x32xf32, #tpu.memory_space<vmem>>, vector<128x32xf32>
    %cst = arith.constant dense<0.000000e+00> : vector<1x32xf32>
    %3 = tpu.matmul %1, %2, %cst {dimension_numbers = #tpu.dot_dimension_numbers<[1], [0], [0], [1], [0, 0, 1, 1], [], []>} : vector<1x128xf32>, vector<128x32xf32>, vector<1x32xf32> -> vector<1x32xf32>
    %c0_4 = arith.constant 0 : index
    %c0_5 = arith.constant 0 : index
    %c0_6 = arith.constant 0 : index
    %4 = vector.load %arg3[%c0_4, %c0_5, %c0_6] : memref<1x1x128xf32, #tpu.memory_space<vmem>>, vector<1x1x128xf32>
    %5 = vector.shape_cast %4 : vector<1x1x128xf32> to vector<1x128xf32>
    %c0_7 = arith.constant 0 : index
    %c0_8 = arith.constant 0 : index
    %6 = vector.load %arg5[%c0_7, %c0_8] : memref<128x32xf32, #tpu.memory_space<vmem>>, vector<128x32xf32>
    %cst_9 = arith.constant dense<0.000000e+00> : vector<1x32xf32>
    %7 = tpu.matmul %5, %6, %cst_9 {dimension_numbers = #tpu.dot_dimension_numbers<[1], [0], [0], [1], [0, 0, 1, 1], [], []>} : vector<1x128xf32>, vector<128x32xf32>, vector<1x32xf32> -> vector<1x32xf32>
    %8 = arith.addf %3, %7 : vector<1x32xf32>
    %c0_10 = arith.constant 0 : index
    %c0_11 = arith.constant 0 : index
    %9 = vector.load %arg1[%c0_10, %c0_11] : memref<64x32xf32, #tpu.memory_space<vmem>>, vector<64x32xf32>
    %10 = vector.broadcast %8 : vector<1x32xf32> to vector<64x32xf32>
    %11 = arith.addf %9, %10 : vector<64x32xf32>
    %cst_12 = arith.constant 0.000000e+00 : f32
    %12 = vector.broadcast %cst_12 : f32 to vector<64x32xf32>
    %13 = arith.maximumf %11, %12 : vector<64x32xf32>
    %c0_13 = arith.constant 0 : index
    %c0_14 = arith.constant 0 : index
    %14 = vector.load %arg6[%c0_13, %c0_14] : memref<32x3xf32, #tpu.memory_space<vmem>>, vector<32x3xf32>
    %cst_15 = arith.constant dense<0.000000e+00> : vector<64x3xf32>
    %15 = tpu.matmul %13, %14, %cst_15 {dimension_numbers = #tpu.dot_dimension_numbers<[1], [0], [0], [1], [0, 0, 1, 1], [], []>} : vector<64x32xf32>, vector<32x3xf32>, vector<64x3xf32> -> vector<64x3xf32>
    %c0_16 = arith.constant 0 : index
    %c0_17 = arith.constant 0 : index
    %16 = vector.load %arg7[%c0_16, %c0_17] : memref<1x3xf32, #tpu.memory_space<vmem>>, vector<1x3xf32>
    %17 = vector.broadcast %16 : vector<1x3xf32> to vector<64x3xf32>
    %18 = arith.addf %15, %17 : vector<64x3xf32>
    %c0_18 = arith.constant 0 : index
    %c0_19 = arith.constant 0 : index
    %c0_20 = arith.constant 0 : index
    %19 = vector.load %arg8[%c0_18, %c0_19, %c0_20] : memref<1x64x3xf32, #tpu.memory_space<vmem>>, vector<1x64x3xf32>
    %20 = vector.shape_cast %19 : vector<1x64x3xf32> to vector<64x3xf32>
    %21 = vector.shape_cast %18 : vector<64x3xf32> to vector<1x64x3xf32>
    tpu.vector_store %arg8[%c0_18, %c0_19, %c0_20], %21 {strides = array<i32>} : memref<1x64x3xf32, #tpu.memory_space<vmem>>, vector<1x64x3xf32>,
    return
  }
  func.func @transform_0(%arg0: i32) -> (i32, i32) {
    %c0_i32 = arith.constant 0 : i32
    %c0_i32_0 = arith.constant 0 : i32
    %c0_i32_1 = arith.constant 0 : i32
    return %c0_i32, %c0_i32_0 : i32, i32
  }
  func.func @transform_1(%arg0: i32) -> (i32, i32, i32) {
    %c0_i32 = arith.constant 0 : i32
    %c0_i32_0 = arith.constant 0 : i32
    %c0_i32_1 = arith.constant 0 : i32
    return %arg0, %c0_i32, %c0_i32_0 : i32, i32, i32
  }
  func.func @transform_2(%arg0: i32) -> (i32, i32, i32) {
    %c0_i32 = arith.constant 0 : i32
    %c0_i32_0 = arith.constant 0 : i32
    %c0_i32_1 = arith.constant 0 : i32
    return %arg0, %c0_i32, %c0_i32_0 : i32, i32, i32
  }
  func.func @transform_3(%arg0: i32) -> (i32, i32) {
    %c0_i32 = arith.constant 0 : i32
    %c0_i32_0 = arith.constant 0 : i32
    %c0_i32_1 = arith.constant 0 : i32
    return %c0_i32, %c0_i32_0 : i32, i32
  }
  func.func @transform_4(%arg0: i32) -> (i32, i32) {
    %c0_i32 = arith.constant 0 : i32
    %c0_i32_0 = arith.constant 0 : i32
    %c0_i32_1 = arith.constant 0 : i32
    return %c0_i32, %c0_i32_0 : i32, i32
  }
  func.func @transform_5(%arg0: i32) -> (i32, i32) {
    %c0_i32 = arith.constant 0 : i32
    %c0_i32_0 = arith.constant 0 : i32
    %c0_i32_1 = arith.constant 0 : i32
    return %c0_i32, %c0_i32_0 : i32, i32
  }
  func.func @transform_6(%arg0: i32) -> (i32, i32) {
    %c0_i32 = arith.constant 0 : i32
    %c0_i32_0 = arith.constant 0 : i32
    %c0_i32_1 = arith.constant 0 : i32
    return %c0_i32, %c0_i32_0 : i32, i32
  }
  func.func @transform_7(%arg0: i32) -> (i32, i32, i32) {
    %c0_i32 = arith.constant 0 : i32
    %c0_i32_0 = arith.constant 0 : i32
    %c0_i32_1 = arith.constant 0 : i32
    return %arg0, %c0_i32, %c0_i32_0 : i32, i32, i32
  }
}

</mosaic_0001>

<llo_original>
// kernel: hno_forward.5
$region0: #{hno_forward.5}
  #allocation0 [shape = 'u32[]', space=smem, size = 0x4, offset = 0x4, fixed_abs, tag = 'smem constant byte address 0x4 - core index']
  #allocation1 [shape = 'u32[144,128]{1,0:T(1,128)}', space=vmem, size = 0x12000, scoped, tag = 'internal scratch']
  %s0 = inlined_call_operand.vmem [shape: f32[64,32], index: 0, kind: input, shape index: {}]
  %s1 = inlined_call_operand.vmem [shape: f32[2,1,128], index: 1, kind: input, shape index: {}]
  %s2 = inlined_call_operand.vmem [shape: f32[2,1,128], index: 2, kind: input, shape index: {}]
  %s3 = inlined_call_operand.vmem [shape: f32[128,32], index: 3, kind: input, shape index: {}]
  %s4 = inlined_call_operand.vmem [shape: f32[128,32], index: 4, kind: input, shape index: {}]
  %s5 = inlined_call_operand.vmem [shape: f32[32,3], index: 5, kind: input, shape index: {}]
  %s6 = inlined_call_operand.vmem [shape: f32[1,3], index: 6, kind: input, shape index: {}]
  %s7 = inlined_call_operand.vmem [shape: f32[2,64,3], index: 7, kind: output, shape index: {}]
  %s8 = sld [smem:[#allocation0]]
  $region61: #{hno_forward.5} parent=0
    _
  %s10 = ssub.s32 1, %s8
  %s11 = scalar_select 0, %s10, %s8
  loop: start=0, step=1, limit=4
  $region2: #{hno_forward.5} parent=0 // loop_pre_header
    _
  $region3: #{hno_forward.5} parent=0 // loop_header
    %s13 = sphi 0, %s17
    %p14 = scmp.ge.s32.totalorder %s13, 4
    %s21 = sphi 0, %s21
    %s23 = sphi 0, %s21
    %s24 = sphi 0, %s23
    %s38 = sphi 0, %s24
    %s44 = sphi 0, %s46
    %s47 = sphi 0, %s44
    %s48 = sphi 0, %s47
    %s64 = sphi 0, %s48
    %s70 = sphi 0, %s72
    %s73 = sphi 0, %s70
    %s74 = sphi 0, %s73
    %s90 = sphi 0, %s74
    %s94 = sphi 0, %s94
    %s96 = sphi 0, %s94
    %s97 = sphi 0, %s96
    %s111 = sphi 0, %s97
    %s115 = sphi 0, %s115
    %s117 = sphi 0, %s115
    %s118 = sphi 0, %s117
    %s132 = sphi 0, %s118
    %s136 = sphi 0, %s136
    %s138 = sphi 0, %s136
    %s139 = sphi 0, %s138
    %s153 = sphi 0, %s139
    %s157 = sphi 0, %s157
    %s159 = sphi 0, %s157
    %s160 = sphi 0, %s159
    %s174 = sphi 0, %s160
    %s180 = sphi 0, %s182
    %s183 = sphi 0, %s180
    %s184 = sphi 0, %s183
    %s200 = sphi 0, %s184
  $region4: #{hno_forward.5} parent=0 // loop_header_branch
    %16 = sbr.rel (%p14) target = $region8
  $region5: #{hno_forward.5} parent=0 // loop_body
    %s18 = ssub.s32 %s13, 1
    %s19 = ssub.s32 %s13, 2
    %s20 = sadd.s32 %s13, 1
    %s22 = sadd.s32 %s21, 1
    %p25 = scmp.eq.s32.totalorder %s13, 1
    %p26 = scmp.ne.s32.totalorder %s21, %s23
    %p27 = scmp.eq.s32.totalorder %s13, 0
    %p28 = por %p26, %p27
    %p29 = scmp.ne.s32.totalorder %s21, %s23
    %p30 = scmp.eq.s32.totalorder %s18, 1
    %p31 = por %p29, %p30
    %p32 = scmp.ne.s32.totalorder %s23, %s24
    %p33 = scmp.eq.s32.totalorder %s18, 0
    %p34 = por %p32, %p33
    %p35 = scmp.ne.s32.totalorder %s23, %s24
    %p36 = scmp.eq.s32.totalorder %s19, 1
    %p37 = por %p35, %p36
    %p39 = scmp.ne.s32.totalorder %s24, %s38
    %p40 = scmp.eq.s32.totalorder %s19, 0
    %p41 = por %p39, %p40
    %s42 = ssub.s32 %s13, %s20
    %p43 = scmp.eq.s32.totalorder %s42, 0
    %s45 = sadd.s32 %s44, 1
    %s46 = scalar_select %p43, %s44, %s45
    %p49 = pneg %p43
    %p50 = scmp.eq.s32.totalorder %s13, 1
    %p51 = por %p49, %p50
    %p52 = scmp.ne.s32.totalorder %s44, %s47
    %p53 = scmp.eq.s32.totalorder %s13, 0
    %p54 = por %p52, %p53
    %p55 = scmp.ne.s32.totalorder %s44, %s47
    %p56 = scmp.eq.s32.totalorder %s18, 1
    %p57 = por %p55, %p56
    %p58 = scmp.ne.s32.totalorder %s47, %s48
    %p59 = scmp.eq.s32.totalorder %s18, 0
    %p60 = por %p58, %p59
    %p61 = scmp.ne.s32.totalorder %s47, %s48
    %p62 = scmp.eq.s32.totalorder %s19, 1
    %p63 = por %p61, %p62
    %p65 = scmp.ne.s32.totalorder %s48, %s64
    %p66 = scmp.eq.s32.totalorder %s19, 0
    %p67 = por %p65, %p66
    %s68 = ssub.s32 %s13, %s20
    %p69 = scmp.eq.s32.totalorder %s68, 0
    %s71 = sadd.s32 %s70, 1
    %s72 = scalar_select %p69, %s70, %s71
    %p75 = pneg %p69
    %p76 = scmp.eq.s32.totalorder %s13, 1
    %p77 = por %p75, %p76
    %p78 = scmp.ne.s32.totalorder %s70, %s73
    %p79 = scmp.eq.s32.totalorder %s13, 0
    %p80 = por %p78, %p79
    %p81 = scmp.ne.s32.totalorder %s70, %s73
    %p82 = scmp.eq.s32.totalorder %s18, 1
    %p83 = por %p81, %p82
    %p84 = scmp.ne.s32.totalorder %s73, %s74
    %p85 = scmp.eq.s32.totalorder %s18, 0
    %p86 = por %p84, %p85
    %p87 = scmp.ne.s32.totalorder %s73, %s74
    %p88 = scmp.eq.s32.totalorder %s19, 1
    %p89 = por %p87, %p88
    %p91 = scmp.ne.s32.totalorder %s74, %s90
    %p92 = scmp.eq.s32.totalorder %s19, 0
    %p93 = por %p91, %p92
    %s95 = sadd.s32 %s94, 1
    %p98 = scmp.eq.s32.totalorder %s13, 1
    %p99 = scmp.ne.s32.totalorder %s94, %s96
    %p100 = scmp.eq.s32.totalorder %s13, 0
    %p101 = por %p99, %p100
    %p102 = scmp.ne.s32.totalorder %s94, %s96
    %p103 = scmp.eq.s32.totalorder %s18, 1
    %p104 = por %p102, %p103
    %p105 = scmp.ne.s32.totalorder %s96, %s97
    %p106 = scmp.eq.s32.totalorder %s18, 0
    %p107 = por %p105, %p106
    %p108 = scmp.ne.s32.totalorder %s96, %s97
    %p109 = scmp.eq.s32.totalorder %s19, 1
    %p110 = por %p108, %p109
    %p112 = scmp.ne.s32.totalorder %s97, %s111
    %p113 = scmp.eq.s32.totalorder %s19, 0
    %p114 = por %p112, %p113
    %s116 = sadd.s32 %s115, 1
    %p119 = scmp.eq.s32.totalorder %s13, 1
    %p120 = scmp.ne.s32.totalorder %s115, %s117
    %p121 = scmp.eq.s32.totalorder %s13, 0
    %p122 = por %p120, %p121
    %p123 = scmp.ne.s32.totalorder %s115, %s117
    %p124 = scmp.eq.s32.totalorder %s18, 1
    %p125 = por %p123, %p124
    %p126 = scmp.ne.s32.totalorder %s117, %s118
    %p127 = scmp.eq.s32.totalorder %s18, 0
    %p128 = por %p126, %p127
    %p129 = scmp.ne.s32.totalorder %s117, %s118
    %p130 = scmp.eq.s32.totalorder %s19, 1
    %p131 = por %p129, %p130
    %p133 = scmp.ne.s32.totalorder %s118, %s132
    %p134 = scmp.eq.s32.totalorder %s19, 0
    %p135 = por %p133, %p134
    %s137 = sadd.s32 %s136, 1
    %p140 = scmp.eq.s32.totalorder %s13, 1
    %p141 = scmp.ne.s32.totalorder %s136, %s138
    %p142 = scmp.eq.s32.totalorder %s13, 0
    %p143 = por %p141, %p142
    %p144 = scmp.ne.s32.totalorder %s136, %s138
    %p145 = scmp.eq.s32.totalorder %s18, 1
    %p146 = por %p144, %p145
    %p147 = scmp.ne.s32.totalorder %s138, %s139
    %p148 = scmp.eq.s32.totalorder %s18, 0
    %p149 = por %p147, %p148
    %p150 = scmp.ne.s32.totalorder %s138, %s139
    %p151 = scmp.eq.s32.totalorder %s19, 1
    %p152 = por %p150, %p151
    %p154 = scmp.ne.s32.totalorder %s139, %s153
    %p155 = scmp.eq.s32.totalorder %s19, 0
    %p156 = por %p154, %p155
    %s158 = sadd.s32 %s157, 1
    %p161 = scmp.eq.s32.totalorder %s13, 1
    %p162 = scmp.ne.s32.totalorder %s157, %s159
    %p163 = scmp.eq.s32.totalorder %s13, 0
    %p164 = por %p162, %p163
    %p165 = scmp.ne.s32.totalorder %s157, %s159
    %p166 = scmp.eq.s32.totalorder %s18, 1
    %p167 = por %p165, %p166
    %p168 = scmp.ne.s32.totalorder %s159, %s160
    %p169 = scmp.eq.s32.totalorder %s18, 0
    %p170 = por %p168, %p169
    %p171 = scmp.ne.s32.totalorder %s159, %s160
    %p172 = scmp.eq.s32.totalorder %s19, 1
    %p173 = por %p171, %p172
    %p175 = scmp.ne.s32.totalorder %s160, %s174
    %p176 = scmp.eq.s32.totalorder %s19, 0
    %p177 = por %p175, %p176
    %s178 = ssub.s32 %s13, %s20
    %p179 = scmp.eq.s32.totalorder %s178, 0
    %s181 = sadd.s32 %s180, 1
    %s182 = scalar_select %p179, %s180, %s181
    %p185 = pneg %p179
    %p186 = scmp.eq.s32.totalorder %s13, 1
    %p187 = por %p185, %p186
    %p188 = scmp.ne.s32.totalorder %s180, %s183
    %p189 = scmp.eq.s32.totalorder %s13, 0
    %p190 = por %p188, %p189
    %p191 = scmp.ne.s32.totalorder %s180, %s183
    %p192 = scmp.eq.s32.totalorder %s18, 1
    %p193 = por %p191, %p192
    %p194 = scmp.ne.s32.totalorder %s183, %s184
    %p195 = scmp.eq.s32.totalorder %s18, 0
    %p196 = por %p194, %p195
    %p197 = scmp.ne.s32.totalorder %s183, %s184
    %p198 = scmp.eq.s32.totalorder %s19, 1
    %p199 = por %p197, %p198
    %p201 = scmp.ne.s32.totalorder %s184, %s200
    %p202 = scmp.eq.s32.totalorder %s19, 0
    %p203 = por %p201, %p202
    %p204 = scmp.le.s32.totalorder 1, %s13
    %p205 = scmp.lt.s32.totalorder %s13, 3
    %p206 = pnand %p204, %p205
    %p207 = pneg %p206
    // Predicated region
    $region9: #{hno_forward.5} parent=5 // pred_check
      _
    $region10: #{hno_forward.5} parent=5 // pred_check_branch
      %209 = sbr.rel (%p206) target = $region12
    $region11: #{hno_forward.5} parent=5 // pred_region
      %s210 = ssub.s32 %s13, 1
      // Predicated region
      $region13: #{hno_forward.5} parent=11 // pred_check
        %p211 = pneg %p34
      $region14: #{hno_forward.5} parent=11 // pred_check_branch
        %213 = sbr.rel (%p211) target = $region16
      $region15: #{hno_forward.5} parent=11 // pred_region
        _
      $region16: #{hno_forward.5} parent=11 // pred_fallthru
        _
      // Predicated region
      $region17: #{hno_forward.5} parent=11 // pred_check
        %p214 = pneg %p107
      $region18: #{hno_forward.5} parent=11 // pred_check_branch
        %216 = sbr.rel (%p214) target = $region20
      $region19: #{hno_forward.5} parent=11 // pred_region
        _
      $region20: #{hno_forward.5} parent=11 // pred_fallthru
        _
      // Predicated region
      $region21: #{hno_forward.5} parent=11 // pred_check
        %p217 = pneg %p128
      $region22: #{hno_forward.5} parent=11 // pred_check_branch
        %219 = sbr.rel (%p217) target = $region24
      $region23: #{hno_forward.5} parent=11 // pred_region
        _
      $region24: #{hno_forward.5} parent=11 // pred_fallthru
        _
      // Predicated region
      $region25: #{hno_forward.5} parent=11 // pred_check
        %p220 = pneg %p149
      $region26: #{hno_forward.5} parent=11 // pred_check_branch
        %222 = sbr.rel (%p220) target = $region28
      $region27: #{hno_forward.5} parent=11 // pred_region
        _
      $region28: #{hno_forward.5} parent=11 // pred_fallthru
        _
      // Predicated region
      $region29: #{hno_forward.5} parent=11 // pred_check
        %p223 = pneg %p170
      $region30: #{hno_forward.5} parent=11 // pred_check_branch
        %225 = sbr.rel (%p223) target = $region32
      $region31: #{hno_forward.5} parent=11 // pred_region
        _
      $region32: #{hno_forward.5} parent=11 // pred_fallthru
        _
    $region12: #{hno_forward.5} parent=5 // pred_fallthru
      _
    %p226 = scmp.lt.s32.totalorder %s13, 2
    // Predicated region
    $region33: #{hno_forward.5} parent=5 // pred_check
      %p227 = pneg %p226
    $region34: #{hno_forward.5} parent=5 // pred_check_branch
      %229 = sbr.rel (%p227) target = $region36
    $region35: #{hno_forward.5} parent=5 // pred_region
      // Predicated region
      $region37: #{hno_forward.5} parent=35 // pred_check
        %p230 = pneg %p54
      $region38: #{hno_forward.5} parent=35 // pred_check_branch
        %232 = sbr.rel (%p230) target = $region40
      $region39: #{hno_forward.5} parent=35 // pred_region
        %p233 = scmp.lt.s32.totalorder %s13, 1
        %s234 = scalar_select %p233, %s13, 1
        %s235 = scalar_lea.vmem %s1, %s234
      $region40: #{hno_forward.5} parent=35 // pred_fallthru
        _
      // Predicated region
      $region41: #{hno_forward.5} parent=35 // pred_check
        %p236 = pneg %p80
      $region42: #{hno_forward.5} parent=35 // pred_check_branch
        %238 = sbr.rel (%p236) target = $region44
      $region43: #{hno_forward.5} parent=35 // pred_region
        %p239 = scmp.lt.s32.totalorder %s13, 1
        %s240 = scalar_select %p239, %s13, 1
        %s241 = scalar_lea.vmem %s2, %s240
      $region44: #{hno_forward.5} parent=35 // pred_fallthru
        _
    $region36: #{hno_forward.5} parent=5 // pred_fallthru
      _
    %p242 = scmp.le.s32.totalorder 1, %s13
    %p243 = scmp.lt.s32.totalorder %s13, 3
    %p244 = pnand %p242, %p243
    %p245 = pneg %p244
    // Predicated region
    $region45: #{hno_forward.5} parent=5 // pred_check
      _
    $region46: #{hno_forward.5} parent=5 // pred_check_branch
      %247 = sbr.rel (%p244) target = $region48
    $region47: #{hno_forward.5} parent=5 // pred_region
      %s248 = ssub.s32 %s13, 1
      %p249 = pneg %p34
      %p250 = pneg %p31
      %p251 = scmp.lt.s32.totalorder %s18, 1
      %s252 = scalar_select %p251, %s18, 1
      %s253 = scalar_lea.vmem %s1, %s252
      %p254 = pneg %p60
      %p255 = pneg %p57
      %p256 = scmp.lt.s32.totalorder %s18, 1
      %s257 = scalar_select %p256, %s18, 1
      %s258 = scalar_lea.vmem %s2, %s257
      %p259 = pneg %p86
      %p260 = pneg %p83
      %p261 = pneg %p107
      %p262 = pneg %p104
      %p263 = pneg %p128
      %p264 = pneg %p125
      %p265 = pneg %p149
      %p266 = pneg %p146
      %p267 = pneg %p170
      %p268 = pneg %p167
      %p269 = pneg %p196
      %p270 = pneg %p193
      %p271 = scmp.lt.s32.totalorder %s18, 1
      %s272 = scalar_select %p271, %s18, 1
      %s273 = smul.addr %s272, 8
      %s274 = smul.addr %s273, 8
      %s275 = scalar_lea.vmem %s7, %s274
      %p276 = scmp.lt.s32.totalorder %s18, 1
      %s277 = scalar_select %p276, %s18, 1
      %s278 = scalar_lea.vmem %s1, %s277
      %p279 = scmp.lt.s32.totalorder %s18, 1
      %s280 = scalar_select %p279, %s18, 1
      %s281 = scalar_lea.vmem %s2, %s280
      %p282 = scmp.lt.s32.totalorder %s18, 1
      %s283 = scalar_select %p282, %s18, 1
      %s284 = smul.addr %s283, 8
      %s285 = smul.addr %s284, 8
      %s286 = scalar_lea.vmem %s7, %s285
      %v287 = vld [vmem:[%s278] sm:$0x1]
      %v288 = vld [vmem:[%s3] sm:$0xff]
      %v289 = vld [vmem:[%s3 + $0x8] sm:$0xff]
      %v290 = vld [vmem:[%s3 + $0x10] sm:$0xff]
      %v291 = vld [vmem:[%s3 + $0x18] sm:$0xff]
      %v292 = vld [vmem:[%s3 + $0x20] sm:$0xff]
      %v293 = vld [vmem:[%s3 + $0x28] sm:$0xff]
      %v294 = vld [vmem:[%s3 + $0x30] sm:$0xff]
      %v295 = vld [vmem:[%s3 + $0x38] sm:$0xff]
      %v296 = vld [vmem:[%s3 + $0x40] sm:$0xff]
      %v297 = vld [vmem:[%s3 + $0x48] sm:$0xff]
      %v298 = vld [vmem:[%s3 + $0x50] sm:$0xff]
      %v299 = vld [vmem:[%s3 + $0x58] sm:$0xff]
      %v300 = vld [vmem:[%s3 + $0x60] sm:$0xff]
      %v301 = vld [vmem:[%s3 + $0x68] sm:$0xff]
      %v302 = vld [vmem:[%s3 + $0x70] sm:$0xff]
      %v303 = vld [vmem:[%s3 + $0x78] sm:$0xff]
      %v304 = vld [vmem:[%s281] sm:$0x1]
      %v305 = vld [vmem:[%s4] sm:$0xff]
      %v306 = vld [vmem:[%s4 + $0x8] sm:$0xff]
      %v307 = vld [vmem:[%s4 + $0x10] sm:$0xff]
      %v308 = vld [vmem:[%s4 + $0x18] sm:$0xff]
      %v309 = vld [vmem:[%s4 + $0x20] sm:$0xff]
      %v310 = vld [vmem:[%s4 + $0x28] sm:$0xff]
      %v311 = vld [vmem:[%s4 + $0x30] sm:$0xff]
      %v312 = vld [vmem:[%s4 + $0x38] sm:$0xff]
      %v313 = vld [vmem:[%s4 + $0x40] sm:$0xff]
      %v314 = vld [vmem:[%s4 + $0x48] sm:$0xff]
      %v315 = vld [vmem:[%s4 + $0x50] sm:$0xff]
      %v316 = vld [vmem:[%s4 + $0x58] sm:$0xff]
      %v317 = vld [vmem:[%s4 + $0x60] sm:$0xff]
      %v318 = vld [vmem:[%s4 + $0x68] sm:$0xff]
      %v319 = vld [vmem:[%s4 + $0x70] sm:$0xff]
      %v320 = vld [vmem:[%s4 + $0x78] sm:$0xff]
      %321 = vmatprep.subr.mxu0 0.0
      %322 = vmatpush1.msra.mxu0 %v305
      %323 = vmatprep.subr.mxu0 0.0
      %324 = vmatpush1.msra.mxu0 %v306
      %325 = vmatprep.subr.mxu0 0.0
      %326 = vmatpush1.msra.mxu0 %v307
      %327 = vmatprep.subr.mxu0 0.0
      %328 = vmatpush1.msra.mxu0 %v308
      %329 = vmatprep.subr.mxu0 0.0
      %330 = vmatpush1.msra.mxu0 %v309
      %331 = vmatprep.subr.mxu0 0.0
      %332 = vmatpush1.msra.mxu0 %v310
      %333 = vmatprep.subr.mxu0 0.0
      %334 = vmatpush1.msra.mxu0 %v311
      %335 = vmatprep.subr.mxu0 0.0
      %336 = vmatpush1.msra.mxu0 %v312
      %337 = vmatprep.subr.mxu0 0.0
      %338 = vmatpush1.msra.mxu0 %v313
      %339 = vmatprep.subr.mxu0 0.0
      %340 = vmatpush1.msra.mxu0 %v314
      %341 = vmatprep.subr.mxu0 0.0
      %342 = vmatpush1.msra.mxu0 %v315
      %343 = vmatprep.subr.mxu0 0.0
      %344 = vmatpush1.msra.mxu0 %v316
      %345 = vmatprep.subr.mxu0 0.0
      %346 = vmatpush1.msra.mxu0 %v317
      %347 = vmatprep.subr.mxu0 0.0
      %348 = vmatpush1.msra.mxu0 %v318
      %349 = vmatprep.subr.mxu0 0.0
      %350 = vmatpush1.msra.mxu0 %v319
      %351 = vmatprep.subr.mxu0 0.0
      %352 = vmatpush1.msra.mxu0 %v320
      %353 = vmatprep.subr.mxu0 0.0
      %354 = vmatpush1.msra.mxu0 0.0
      %355 = vmatprep.subr.mxu0 0.0
      %356 = vmatpush1.msra.mxu0 0.0
      %357 = vmatprep.subr.mxu0 0.0
      %358 = vmatpush1.msra.mxu0 0.0
      %359 = vmatprep.subr.mxu0 0.0
      %360 = vmatpush1.msra.mxu0 0.0
      %361 = vmatprep.subr.mxu0 0.0
      %362 = vmatpush1.msra.mxu0 0.0
      %363 = vmatprep.subr.mxu0 0.0
      %364 = vmatpush1.msra.mxu0 0.0
      %365 = vmatprep.subr.mxu0 0.0
      %366 = vmatpush1.msra.mxu0 0.0
      %367 = vmatprep.subr.mxu0 0.0
      %368 = vmatpush1.msra.mxu0 0.0
      %369 = vmatprep.subr.mxu0 0.0
      %370 = vmatpush1.msra.mxu0 0.0
      %371 = vmatprep.subr.mxu0 0.0
      %372 = vmatpush1.msra.mxu0 0.0
      %373 = vmatprep.subr.mxu0 0.0
      %374 = vmatpush1.msra.mxu0 0.0
      %375 = vmatprep.subr.mxu0 0.0
      %376 = vmatpush1.msra.mxu0 0.0
      %377 = vmatprep.subr.mxu0 0.0
      %378 = vmatpush1.msra.mxu0 0.0
      %379 = vmatprep.subr.mxu0 0.0
      %380 = vmatpush1.msra.mxu0 0.0
      %381 = vmatprep.subr.mxu0 0.0
      %382 = vmatpush1.msra.mxu0 0.0
      %383 = vmatprep.subr.mxu0 0.0
      %384 = vmatpush1.msra.mxu0 0.0
      %385 = vmatprep.mubr.f32.mxu0 0.0
      %386 = vmatmul.mubr.f32.gmra.mrb[0].mxu0 %v304
      %v387 = vpop.f32.mrb[0].mxu0
      %v388 = vadd.f32 0.0, %v387
      %v389 = vpop.f32.mrb[0].mxu0
      %390 = vdwg.mxu0
      %391 = vmatprep.subr.mxu0 0.0
      %392 = vmatpush1.msra.mxu0 %v288
      %393 = vmatprep.subr.mxu0 0.0
      %394 = vmatpush1.msra.mxu0 %v289
      %395 = vmatprep.subr.mxu0 0.0
      %396 = vmatpush1.msra.mxu0 %v290
      %397 = vmatprep.subr.mxu0 0.0
      %398 = vmatpush1.msra.mxu0 %v291
      %399 = vmatprep.subr.mxu0 0.0
      %400 = vmatpush1.msra.mxu0 %v292
      %401 = vmatprep.subr.mxu0 0.0
      %402 = vmatpush1.msra.mxu0 %v293
      %403 = vmatprep.subr.mxu0 0.0
      %404 = vmatpush1.msra.mxu0 %v294
      %405 = vmatprep.subr.mxu0 0.0
      %406 = vmatpush1.msra.mxu0 %v295
      %407 = vmatprep.subr.mxu0 0.0
      %408 = vmatpush1.msra.mxu0 %v296
      %409 = vmatprep.subr.mxu0 0.0
      %410 = vmatpush1.msra.mxu0 %v297
      %411 = vmatprep.subr.mxu0 0.0
      %412 = vmatpush1.msra.mxu0 %v298
      %413 = vmatprep.subr.mxu0 0.0
      %414 = vmatpush1.msra.mxu0 %v299
      %415 = vmatprep.subr.mxu0 0.0
      %416 = vmatpush1.msra.mxu0 %v300
      %417 = vmatprep.subr.mxu0 0.0
      %418 = vmatpush1.msra.mxu0 %v301
      %419 = vmatprep.subr.mxu0 0.0
      %420 = vmatpush1.msra.mxu0 %v302
      %421 = vmatprep.subr.mxu0 0.0
      %422 = vmatpush1.msra.mxu0 %v303
      %423 = vmatprep.subr.mxu0 0.0
      %424 = vmatpush1.msra.mxu0 0.0
      %425 = vmatprep.subr.mxu0 0.0
      %426 = vmatpush1.msra.mxu0 0.0
      %427 = vmatprep.subr.mxu0 0.0
      %428 = vmatpush1.msra.mxu0 0.0
      %429 = vmatprep.subr.mxu0 0.0
      %430 = vmatpush1.msra.mxu0 0.0
      %431 = vmatprep.subr.mxu0 0.0
      %432 = vmatpush1.msra.mxu0 0.0
      %433 = vmatprep.subr.mxu0 0.0
      %434 = vmatpush1.msra.mxu0 0.0
      %435 = vmatprep.subr.mxu0 0.0
      %436 = vmatpush1.msra.mxu0 0.0
      %437 = vmatprep.subr.mxu0 0.0
      %438 = vmatpush1.msra.mxu0 0.0
      %439 = vmatprep.subr.mxu0 0.0
      %440 = vmatpush1.msra.mxu0 0.0
      %441 = vmatprep.subr.mxu0 0.0
      %442 = vmatpush1.msra.mxu0 0.0
      %443 = vmatprep.subr.mxu0 0.0
      %444 = vmatpush1.msra.mxu0 0.0
      %445 = vmatprep.subr.mxu0 0.0
      %446 = vmatpush1.msra.mxu0 0.0
      %447 = vmatprep.subr.mxu0 0.0
      %448 = vmatpush1.msra.mxu0 0.0
      %449 = vmatprep.subr.mxu0 0.0
      %450 = vmatpush1.msra.mxu0 0.0
      %451 = vmatprep.subr.mxu0 0.0
      %452 = vmatpush1.msra.mxu0 0.0
      %453 = vmatprep.subr.mxu0 0.0
      %454 = vmatpush1.msra.mxu0 0.0
      %455 = vmatprep.mubr.f32.mxu0 0.0
      %456 = vmatmul.mubr.f32.gmra.mrb[0].mxu0 %v287
      %v457 = vpop.f32.mrb[0].mxu0
      %v458 = vadd.f32 %v388, %v457
      %v459 = vpop.f32.mrb[0].mxu0
      %460 = vdwg.mxu0
      %v461 = vld [vmem:[%s0] sm:$0xff]
      %v462 = vld [vmem:[%s0 + $0x8] sm:$0xff]
      %v463 = vld [vmem:[%s0 + $0x10] sm:$0xff]
      %v464 = vld [vmem:[%s0 + $0x18] sm:$0xff]
      %v465 = vld [vmem:[%s0 + $0x20] sm:$0xff]
      %v466 = vld [vmem:[%s0 + $0x28] sm:$0xff]
      %v467 = vld [vmem:[%s0 + $0x30] sm:$0xff]
      %v468 = vld [vmem:[%s0 + $0x38] sm:$0xff]
      %v469 = vlaneseq
      %v470 = vshrl.u32 %v469, 7
      %v471 = vsub.s32 0, %v470
      %v472 = vrot.slane %v458, %v471
      %v473 = vadd.f32 %v461, %v472
      %v474 = vadd.f32 %v462, %v472
      %v475 = vadd.f32 %v463, %v472
      %v476 = vadd.f32 %v464, %v472
      %v477 = vadd.f32 %v465, %v472
      %v478 = vadd.f32 %v466, %v472
      %v479 = vadd.f32 %v467, %v472
      %v480 = vadd.f32 %v468, %v472
      %v481 = vmax.f32 %v473, 0.0
      %v482 = vmax.f32 %v474, 0.0
      %v483 = vmax.f32 %v475, 0.0
      %v484 = vmax.f32 %v476, 0.0
      %v485 = vmax.f32 %v477, 0.0
      %v486 = vmax.f32 %v478, 0.0
      %v487 = vmax.f32 %v479, 0.0
      %v488 = vmax.f32 %v480, 0.0
      %v489 = vld [vmem:[%s5] sm:$0xff]
      %v490 = vld [vmem:[%s5 + $0x8] sm:$0xff]
      %v491 = vld [vmem:[%s5 + $0x10] sm:$0xff]
      %v492 = vld [vmem:[%s5 + $0x18] sm:$0xff]
      %v493 = vld [vmem:[%s6] sm:$0x1]
      %v495 = vlaneseq
      %v496 = vshrl.u32 %v495, 7
      %v497 = vsub.s32 0, %v496
      %v498 = vrot.slane %v493, %v497
      %vm500 = vcmask 261120
      %v502 = vsel %vm500, %v481, 0
      %v505 = vsel %vm500, %v482, 0
      %v508 = vsel %vm500, %v483, 0
      %v511 = vsel %vm500, %v484, 0
      %v514 = vsel %vm500, %v485, 0
      %v517 = vsel %vm500, %v486, 0
      %v520 = vsel %vm500, %v487, 0
      %v523 = vsel %vm500, %v488, 0
      %525 = vmatprep.subr.mxu0 0.0
      %526 = vmatpush1.msra.mxu0 %v489
      %527 = vmatprep.subr.mxu0 0.0
      %528 = vmatpush1.msra.mxu0 %v490
      %529 = vmatprep.subr.mxu0 0.0
      %530 = vmatpush1.msra.mxu0 %v491
      %531 = vmatprep.subr.mxu0 0.0
      %532 = vmatpush1.msra.mxu0 %v492
      %533 = vmatprep.subr.mxu0 0.0
      %534 = vmatpush1.msra.mxu0 0.0
      %535 = vmatprep.subr.mxu0 0.0
      %536 = vmatpush1.msra.mxu0 0.0
      %537 = vmatprep.subr.mxu0 0.0
      %538 = vmatpush1.msra.mxu0 0.0
      %539 = vmatprep.subr.mxu0 0.0
      %540 = vmatpush1.msra.mxu0 0.0
      %541 = vmatprep.subr.mxu0 0.0
      %542 = vmatpush1.msra.mxu0 0.0
      %543 = vmatprep.subr.mxu0 0.0
      %544 = vmatpush1.msra.mxu0 0.0
      %545 = vmatprep.subr.mxu0 0.0
      %546 = vmatpush1.msra.mxu0 0.0
      %547 = vmatprep.subr.mxu0 0.0
      %548 = vmatpush1.msra.mxu0 0.0
      %549 = vmatprep.subr.mxu0 0.0
      %550 = vmatpush1.msra.mxu0 0.0
      %551 = vmatprep.subr.mxu0 0.0
      %552 = vmatpush1.msra.mxu0 0.0
      %553 = vmatprep.subr.mxu0 0.0
      %554 = vmatpush1.msra.mxu0 0.0
      %555 = vmatprep.subr.mxu0 0.0
      %556 = vmatpush1.msra.mxu0 0.0
      %557 = vmatprep.subr.mxu0 0.0
      %558 = vmatpush1.msra.mxu0 0.0
      %559 = vmatprep.subr.mxu0 0.0
      %560 = vmatpush1.msra.mxu0 0.0
      %561 = vmatprep.subr.mxu0 0.0
      %562 = vmatpush1.msra.mxu0 0.0
      %563 = vmatprep.subr.mxu0 0.0
      %564 = vmatpush1.msra.mxu0 0.0
      %565 = vmatprep.subr.mxu0 0.0
      %566 = vmatpush1.msra.mxu0 0.0
      %567 = vmatprep.subr.mxu0 0.0
      %568 = vmatpush1.msra.mxu0 0.0
      %569 = vmatprep.subr.mxu0 0.0
      %570 = vmatpush1.msra.mxu0 0.0
      %571 = vmatprep.subr.mxu0 0.0
      %572 = vmatpush1.msra.mxu0 0.0
      %573 = vmatprep.subr.mxu0 0.0
      %574 = vmatpush1.msra.mxu0 0.0
      %575 = vmatprep.subr.mxu0 0.0
      %576 = vmatpush1.msra.mxu0 0.0
      %577 = vmatprep.subr.mxu0 0.0
      %578 = vmatpush1.msra.mxu0 0.0
      %579 = vmatprep.subr.mxu0 0.0
      %580 = vmatpush1.msra.mxu0 0.0
      %581 = vmatprep.subr.mxu0 0.0
      %582 = vmatpush1.msra.mxu0 0.0
      %583 = vmatprep.subr.mxu0 0.0
      %584 = vmatpush1.msra.mxu0 0.0
      %585 = vmatprep.subr.mxu0 0.0
      %586 = vmatpush1.msra.mxu0 0.0
      %587 = vmatprep.subr.mxu0 0.0
      %588 = vmatpush1.msra.mxu0 0.0
      %589 = vmatprep.mubr.f32.mxu0 0.0
      %590 = vmatmul.mubr.f32.gmra.mrb[0].mxu0 %v502
      %v591 = vpop.f32.mrb[0].mxu0
      %v592 = vadd.f32 %v498, %v591
      %v593 = vpop.f32.mrb[0].mxu0
      %594 = vmatprep.mubr.f32.mxu0 0.0
      %595 = vmatmul.mubr.f32.gmra.mrb[0].mxu0 %v505
      %v596 = vpop.f32.mrb[0].mxu0
      %v597 = vadd.f32 %v498, %v596
      %v598 = vpop.f32.mrb[0].mxu0
      %599 = vmatprep.mubr.f32.mxu0 0.0
      %600 = vmatmul.mubr.f32.gmra.mrb[0].mxu0 %v508
      %v601 = vpop.f32.mrb[0].mxu0
      %v602 = vadd.f32 %v498, %v601
      %v603 = vpop.f32.mrb[0].mxu0
      %604 = vmatprep.mubr.f32.mxu0 0.0
      %605 = vmatmul.mubr.f32.gmra.mrb[0].mxu0 %v511
      %v606 = vpop.f32.mrb[0].mxu0
      %v607 = vadd.f32 %v498, %v606
      %v608 = vpop.f32.mrb[0].mxu0
      %609 = vmatprep.mubr.f32.mxu0 0.0
      %610 = vmatmul.mubr.f32.gmra.mrb[0].mxu0 %v514
      %v611 = vpop.f32.mrb[0].mxu0
      %v612 = vadd.f32 %v498, %v611
      %v613 = vpop.f32.mrb[0].mxu0
      %614 = vmatprep.mubr.f32.mxu0 0.0
      %615 = vmatmul.mubr.f32.gmra.mrb[0].mxu0 %v517
      %v616 = vpop.f32.mrb[0].mxu0
      %v617 = vadd.f32 %v498, %v616
      %v618 = vpop.f32.mrb[0].mxu0
      %619 = vmatprep.mubr.f32.mxu0 0.0
      %620 = vmatmul.mubr.f32.gmra.mrb[0].mxu0 %v520
      %v621 = vpop.f32.mrb[0].mxu0
      %v622 = vadd.f32 %v498, %v621
      %v623 = vpop.f32.mrb[0].mxu0
      %624 = vmatprep.mubr.f32.mxu0 0.0
      %625 = vmatmul.mubr.f32.gmra.mrb[0].mxu0 %v523
      %v626 = vpop.f32.mrb[0].mxu0
      %v627 = vadd.f32 %v498, %v626
      %v628 = vpop.f32.mrb[0].mxu0
      %629 = vdwg.mxu0
      %vm630 = vcmask 23552
      %631 = vst.msk [vmem:[%s286] sm:$0xff] %vm630, %v592
      %632 = vst.msk [vmem:[%s286 + $0x8] sm:$0xff] %vm630, %v597
      %633 = vst.msk [vmem:[%s286 + $0x10] sm:$0xff] %vm630, %v602
      %634 = vst.msk [vmem:[%s286 + $0x18] sm:$0xff] %vm630, %v607
      %635 = vst.msk [vmem:[%s286 + $0x20] sm:$0xff] %vm630, %v612
      %636 = vst.msk [vmem:[%s286 + $0x28] sm:$0xff] %vm630, %v617
      %637 = vst.msk [vmem:[%s286 + $0x30] sm:$0xff] %vm630, %v622
      %638 = vst.msk [vmem:[%s286 + $0x38] sm:$0xff] %vm630, %v627
      %p639 = scmp.lt.s32.totalorder %s18, 1
      %s640 = scalar_select %p639, %s18, 1
      %s641 = smul.addr %s640, 8
      %s642 = smul.addr %s641, 8
      %s643 = scalar_lea.vmem %s7, %s642
      // Predicated region
      $region49: #{hno_forward.5} parent=47 // pred_check
        %p644 = pneg %p193
      $region50: #{hno_forward.5} parent=47 // pred_check_branch
        %646 = sbr.rel (%p644) target = $region52
      $region51: #{hno_forward.5} parent=47 // pred_region
        _
      $region52: #{hno_forward.5} parent=47 // pred_fallthru
        _
    $region48: #{hno_forward.5} parent=5 // pred_fallthru
      _
    %p647 = scmp.le.s32.totalorder 2, %s13
    // Predicated region
    $region53: #{hno_forward.5} parent=5 // pred_check
      %p648 = pneg %p647
    $region54: #{hno_forward.5} parent=5 // pred_check_branch
      %650 = sbr.rel (%p648) target = $region56
    $region55: #{hno_forward.5} parent=5 // pred_region
      %s651 = ssub.s32 %s13, 2
      // Predicated region
      $region57: #{hno_forward.5} parent=55 // pred_check
        %p652 = pneg %p199
      $region58: #{hno_forward.5} parent=55 // pred_check_branch
        %654 = sbr.rel (%p652) target = $region60
      $region59: #{hno_forward.5} parent=55 // pred_region
        %p655 = scmp.lt.s32.totalorder %s19, 1
        %s656 = scalar_select %p655, %s19, 1
        %s657 = smul.addr %s656, 8
        %s658 = smul.addr %s657, 8
        %s659 = scalar_lea.vmem %s7, %s658
      $region60: #{hno_forward.5} parent=55 // pred_fallthru
        _
    $region56: #{hno_forward.5} parent=5 // pred_fallthru
      _
  $region6: #{hno_forward.5} parent=0 // loop_footer
    %s17 = sadd.s32 1, %s13
  $region7: #{hno_forward.5} parent=0 // loop_footer_branch
    %12 = sbr.rel target = $region3
  $region8: #{hno_forward.5} parent=0 // loop_exit
    _

// kernel: hno_forward.3
$region0: #{hno_forward.3}
  #allocation0 [shape = 'u32[]', space=smem, size = 0x4, offset = 0x4, fixed_abs, tag = 'smem constant byte address 0x4 - core index']
  #allocation1 [shape = 'u32[144,128]{1,0:T(1,128)}', space=vmem, size = 0x12000, scoped, tag = 'internal scratch']
  #allocation2 [shape = 'f32[2,48,32]{2,1,0:T(8,128)}', space=vmem, size = 0xc000, scoped, tag = 'scratch operand']
  %s0 = inlined_call_operand.vmem [shape: bf16[2,48,48], index: 0, kind: input, shape index: {}]
  %s1 = inlined_call_operand.vmem [shape: f32[2,48,32], index: 1, kind: input, shape index: {}]
  %s2 = inlined_call_operand.vmem [shape: f32[2,96,32], index: 2, kind: input, shape index: {}]
  %s3 = inlined_call_operand.vmem [shape: f32[2,1,32], index: 3, kind: input, shape index: {}]
  %s4 = inlined_call_operand.vmem [shape: bf16[2,8,48], index: 4, kind: input, shape index: {}]
  %s5 = inlined_call_operand.vmem [shape: f32[2,8,32], index: 5, kind: output, shape index: {}]
  %s6 = sld [smem:[#allocation0]]
  $region65: #{hno_forward.3} parent=0
    _
  %s8 = ssub.s32 1, %s6
  %s9 = scalar_select 0, %s8, %s6
  loop: start=0, step=1, limit=6
  $region2: #{hno_forward.3} parent=0 // loop_pre_header
    _
  $region3: #{hno_forward.3} parent=0 // loop_header
    %s11 = sphi 0, %s15
    %p12 = scmp.ge.s32.totalorder %s11, 6
    %s18 = sphi 0, %s30
    %s19 = sphi 0, %s26
    %s20 = sphi 0, %s18
    %s21 = sphi 0, %s19
    %s22 = sphi 0, %s20
    %s23 = sphi 0, %s21
    %s33 = sphi 0, %s35
    %s36 = sphi 0, %s33
    %s37 = sphi 0, %s36
    %s53 = sphi 0, %s37
    %s59 = sphi 0, %s61
    %s62 = sphi 0, %s59
    %s63 = sphi 0, %s62
    %s79 = sphi 0, %s63
    %s85 = sphi 0, %s87
    %s88 = sphi 0, %s85
    %s89 = sphi 0, %s88
    %s105 = sphi 0, %s89
    %s111 = sphi 0, %s113
    %s114 = sphi 0, %s111
    %s115 = sphi 0, %s114
    %s131 = sphi 0, %s115
    %s135 = sphi 0, %s135
    %s137 = sphi 0, %s135
    %s138 = sphi 0, %s137
    %s152 = sphi 0, %s138
    %s156 = sphi 0, %s156
    %s158 = sphi 0, %s156
    %s159 = sphi 0, %s158
    %s173 = sphi 0, %s159
  $region4: #{hno_forward.3} parent=0 // loop_header_branch
    %14 = sbr.rel (%p12) target = $region8
  $region5: #{hno_forward.3} parent=0 // loop_body
    %s16 = ssub.s32 %s11, 1
    %s17 = ssub.s32 %s11, 2
    %s24 = sadd.s32 1, %s19
    %p25 = scmp.ge.s32.totalorder %s24, 2
    %s26 = scalar_select %p25, 0, %s24
    %s27 = sadd.s32 1, %s18
    %s28 = scalar_select %p25, %s27, %s18
    %p29 = scmp.ge.s32.totalorder %s28, 2
    %s30 = scalar_select %p29, 0, %s28
    %s31 = ssub.s32 %s19, %s26
    %p32 = scmp.eq.s32.totalorder %s31, 0
    %s34 = sadd.s32 %s33, 1
    %s35 = scalar_select %p32, %s33, %s34
    %p38 = pneg %p32
    %p39 = scmp.eq.s32.totalorder %s11, 3
    %p40 = por %p38, %p39
    %p41 = scmp.ne.s32.totalorder %s33, %s36
    %p42 = scmp.eq.s32.totalorder %s11, 0
    %p43 = por %p41, %p42
    %p44 = scmp.ne.s32.totalorder %s33, %s36
    %p45 = scmp.eq.s32.totalorder %s16, 3
    %p46 = por %p44, %p45
    %p47 = scmp.ne.s32.totalorder %s36, %s37
    %p48 = scmp.eq.s32.totalorder %s16, 0
    %p49 = por %p47, %p48
    %p50 = scmp.ne.s32.totalorder %s36, %s37
    %p51 = scmp.eq.s32.totalorder %s17, 3
    %p52 = por %p50, %p51
    %p54 = scmp.ne.s32.totalorder %s37, %s53
    %p55 = scmp.eq.s32.totalorder %s17, 0
    %p56 = por %p54, %p55
    %s57 = ssub.s32 %s19, %s26
    %p58 = scmp.eq.s32.totalorder %s57, 0
    %s60 = sadd.s32 %s59, 1
    %s61 = scalar_select %p58, %s59, %s60
    %p64 = pneg %p58
    %p65 = scmp.eq.s32.totalorder %s11, 3
    %p66 = por %p64, %p65
    %p67 = scmp.ne.s32.totalorder %s59, %s62
    %p68 = scmp.eq.s32.totalorder %s11, 0
    %p69 = por %p67, %p68
    %p70 = scmp.ne.s32.totalorder %s59, %s62
    %p71 = scmp.eq.s32.totalorder %s16, 3
    %p72 = por %p70, %p71
    %p73 = scmp.ne.s32.totalorder %s62, %s63
    %p74 = scmp.eq.s32.totalorder %s16, 0
    %p75 = por %p73, %p74
    %p76 = scmp.ne.s32.totalorder %s62, %s63
    %p77 = scmp.eq.s32.totalorder %s17, 3
    %p78 = por %p76, %p77
    %p80 = scmp.ne.s32.totalorder %s63, %s79
    %p81 = scmp.eq.s32.totalorder %s17, 0
    %p82 = por %p80, %p81
    %s83 = ssub.s32 %s18, %s30
    %p84 = scmp.eq.s32.totalorder %s83, 0
    %s86 = sadd.s32 %s85, 1
    %s87 = scalar_select %p84, %s85, %s86
    %p90 = pneg %p84
    %p91 = scmp.eq.s32.totalorder %s11, 3
    %p92 = por %p90, %p91
    %p93 = scmp.ne.s32.totalorder %s85, %s88
    %p94 = scmp.eq.s32.totalorder %s11, 0
    %p95 = por %p93, %p94
    %p96 = scmp.ne.s32.totalorder %s85, %s88
    %p97 = scmp.eq.s32.totalorder %s16, 3
    %p98 = por %p96, %p97
    %p99 = scmp.ne.s32.totalorder %s88, %s89
    %p100 = scmp.eq.s32.totalorder %s16, 0
    %p101 = por %p99, %p100
    %p102 = scmp.ne.s32.totalorder %s88, %s89
    %p103 = scmp.eq.s32.totalorder %s17, 3
    %p104 = por %p102, %p103
    %p106 = scmp.ne.s32.totalorder %s89, %s105
    %p107 = scmp.eq.s32.totalorder %s17, 0
    %p108 = por %p106, %p107
    %s109 = ssub.s32 %s18, %s30
    %p110 = scmp.eq.s32.totalorder %s109, 0
    %s112 = sadd.s32 %s111, 1
    %s113 = scalar_select %p110, %s111, %s112
    %p116 = pneg %p110
    %p117 = scmp.eq.s32.totalorder %s11, 3
    %p118 = por %p116, %p117
    %p119 = scmp.ne.s32.totalorder %s111, %s114
    %p120 = scmp.eq.s32.totalorder %s11, 0
    %p121 = por %p119, %p120
    %p122 = scmp.ne.s32.totalorder %s111, %s114
    %p123 = scmp.eq.s32.totalorder %s16, 3
    %p124 = por %p122, %p123
    %p125 = scmp.ne.s32.totalorder %s114, %s115
    %p126 = scmp.eq.s32.totalorder %s16, 0
    %p127 = por %p125, %p126
    %p128 = scmp.ne.s32.totalorder %s114, %s115
    %p129 = scmp.eq.s32.totalorder %s17, 3
    %p130 = por %p128, %p129
    %p132 = scmp.ne.s32.totalorder %s115, %s131
    %p133 = scmp.eq.s32.totalorder %s17, 0
    %p134 = por %p132, %p133
    %s136 = sadd.s32 %s135, 1
    %p139 = scmp.eq.s32.totalorder %s11, 3
    %p140 = scmp.ne.s32.totalorder %s135, %s137
    %p141 = scmp.eq.s32.totalorder %s11, 0
    %p142 = por %p140, %p141
    %p143 = scmp.ne.s32.totalorder %s135, %s137
    %p144 = scmp.eq.s32.totalorder %s16, 3
    %p145 = por %p143, %p144
    %p146 = scmp.ne.s32.totalorder %s137, %s138
    %p147 = scmp.eq.s32.totalorder %s16, 0
    %p148 = por %p146, %p147
    %p149 = scmp.ne.s32.totalorder %s137, %s138
    %p150 = scmp.eq.s32.totalorder %s17, 3
    %p151 = por %p149, %p150
    %p153 = scmp.ne.s32.totalorder %s138, %s152
    %p154 = scmp.eq.s32.totalorder %s17, 0
    %p155 = por %p153, %p154
    %s157 = sadd.s32 %s156, 1
    %p160 = scmp.eq.s32.totalorder %s11, 3
    %p161 = scmp.ne.s32.totalorder %s156, %s158
    %p162 = scmp.eq.s32.totalorder %s11, 0
    %p163 = por %p161, %p162
    %p164 = scmp.ne.s32.totalorder %s156, %s158
    %p165 = scmp.eq.s32.totalorder %s16, 3
    %p166 = por %p164, %p165
    %p167 = scmp.ne.s32.totalorder %s158, %s159
    %p168 = scmp.eq.s32.totalorder %s16, 0
    %p169 = por %p167, %p168
    %p170 = scmp.ne.s32.totalorder %s158, %s159
    %p171 = scmp.eq.s32.totalorder %s17, 3
    %p172 = por %p170, %p171
    %p174 = scmp.ne.s32.totalorder %s159, %s173
    %p175 = scmp.eq.s32.totalorder %s17, 0
    %p176 = por %p174, %p175
    %p177 = scmp.le.s32.totalorder 1, %s11
    %p178 = scmp.lt.s32.totalorder %s11, 5
    %p179 = pnand %p177, %p178
    %p180 = pneg %p179
    // Predicated region
    $region9: #{hno_forward.3} parent=5 // pred_check
      _
    $region10: #{hno_forward.3} parent=5 // pred_check_branch
      %182 = sbr.rel (%p179) target = $region12
    $region11: #{hno_forward.3} parent=5 // pred_region
      %s183 = ssub.s32 %s11, 1
      // Predicated region
      $region13: #{hno_forward.3} parent=11 // pred_check
        %p184 = pneg %p148
      $region14: #{hno_forward.3} parent=11 // pred_check_branch
        %186 = sbr.rel (%p184) target = $region16
      $region15: #{hno_forward.3} parent=11 // pred_region
        _
      $region16: #{hno_forward.3} parent=11 // pred_fallthru
        _
    $region12: #{hno_forward.3} parent=5 // pred_fallthru
      _
    %p187 = scmp.lt.s32.totalorder %s11, 4
    // Predicated region
    $region17: #{hno_forward.3} parent=5 // pred_check
      %p188 = pneg %p187
    $region18: #{hno_forward.3} parent=5 // pred_check_branch
      %190 = sbr.rel (%p188) target = $region20
    $region19: #{hno_forward.3} parent=5 // pred_region
      // Predicated region
      $region21: #{hno_forward.3} parent=19 // pred_check
        %p191 = pneg %p43
      $region22: #{hno_forward.3} parent=19 // pred_check_branch
        %193 = sbr.rel (%p191) target = $region24
      $region23: #{hno_forward.3} parent=19 // pred_region
        %p194 = scmp.lt.s32.totalorder %s19, 1
        %s195 = scalar_select %p194, %s19, 1
        %s196 = smul.addr %s195, 6
        %s197 = smul.addr %s196, 4
        %s198 = scalar_lea.vmem %s0, %s197
      $region24: #{hno_forward.3} parent=19 // pred_fallthru
        _
      // Predicated region
      $region25: #{hno_forward.3} parent=19 // pred_check
        %p199 = pneg %p69
      $region26: #{hno_forward.3} parent=19 // pred_check_branch
        %201 = sbr.rel (%p199) target = $region28
      $region27: #{hno_forward.3} parent=19 // pred_region
        %p202 = scmp.lt.s32.totalorder %s19, 1
        %s203 = scalar_select %p202, %s19, 1
        %s204 = smul.addr %s203, 6
        %s205 = smul.addr %s204, 8
        %s206 = scalar_lea.vmem %s1, %s205
      $region28: #{hno_forward.3} parent=19 // pred_fallthru
        _
      // Predicated region
      $region29: #{hno_forward.3} parent=19 // pred_check
        %p207 = pneg %p95
      $region30: #{hno_forward.3} parent=19 // pred_check_branch
        %209 = sbr.rel (%p207) target = $region32
      $region31: #{hno_forward.3} parent=19 // pred_region
        %p210 = scmp.lt.s32.totalorder %s18, 1
        %s211 = scalar_select %p210, %s18, 1
        %s212 = smul.addr %s211, 12
        %s213 = smul.addr %s212, 8
        %s214 = scalar_lea.vmem %s2, %s213
      $region32: #{hno_forward.3} parent=19 // pred_fallthru
        _
      // Predicated region
      $region33: #{hno_forward.3} parent=19 // pred_check
        %p215 = pneg %p121
      $region34: #{hno_forward.3} parent=19 // pred_check_branch
        %217 = sbr.rel (%p215) target = $region36
      $region35: #{hno_forward.3} parent=19 // pred_region
        %p218 = scmp.lt.s32.totalorder %s18, 1
        %s219 = scalar_select %p218, %s18, 1
        %s220 = scalar_lea.vmem %s3, %s219
      $region36: #{hno_forward.3} parent=19 // pred_fallthru
        _
    $region20: #{hno_forward.3} parent=5 // pred_fallthru
      _
    %p221 = scmp.le.s32.totalorder 1, %s11
    %p222 = scmp.lt.s32.totalorder %s11, 5
    %p223 = pnand %p221, %p222
    %p224 = pneg %p223
    // Predicated region
    $region37: #{hno_forward.3} parent=5 // pred_check
      _
    $region38: #{hno_forward.3} parent=5 // pred_check_branch
      %226 = sbr.rel (%p223) target = $region40
    $region39: #{hno_forward.3} parent=5 // pred_region
      %s227 = ssub.s32 %s11, 1
      %p228 = scmp.lt.s32.totalorder %s21, 1
      %s229 = scalar_select %p228, %s21, 1
      %s230 = smul.addr %s229, 6
      %s231 = smul.addr %s230, 4
      %s232 = scalar_lea.vmem %s0, %s231
      %p233 = pneg %p49
      %p234 = pneg %p46
      %p235 = scmp.lt.s32.totalorder %s21, 1
      %s236 = scalar_select %p235, %s21, 1
      %s237 = smul.addr %s236, 6
      %s238 = smul.addr %s237, 8
      %s239 = scalar_lea.vmem %s1, %s238
      %p240 = pneg %p75
      %p241 = pneg %p72
      %p242 = scmp.lt.s32.totalorder %s20, 1
      %s243 = scalar_select %p242, %s20, 1
      %s244 = smul.addr %s243, 12
      %s245 = smul.addr %s244, 8
      %s246 = scalar_lea.vmem %s2, %s245
      %p247 = pneg %p101
      %p248 = pneg %p98
      %p249 = scmp.lt.s32.totalorder %s20, 1
      %s250 = scalar_select %p249, %s20, 1
      %s251 = scalar_lea.vmem %s3, %s250
      %p252 = pneg %p127
      %p253 = pneg %p124
      %p254 = pneg %p148
      %p255 = pneg %p145
      %p256 = pneg %p169
      %p257 = pneg %p166
      %p258 = scmp.lt.s32.totalorder %s21, 1
      %s259 = scalar_select %p258, %s21, 1
      %s260 = smul.addr %s259, 6
      %s261 = smul.addr %s260, 4
      %s262 = scalar_lea.vmem %s0, %s261
      %p263 = scmp.lt.s32.totalorder %s21, 1
      %s264 = scalar_select %p263, %s21, 1
      %s265 = smul.addr %s264, 6
      %s266 = smul.addr %s265, 8
      %s267 = scalar_lea.vmem %s1, %s266
      %p268 = scmp.lt.s32.totalorder %s20, 1
      %s269 = scalar_select %p268, %s20, 1
      %s270 = smul.addr %s269, 12
      %s271 = smul.addr %s270, 8
      %s272 = scalar_lea.vmem %s2, %s271
      %p273 = scmp.lt.s32.totalorder %s20, 1
      %s274 = scalar_select %p273, %s20, 1
      %s275 = scalar_lea.vmem %s3, %s274
      %p277 = scmp.eq.s32.totalorder %s20, 0
      // Predicated region
      $region41: #{hno_forward.3} parent=39 // pred_check
        %p278 = pneg %p277
      $region42: #{hno_forward.3} parent=39 // pred_check_branch
        %280 = sbr.rel (%p278) target = $region44
      $region43: #{hno_forward.3} parent=39 // pred_region
        %v281 = vld [vmem:[%s267] sm:$0xff]
        %v282 = vld [vmem:[%s267 + $0x8] sm:$0xff]
        %v283 = vld [vmem:[%s267 + $0x10] sm:$0xff]
        %v284 = vld [vmem:[%s267 + $0x18] sm:$0xff]
        %v285 = vld [vmem:[%s267 + $0x20] sm:$0xff]
        %v286 = vld [vmem:[%s267 + $0x28] sm:$0xff]
        %s287 = smul.u32 %s21, 48
        %s288 = scalar_lea.vmem [#allocation2], %s287
        %vm289 = vcmask 261120
        %290 = vst.msk [vmem:[%s288] sm:$0xff] %vm289, %v281
        %291 = vst.msk [vmem:[%s288 + $0x8] sm:$0xff] %vm289, %v282
        %292 = vst.msk [vmem:[%s288 + $0x10] sm:$0xff] %vm289, %v283
        %293 = vst.msk [vmem:[%s288 + $0x18] sm:$0xff] %vm289, %v284
        %294 = vst.msk [vmem:[%s288 + $0x20] sm:$0xff] %vm289, %v285
        %295 = vst.msk [vmem:[%s288 + $0x28] sm:$0xff] %vm289, %v286
      $region44: #{hno_forward.3} parent=39 // pred_fallthru
        _
      %v296 = vld [vmem:[%s262] sm:$0xf]
      %v297 = vld [vmem:[%s262 + $0x4] sm:$0xf]
      %v298 = vld [vmem:[%s262 + $0x8] sm:$0xf]
      %v299 = vld [vmem:[%s262 + $0xc] sm:$0xf]
      %v300 = vld [vmem:[%s262 + $0x10] sm:$0xf]
      %v301 = vld [vmem:[%s262 + $0x14] sm:$0xf]
      %s302 = smul.u32 %s21, 48
      %s303 = scalar_lea.vmem [#allocation2], %s302
      %v304 = vld [vmem:[%s303] sm:$0xff]
      %v305 = vld [vmem:[%s303 + $0x8] sm:$0xff]
      %v306 = vld [vmem:[%s303 + $0x10] sm:$0xff]
      %v307 = vld [vmem:[%s303 + $0x18] sm:$0xff]
      %v308 = vld [vmem:[%s303 + $0x20] sm:$0xff]
      %v309 = vld [vmem:[%s303 + $0x28] sm:$0xff]
      %v310 = vld [vmem:[%s272] sm:$0xff]
      %v311 = vld [vmem:[%s272 + $0x8] sm:$0xff]
      %v312 = vld [vmem:[%s272 + $0x10] sm:$0xff]
      %v313 = vld [vmem:[%s272 + $0x18] sm:$0xff]
      %v314 = vld [vmem:[%s272 + $0x20] sm:$0xff]
      %v315 = vld [vmem:[%s272 + $0x28] sm:$0xff]
      %v316 = vld [vmem:[%s272 + $0x30] sm:$0xff]
      %v317 = vld [vmem:[%s272 + $0x38] sm:$0xff]
      %v318 = vld [vmem:[%s272 + $0x40] sm:$0xff]
      %v319 = vld [vmem:[%s272 + $0x48] sm:$0xff]
      %v320 = vld [vmem:[%s272 + $0x50] sm:$0xff]
      %v321 = vld [vmem:[%s272 + $0x58] sm:$0xff]
      %v322 = vld [vmem:[%s275] sm:$0x1]
      %v323 = vpack.c.bf16 %v305, %v304
      %v324 = vpack.c.bf16 %v307, %v306
      %v325 = vpack.c.bf16 %v309, %v308
      %v332 = vunpack.c.l.b16 %v296
      %v333 = vunpack.c.l.b16 %v297
      %v334 = vunpack.c.l.b16 %v298
      %v335 = vunpack.c.l.b16 %v299
      %v336 = vunpack.c.l.b16 %v300
      %v337 = vunpack.c.l.b16 %v301
      %v338 = vpack.c.b16 %v333, %v332
      %v339 = vpack.c.b16 %v335, %v334
      %v340 = vpack.c.b16 %v337, %v336
      %vm341 = vcmask 392192
      %v343 = vsel %vm341, %v338, 0
      %v346 = vsel %vm341, %v339, 0
      %v349 = vsel %vm341, %v340, 0
      %351 = vmatprep.subr.bf16.mxu0 0
      %352 = vmatpush1.bf16.msra.mxu0 %v323
      %353 = vmatprep.subr.bf16.mxu0 0
      %354 = vmatpush1.bf16.msra.mxu0 %v324
      %355 = vmatprep.subr.bf16.mxu0 0
      %356 = vmatpush1.bf16.msra.mxu0 %v325
      %357 = vmatprep.subr.bf16.mxu0 0
      %358 = vmatpush1.bf16.msra.mxu0 0
      %359 = vmatprep.subr.bf16.mxu0 0
      %360 = vmatpush1.bf16.msra.mxu0 0
      %361 = vmatprep.subr.bf16.mxu0 0
      %362 = vmatpush1.bf16.msra.mxu0 0
      %363 = vmatprep.subr.bf16.mxu0 0
      %364 = vmatpush1.bf16.msra.mxu0 0
      %365 = vmatprep.subr.bf16.mxu0 0
      %366 = vmatpush1.bf16.msra.mxu0 0
      %367 = vmatprep.subr.bf16.mxu0 0
      %368 = vmatpush1.bf16.msra.mxu0 0
      %369 = vmatprep.subr.bf16.mxu0 0
      %370 = vmatpush1.bf16.msra.mxu0 0
      %371 = vmatprep.subr.bf16.mxu0 0
      %372 = vmatpush1.bf16.msra.mxu0 0
      %373 = vmatprep.subr.bf16.mxu0 0
      %374 = vmatpush1.bf16.msra.mxu0 0
      %375 = vmatprep.subr.bf16.mxu0 0
      %376 = vmatpush1.bf16.msra.mxu0 0
      %377 = vmatprep.subr.bf16.mxu0 0
      %378 = vmatpush1.bf16.msra.mxu0 0
      %379 = vmatprep.subr.bf16.mxu0 0
      %380 = vmatpush1.bf16.msra.mxu0 0
      %381 = vmatprep.subr.bf16.mxu0 0
      %382 = vmatpush1.bf16.msra.mxu0 0
      %383 = vmatprep.mubr.bf16.mxu0 0
      %384 = vmatmul.mubr.bf16.gmra.mrb[0].mxu0 %v343
      %v385 = vpop.f32.mrb[0].mxu0
      %v386 = vadd.f32 0.0, %v385
      %v387 = vpop.f32.mrb[0].mxu0
      %v388 = vpop.f32.mrb[0].mxu0
      %v389 = vadd.f32 0.0, %v388
      %v390 = vpop.f32.mrb[0].mxu0
      %391 = vmatprep.mubr.bf16.mxu0 0
      %392 = vmatmul.mubr.bf16.gmra.mrb[0].mxu0 %v346
      %v393 = vpop.f32.mrb[0].mxu0
      %v394 = vadd.f32 0.0, %v393
      %v395 = vpop.f32.mrb[0].mxu0
      %v396 = vpop.f32.mrb[0].mxu0
      %v397 = vadd.f32 0.0, %v396
      %v398 = vpop.f32.mrb[0].mxu0
      %399 = vmatprep.mubr.bf16.mxu0 0
      %400 = vmatmul.mubr.bf16.gmra.mrb[0].mxu0 %v349
      %v401 = vpop.f32.mrb[0].mxu0
      %v402 = vadd.f32 0.0, %v401
      %v403 = vpop.f32.mrb[0].mxu0
      %v404 = vpop.f32.mrb[0].mxu0
      %v405 = vadd.f32 0.0, %v404
      %v406 = vpop.f32.mrb[0].mxu0
      %407 = vdwg.mxu0
      %v408 = vpack.c.bf16 %v389, %v386
      %v409 = vpack.c.bf16 %v397, %v394
      %v410 = vpack.c.bf16 %v405, %v402
      %411 = vmatprep.subr.bf16.mxu0 0
      %412 = vmatpush1.bf16.msra.mxu0 %v408
      %413 = vmatprep.subr.bf16.mxu0 0
      %414 = vmatpush1.bf16.msra.mxu0 %v409
      %415 = vmatprep.subr.bf16.mxu0 0
      %416 = vmatpush1.bf16.msra.mxu0 %v410
      %417 = vmatprep.subr.bf16.mxu0 0
      %418 = vmatpush1.bf16.msra.mxu0 0
      %419 = vmatprep.subr.bf16.mxu0 0
      %420 = vmatpush1.bf16.msra.mxu0 0
      %421 = vmatprep.subr.bf16.mxu0 0
      %422 = vmatpush1.bf16.msra.mxu0 0
      %423 = vmatprep.subr.bf16.mxu0 0
      %424 = vmatpush1.bf16.msra.mxu0 0
      %425 = vmatprep.subr.bf16.mxu0 0
      %426 = vmatpush1.bf16.msra.mxu0 0
      %427 = vmatprep.subr.bf16.mxu0 0
      %428 = vmatpush1.bf16.msra.mxu0 0
      %429 = vmatprep.subr.bf16.mxu0 0
      %430 = vmatpush1.bf16.msra.mxu0 0
      %431 = vmatprep.subr.bf16.mxu0 0
      %432 = vmatpush1.bf16.msra.mxu0 0
      %433 = vmatprep.subr.bf16.mxu0 0
      %434 = vmatpush1.bf16.msra.mxu0 0
      %435 = vmatprep.subr.bf16.mxu0 0
      %436 = vmatpush1.bf16.msra.mxu0 0
      %437 = vmatprep.subr.bf16.mxu0 0
      %438 = vmatpush1.bf16.msra.mxu0 0
      %439 = vmatprep.subr.bf16.mxu0 0
      %440 = vmatpush1.bf16.msra.mxu0 0
      %441 = vmatprep.subr.bf16.mxu0 0
      %442 = vmatpush1.bf16.msra.mxu0 0
      %443 = vmatprep.mubr.bf16.mxu0 0
      %444 = vmatmul.mubr.bf16.gmra.mrb[0].mxu0 %v343
      %v445 = vpop.f32.mrb[0].mxu0
      %v446 = vadd.f32 0.0, %v445
      %v447 = vpop.f32.mrb[0].mxu0
      %v448 = vpop.f32.mrb[0].mxu0
      %v449 = vadd.f32 0.0, %v448
      %v450 = vpop.f32.mrb[0].mxu0
      %451 = vmatprep.mubr.bf16.mxu0 0
      %452 = vmatmul.mubr.bf16.gmra.mrb[0].mxu0 %v346
      %v453 = vpop.f32.mrb[0].mxu0
      %v454 = vadd.f32 0.0, %v453
      %v455 = vpop.f32.mrb[0].mxu0
      %v456 = vpop.f32.mrb[0].mxu0
      %v457 = vadd.f32 0.0, %v456
      %v458 = vpop.f32.mrb[0].mxu0
      %459 = vmatprep.mubr.bf16.mxu0 0
      %460 = vmatmul.mubr.bf16.gmra.mrb[0].mxu0 %v349
      %v461 = vpop.f32.mrb[0].mxu0
      %v462 = vadd.f32 0.0, %v461
      %v463 = vpop.f32.mrb[0].mxu0
      %v464 = vpop.f32.mrb[0].mxu0
      %v465 = vadd.f32 0.0, %v464
      %v466 = vpop.f32.mrb[0].mxu0
      %467 = vdwg.mxu0
      %v468 = vmul.f32 %v446, 2.0
      %v469 = vmul.f32 %v449, 2.0
      %v470 = vmul.f32 %v454, 2.0
      %v471 = vmul.f32 %v457, 2.0
      %v472 = vmul.f32 %v462, 2.0
      %v473 = vmul.f32 %v465, 2.0
      %v474 = vsub.f32 %v468, %v304
      %v475 = vsub.f32 %v469, %v305
      %v476 = vsub.f32 %v470, %v306
      %v477 = vsub.f32 %v471, %v307
      %v478 = vsub.f32 %v472, %v308
      %v479 = vsub.f32 %v473, %v309
      %486 = vrot.lane.b32.xlu0 %v386, 32
      %v487 = vpop.permute.xlu0 %486
      %488 = vrot.lane.b32.xlu0 %v389, 32
      %v489 = vpop.permute.xlu0 %488
      %490 = vrot.lane.b32.xlu0 %v394, 32
      %v491 = vpop.permute.xlu0 %490
      %492 = vrot.lane.b32.xlu0 %v397, 32
      %v493 = vpop.permute.xlu0 %492
      %494 = vrot.lane.b32.xlu0 %v402, 32
      %v495 = vpop.permute.xlu0 %494
      %496 = vrot.lane.b32.xlu0 %v405, 32
      %v497 = vpop.permute.xlu0 %496
      %510 = vrot.lane.b32.xlu0 %v474, 64
      %v511 = vpop.permute.xlu0 %510
      %512 = vrot.lane.b32.xlu0 %v475, 64
      %v513 = vpop.permute.xlu0 %512
      %514 = vrot.lane.b32.xlu0 %v476, 64
      %v515 = vpop.permute.xlu0 %514
      %516 = vrot.lane.b32.xlu0 %v477, 64
      %v517 = vpop.permute.xlu0 %516
      %518 = vrot.lane.b32.xlu0 %v478, 64
      %v519 = vpop.permute.xlu0 %518
      %520 = vrot.lane.b32.xlu0 %v479, 64
      %v521 = vpop.permute.xlu0 %520
      %vm528 = vcmask 261120
      %v529 = vsel %vm528, %v304, %v487
      %v530 = vsel %vm528, %v305, %v489
      %v531 = vsel %vm528, %v306, %v491
      %v532 = vsel %vm528, %v307, %v493
      %v533 = vsel %vm528, %v308, %v495
      %v534 = vsel %vm528, %v309, %v497
      %vm535 = vcmask 523264
      %v536 = vsel %vm535, %v529, %v511
      %v537 = vsel %vm535, %v530, %v513
      %v538 = vsel %vm535, %v531, %v515
      %v539 = vsel %vm535, %v532, %v517
      %v540 = vsel %vm535, %v533, %v519
      %v541 = vsel %vm535, %v534, %v521
      %v543 = vlaneseq
      %v544 = vshrl.u32 %v543, 7
      %v545 = vsub.s32 0, %v544
      %v546 = vrot.slane %v322, %v545
      %vm548 = vcmask 785408
      %v550 = vsel %vm548, %v536, 0
      %v553 = vsel %vm548, %v537, 0
      %v556 = vsel %vm548, %v538, 0
      %v559 = vsel %vm548, %v539, 0
      %v562 = vsel %vm548, %v540, 0
      %v565 = vsel %vm548, %v541, 0
      %567 = vmatprep.subr.mxu0 0.0
      %568 = vmatpush1.msra.mxu0 %v310
      %569 = vmatprep.subr.mxu0 0.0
      %570 = vmatpush1.msra.mxu0 %v311
      %571 = vmatprep.subr.mxu0 0.0
      %572 = vmatpush1.msra.mxu0 %v312
      %573 = vmatprep.subr.mxu0 0.0
      %574 = vmatpush1.msra.mxu0 %v313
      %575 = vmatprep.subr.mxu0 0.0
      %576 = vmatpush1.msra.mxu0 %v314
      %577 = vmatprep.subr.mxu0 0.0
      %578 = vmatpush1.msra.mxu0 %v315
      %579 = vmatprep.subr.mxu0 0.0
      %580 = vmatpush1.msra.mxu0 %v316
      %581 = vmatprep.subr.mxu0 0.0
      %582 = vmatpush1.msra.mxu0 %v317
      %583 = vmatprep.subr.mxu0 0.0
      %584 = vmatpush1.msra.mxu0 %v318
      %585 = vmatprep.subr.mxu0 0.0
      %586 = vmatpush1.msra.mxu0 %v319
      %587 = vmatprep.subr.mxu0 0.0
      %588 = vmatpush1.msra.mxu0 %v320
      %589 = vmatprep.subr.mxu0 0.0
      %590 = vmatpush1.msra.mxu0 %v321
      %591 = vmatprep.subr.mxu0 0.0
      %592 = vmatpush1.msra.mxu0 0.0
      %593 = vmatprep.subr.mxu0 0.0
      %594 = vmatpush1.msra.mxu0 0.0
      %595 = vmatprep.subr.mxu0 0.0
      %596 = vmatpush1.msra.mxu0 0.0
      %597 = vmatprep.subr.mxu0 0.0
      %598 = vmatpush1.msra.mxu0 0.0
      %599 = vmatprep.subr.mxu0 0.0
      %600 = vmatpush1.msra.mxu0 0.0
      %601 = vmatprep.subr.mxu0 0.0
      %602 = vmatpush1.msra.mxu0 0.0
      %603 = vmatprep.subr.mxu0 0.0
      %604 = vmatpush1.msra.mxu0 0.0
      %605 = vmatprep.subr.mxu0 0.0
      %606 = vmatpush1.msra.mxu0 0.0
      %607 = vmatprep.subr.mxu0 0.0
      %608 = vmatpush1.msra.mxu0 0.0
      %609 = vmatprep.subr.mxu0 0.0
      %610 = vmatpush1.msra.mxu0 0.0
      %611 = vmatprep.subr.mxu0 0.0
      %612 = vmatpush1.msra.mxu0 0.0
      %613 = vmatprep.subr.mxu0 0.0
      %614 = vmatpush1.msra.mxu0 0.0
      %615 = vmatprep.subr.mxu0 0.0
      %616 = vmatpush1.msra.mxu0 0.0
      %617 = vmatprep.subr.mxu0 0.0
      %618 = vmatpush1.msra.mxu0 0.0
      %619 = vmatprep.subr.mxu0 0.0
      %620 = vmatpush1.msra.mxu0 0.0
      %621 = vmatprep.subr.mxu0 0.0
      %622 = vmatpush1.msra.mxu0 0.0
      %623 = vmatprep.subr.mxu0 0.0
      %624 = vmatpush1.msra.mxu0 0.0
      %625 = vmatprep.subr.mxu0 0.0
      %626 = vmatpush1.msra.mxu0 0.0
      %627 = vmatprep.subr.mxu0 0.0
      %628 = vmatpush1.msra.mxu0 0.0
      %629 = vmatprep.subr.mxu0 0.0
      %630 = vmatpush1.msra.mxu0 0.0
      %631 = vmatprep.mubr.f32.mxu0 0.0
      %632 = vmatmul.mubr.f32.gmra.mrb[0].mxu0 %v550
      %v633 = vpop.f32.mrb[0].mxu0
      %v634 = vadd.f32 %v546, %v633
      %v635 = vpop.f32.mrb[0].mxu0
      %636 = vmatprep.mubr.f32.mxu0 0.0
      %637 = vmatmul.mubr.f32.gmra.mrb[0].mxu0 %v553
      %v638 = vpop.f32.mrb[0].mxu0
      %v639 = vadd.f32 %v546, %v638
      %v640 = vpop.f32.mrb[0].mxu0
      %641 = vmatprep.mubr.f32.mxu0 0.0
      %642 = vmatmul.mubr.f32.gmra.mrb[0].mxu0 %v556
      %v643 = vpop.f32.mrb[0].mxu0
      %v644 = vadd.f32 %v546, %v643
      %v645 = vpop.f32.mrb[0].mxu0
      %646 = vmatprep.mubr.f32.mxu0 0.0
      %647 = vmatmul.mubr.f32.gmra.mrb[0].mxu0 %v559
      %v648 = vpop.f32.mrb[0].mxu0
      %v649 = vadd.f32 %v546, %v648
      %v650 = vpop.f32.mrb[0].mxu0
      %651 = vmatprep.mubr.f32.mxu0 0.0
      %652 = vmatmul.mubr.f32.gmra.mrb[0].mxu0 %v562
      %v653 = vpop.f32.mrb[0].mxu0
      %v654 = vadd.f32 %v546, %v653
      %v655 = vpop.f32.mrb[0].mxu0
      %656 = vmatprep.mubr.f32.mxu0 0.0
      %657 = vmatmul.mubr.f32.gmra.mrb[0].mxu0 %v565
      %v658 = vpop.f32.mrb[0].mxu0
      %v659 = vadd.f32 %v546, %v658
      %v660 = vpop.f32.mrb[0].mxu0
      %661 = vdwg.mxu0
      %662 = vst.msk [vmem:[%s303] sm:$0xff] %vm528, %v634
      %663 = vst.msk [vmem:[%s303 + $0x8] sm:$0xff] %vm528, %v639
      %664 = vst.msk [vmem:[%s303 + $0x10] sm:$0xff] %vm528, %v644
      %665 = vst.msk [vmem:[%s303 + $0x18] sm:$0xff] %vm528, %v649
      %666 = vst.msk [vmem:[%s303 + $0x20] sm:$0xff] %vm528, %v654
      %667 = vst.msk [vmem:[%s303 + $0x28] sm:$0xff] %vm528, %v659
      %p668 = scmp.eq.s32.totalorder %s21, 1
      // Predicated region
      $region45: #{hno_forward.3} parent=39 // pred_check
        %p669 = pneg %p668
      $region46: #{hno_forward.3} parent=39 // pred_check_branch
        %671 = sbr.rel (%p669) target = $region48
      $region47: #{hno_forward.3} parent=39 // pred_region
        %v672 = vld [vmem:[#allocation2] sm:$0xff]
        %v673 = vld [vmem:[#allocation2 + $0x8] sm:$0xff]
        %v674 = vld [vmem:[#allocation2 + $0x10] sm:$0xff]
        %v675 = vld [vmem:[#allocation2 + $0x18] sm:$0xff]
        %v676 = vld [vmem:[#allocation2 + $0x20] sm:$0xff]
        %v677 = vld [vmem:[#allocation2 + $0x28] sm:$0xff]
        %v678 = vld [vmem:[#allocation2 + $0x30] sm:$0xff]
        %v679 = vld [vmem:[#allocation2 + $0x38] sm:$0xff]
        %v680 = vld [vmem:[#allocation2 + $0x40] sm:$0xff]
        %v681 = vld [vmem:[#allocation2 + $0x48] sm:$0xff]
        %v682 = vld [vmem:[#allocation2 + $0x50] sm:$0xff]
        %v683 = vld [vmem:[#allocation2 + $0x58] sm:$0xff]
        %v684 = vmul.f32 %v672, %v672
        %v685 = vmul.f32 %v673, %v673
        %v686 = vmul.f32 %v674, %v674
        %v687 = vmul.f32 %v675, %v675
        %v688 = vmul.f32 %v676, %v676
        %v689 = vmul.f32 %v677, %v677
        %v690 = vmul.f32 %v678, %v678
        %v691 = vmul.f32 %v679, %v679
        %v692 = vmul.f32 %v680, %v680
        %v693 = vmul.f32 %v681, %v681
        %v694 = vmul.f32 %v682, %v682
        %v695 = vmul.f32 %v683, %v683
        %v696 = vsel %vm528, %v672, 0.0
        %v697 = vsel %vm528, %v673, 0.0
        %v698 = vadd.f32 %v696, %v697
        %v699 = vsel %vm528, %v674, 0.0
        %v700 = vadd.f32 %v698, %v699
        %v701 = vsel %vm528, %v675, 0.0
        %v702 = vadd.f32 %v700, %v701
        %v703 = vsel %vm528, %v676, 0.0
        %v704 = vadd.f32 %v702, %v703
        %v705 = vsel %vm528, %v677, 0.0
        %v706 = vadd.f32 %v704, %v705
        %v707 = vrot.slane %v706, 4
        %v708 = vadd.f32 %v706, %v707
        %v709 = vrot.slane %v708, 2
        %v710 = vadd.f32 %v708, %v709
        %v711 = vrot.slane %v710, 1
        %v712 = vadd.f32 %v710, %v711
        %v713 = vsel %vm528, %v678, 0.0
        %v714 = vsel %vm528, %v679, 0.0
        %v715 = vadd.f32 %v713, %v714
        %v716 = vsel %vm528, %v680, 0.0
        %v717 = vadd.f32 %v715, %v716
        %v718 = vsel %vm528, %v681, 0.0
        %v719 = vadd.f32 %v717, %v718
        %v720 = vsel %vm528, %v682, 0.0
        %v721 = vadd.f32 %v719, %v720
        %v722 = vsel %vm528, %v683, 0.0
        %v723 = vadd.f32 %v721, %v722
        %v724 = vrot.slane %v723, 4
        %v725 = vadd.f32 %v723, %v724
        %v726 = vrot.slane %v725, 2
        %v727 = vadd.f32 %v725, %v726
        %v728 = vrot.slane %v727, 1
        %v729 = vadd.f32 %v727, %v728
        %v730 = vsel %vm528, %v684, 0.0
        %v731 = vsel %vm528, %v685, 0.0
        %v732 = vadd.f32 %v730, %v731
        %v733 = vsel %vm528, %v686, 0.0
        %v734 = vadd.f32 %v732, %v733
        %v735 = vsel %vm528, %v687, 0.0
        %v736 = vadd.f32 %v734, %v735
        %v737 = vsel %vm528, %v688, 0.0
        %v738 = vadd.f32 %v736, %v737
        %v739 = vsel %vm528, %v689, 0.0
        %v740 = vadd.f32 %v738, %v739
        %v741 = vrot.slane %v740, 4
        %v742 = vadd.f32 %v740, %v741
        %v743 = vrot.slane %v742, 2
        %v744 = vadd.f32 %v742, %v743
        %v745 = vrot.slane %v744, 1
        %v746 = vadd.f32 %v744, %v745
        %v747 = vsel %vm528, %v690, 0.0
        %v748 = vsel %vm528, %v691, 0.0
        %v749 = vadd.f32 %v747, %v748
        %v750 = vsel %vm528, %v692, 0.0
        %v751 = vadd.f32 %v749, %v750
        %v752 = vsel %vm528, %v693, 0.0
        %v753 = vadd.f32 %v751, %v752
        %v754 = vsel %vm528, %v694, 0.0
        %v755 = vadd.f32 %v753, %v754
        %v756 = vsel %vm528, %v695, 0.0
        %v757 = vadd.f32 %v755, %v756
        %v758 = vrot.slane %v757, 4
        %v759 = vadd.f32 %v757, %v758
        %v760 = vrot.slane %v759, 2
        %v761 = vadd.f32 %v759, %v760
        %v762 = vrot.slane %v761, 1
        %v763 = vadd.f32 %v761, %v762
        %v764 = vsel %vm528, %v712, 0.0
        %v765 = vsel %vm528, %v729, 0.0
        %v766 = vadd.f32 %v764, %v765
        %v767 = vsel %vm528, %v746, 0.0
        %v768 = vsel %vm528, %v763, 0.0
        %v769 = vadd.f32 %v767, %v768
        %v770 = vmul.f32 %v766, 0.010416667
        %v771 = vmul.f32 %v769, 0.010416667
        %v772 = vmul.f32 %v770, %v770
        %v773 = vsub.f32 %v771, %v772
        %v774 = vmax.f32 %v773, 0.0
        %v775 = vsub.f32 %v672, %v770
        %v776 = vsub.f32 %v673, %v770
        %v777 = vsub.f32 %v674, %v770
        %v778 = vsub.f32 %v675, %v770
        %v779 = vsub.f32 %v676, %v770
        %v780 = vsub.f32 %v677, %v770
        %v781 = vsub.f32 %v678, %v770
        %v782 = vsub.f32 %v679, %v770
        %v783 = vsub.f32 %v680, %v770
        %v784 = vsub.f32 %v681, %v770
        %v785 = vsub.f32 %v682, %v770
        %v786 = vsub.f32 %v683, %v770
        %v787 = vadd.f32 %v774, 1e-05
        %v788 = vrsqrt.pop %v787
        %v789 = vmul.f32 %v775, %v788
        %v790 = vmul.f32 %v776, %v788
        %v791 = vmul.f32 %v777, %v788
        %v792 = vmul.f32 %v778, %v788
        %v793 = vmul.f32 %v779, %v788
        %v794 = vmul.f32 %v780, %v788
        %v795 = vmul.f32 %v781, %v788
        %v796 = vmul.f32 %v782, %v788
        %v797 = vmul.f32 %v783, %v788
        %v798 = vmul.f32 %v784, %v788
        %v799 = vmul.f32 %v785, %v788
        %v800 = vmul.f32 %v786, %v788
        %v801 = vtanh.pop %v789
        %v802 = vtanh.pop %v790
        %v803 = vtanh.pop %v791
        %v804 = vtanh.pop %v792
        %v805 = vtanh.pop %v793
        %v806 = vtanh.pop %v794
        %v807 = vtanh.pop %v795
        %v808 = vtanh.pop %v796
        %v809 = vtanh.pop %v797
        %v810 = vtanh.pop %v798
        %v811 = vtanh.pop %v799
        %v812 = vtanh.pop %v800
        %v813 = vmul.f32 %v801, %v801
        %v814 = vmul.f32 %v802, %v802
        %v815 = vmul.f32 %v803, %v803
        %v816 = vmul.f32 %v804, %v804
        %v817 = vmul.f32 %v805, %v805
        %v818 = vmul.f32 %v806, %v806
        %v819 = vmul.f32 %v807, %v807
        %v820 = vmul.f32 %v808, %v808
        %v821 = vmul.f32 %v809, %v809
        %v822 = vmul.f32 %v810, %v810
        %v823 = vmul.f32 %v811, %v811
        %v824 = vmul.f32 %v812, %v812
        %v825 = vsel %vm528, %v801, 0.0
        %v826 = vsel %vm528, %v802, 0.0
        %v827 = vadd.f32 %v825, %v826
        %v828 = vsel %vm528, %v803, 0.0
        %v829 = vadd.f32 %v827, %v828
        %v830 = vsel %vm528, %v804, 0.0
        %v831 = vadd.f32 %v829, %v830
        %v832 = vsel %vm528, %v805, 0.0
        %v833 = vadd.f32 %v831, %v832
        %v834 = vsel %vm528, %v806, 0.0
        %v835 = vadd.f32 %v833, %v834
        %v836 = vrot.slane %v835, 4
        %v837 = vadd.f32 %v835, %v836
        %v838 = vrot.slane %v837, 2
        %v839 = vadd.f32 %v837, %v838
        %v840 = vrot.slane %v839, 1
        %v841 = vadd.f32 %v839, %v840
        %v842 = vsel %vm528, %v807, 0.0
        %v843 = vsel %vm528, %v808, 0.0
        %v844 = vadd.f32 %v842, %v843
        %v845 = vsel %vm528, %v809, 0.0
        %v846 = vadd.f32 %v844, %v845
        %v847 = vsel %vm528, %v810, 0.0
        %v848 = vadd.f32 %v846, %v847
        %v849 = vsel %vm528, %v811, 0.0
        %v850 = vadd.f32 %v848, %v849
        %v851 = vsel %vm528, %v812, 0.0
        %v852 = vadd.f32 %v850, %v851
        %v853 = vrot.slane %v852, 4
        %v854 = vadd.f32 %v852, %v853
        %v855 = vrot.slane %v854, 2
        %v856 = vadd.f32 %v854, %v855
        %v857 = vrot.slane %v856, 1
        %v858 = vadd.f32 %v856, %v857
        %v859 = vsel %vm528, %v813, 0.0
        %v860 = vsel %vm528, %v814, 0.0
        %v861 = vadd.f32 %v859, %v860
        %v862 = vsel %vm528, %v815, 0.0
        %v863 = vadd.f32 %v861, %v862
        %v864 = vsel %vm528, %v816, 0.0
        %v865 = vadd.f32 %v863, %v864
        %v866 = vsel %vm528, %v817, 0.0
        %v867 = vadd.f32 %v865, %v866
        %v868 = vsel %vm528, %v818, 0.0
        %v869 = vadd.f32 %v867, %v868
        %v870 = vrot.slane %v869, 4
        %v871 = vadd.f32 %v869, %v870
        %v872 = vrot.slane %v871, 2
        %v873 = vadd.f32 %v871, %v872
        %v874 = vrot.slane %v873, 1
        %v875 = vadd.f32 %v873, %v874
        %v876 = vsel %vm528, %v819, 0.0
        %v877 = vsel %vm528, %v820, 0.0
        %v878 = vadd.f32 %v876, %v877
        %v879 = vsel %vm528, %v821, 0.0
        %v880 = vadd.f32 %v878, %v879
        %v881 = vsel %vm528, %v822, 0.0
        %v882 = vadd.f32 %v880, %v881
        %v883 = vsel %vm528, %v823, 0.0
        %v884 = vadd.f32 %v882, %v883
        %v885 = vsel %vm528, %v824, 0.0
        %v886 = vadd.f32 %v884, %v885
        %v887 = vrot.slane %v886, 4
        %v888 = vadd.f32 %v886, %v887
        %v889 = vrot.slane %v888, 2
        %v890 = vadd.f32 %v888, %v889
        %v891 = vrot.slane %v890, 1
        %v892 = vadd.f32 %v890, %v891
        %v893 = vsel %vm528, %v841, 0.0
        %v894 = vsel %vm528, %v858, 0.0
        %v895 = vadd.f32 %v893, %v894
        %v896 = vsel %vm528, %v875, 0.0
        %v897 = vsel %vm528, %v892, 0.0
        %v898 = vadd.f32 %v896, %v897
        %v899 = vmul.f32 %v895, 0.010416667
        %v900 = vmul.f32 %v898, 0.010416667
        %v901 = vmul.f32 %v899, %v899
        %v902 = vsub.f32 %v900, %v901
        %v903 = vmax.f32 %v902, 0.0
        %v904 = vsub.f32 %v801, %v899
        %v905 = vsub.f32 %v802, %v899
        %v906 = vsub.f32 %v803, %v899
        %v907 = vsub.f32 %v804, %v899
        %v908 = vsub.f32 %v805, %v899
        %v909 = vsub.f32 %v806, %v899
        %v910 = vsub.f32 %v807, %v899
        %v911 = vsub.f32 %v808, %v899
        %v912 = vsub.f32 %v809, %v899
        %v913 = vsub.f32 %v810, %v899
        %v914 = vsub.f32 %v811, %v899
        %v915 = vsub.f32 %v812, %v899
        %v916 = vadd.f32 %v903, 1e-05
        %v917 = vrsqrt.pop %v916
        %v918 = vmul.f32 %v904, %v917
        %v919 = vmul.f32 %v905, %v917
        %v920 = vmul.f32 %v906, %v917
        %v921 = vmul.f32 %v907, %v917
        %v922 = vmul.f32 %v908, %v917
        %v923 = vmul.f32 %v909, %v917
        %v924 = vmul.f32 %v910, %v917
        %v925 = vmul.f32 %v911, %v917
        %v926 = vmul.f32 %v912, %v917
        %v927 = vmul.f32 %v913, %v917
        %v928 = vmul.f32 %v914, %v917
        %v929 = vmul.f32 %v915, %v917
        %930 = vst.msk [vmem:[#allocation2] sm:$0xff] %vm528, %v918
        %931 = vst.msk [vmem:[#allocation2 + $0x8] sm:$0xff] %vm528, %v919
        %932 = vst.msk [vmem:[#allocation2 + $0x10] sm:$0xff] %vm528, %v920
        %933 = vst.msk [vmem:[#allocation2 + $0x18] sm:$0xff] %vm528, %v921
        %934 = vst.msk [vmem:[#allocation2 + $0x20] sm:$0xff] %vm528, %v922
        %935 = vst.msk [vmem:[#allocation2 + $0x28] sm:$0xff] %vm528, %v923
        %936 = vst.msk [vmem:[#allocation2 + $0x30] sm:$0xff] %vm528, %v924
        %937 = vst.msk [vmem:[#allocation2 + $0x38] sm:$0xff] %vm528, %v925
        %938 = vst.msk [vmem:[#allocation2 + $0x40] sm:$0xff] %vm528, %v926
        %939 = vst.msk [vmem:[#allocation2 + $0x48] sm:$0xff] %vm528, %v927
        %940 = vst.msk [vmem:[#allocation2 + $0x50] sm:$0xff] %vm528, %v928
        %941 = vst.msk [vmem:[#allocation2 + $0x58] sm:$0xff] %vm528, %v929
      $region48: #{hno_forward.3} parent=39 // pred_fallthru
        _
      %p942 = scmp.eq.s32.totalorder %s20, 1
      %p943 = pnand %p668, %p942
      %p944 = pneg %p943
      // Predicated region
      $region49: #{hno_forward.3} parent=39 // pred_check
        _
      $region50: #{hno_forward.3} parent=39 // pred_check_branch
        %946 = sbr.rel (%p943) target = $region52
      $region51: #{hno_forward.3} parent=39 // pred_region
        %v947 = vld [vmem:[#allocation2] sm:$0xff]
        %v948 = vld [vmem:[#allocation2 + $0x8] sm:$0xff]
        %v949 = vld [vmem:[#allocation2 + $0x10] sm:$0xff]
        %v950 = vld [vmem:[#allocation2 + $0x18] sm:$0xff]
        %v951 = vld [vmem:[#allocation2 + $0x20] sm:$0xff]
        %v952 = vld [vmem:[#allocation2 + $0x28] sm:$0xff]
        %v953 = vld [vmem:[#allocation2 + $0x30] sm:$0xff]
        %v954 = vld [vmem:[#allocation2 + $0x38] sm:$0xff]
        %v955 = vld [vmem:[#allocation2 + $0x40] sm:$0xff]
        %v956 = vld [vmem:[#allocation2 + $0x48] sm:$0xff]
        %v957 = vld [vmem:[#allocation2 + $0x50] sm:$0xff]
        %v958 = vld [vmem:[#allocation2 + $0x58] sm:$0xff]
        %v959 = vld [vmem:[%s4] sm:$0xf]
        %v960 = vld [vmem:[%s4 + $0x4] sm:$0xf]
        %v961 = vpack.c.bf16 %v948, %v947
        %v962 = vpack.c.bf16 %v950, %v949
        %v963 = vpack.c.bf16 %v952, %v951
        %v964 = vpack.c.bf16 %v954, %v953
        %v965 = vpack.c.bf16 %v956, %v955
        %v966 = vpack.c.bf16 %v958, %v957
        %v968 = vsel %vm341, %v959, 0
        %970 = vmatprep.subr.bf16.mxu0 0
        %971 = vmatpush1.bf16.msra.mxu0 %v961
        %972 = vmatprep.subr.bf16.mxu0 0
        %973 = vmatpush1.bf16.msra.mxu0 %v962
        %974 = vmatprep.subr.bf16.mxu0 0
        %975 = vmatpush1.bf16.msra.mxu0 %v963
        %976 = vmatprep.subr.bf16.mxu0 0
        %977 = vmatpush1.bf16.msra.mxu0 0
        %978 = vmatprep.subr.bf16.mxu0 0
        %979 = vmatpush1.bf16.msra.mxu0 0
        %980 = vmatprep.subr.bf16.mxu0 0
        %981 = vmatpush1.bf16.msra.mxu0 0
        %982 = vmatprep.subr.bf16.mxu0 0
        %983 = vmatpush1.bf16.msra.mxu0 0
        %984 = vmatprep.subr.bf16.mxu0 0
        %985 = vmatpush1.bf16.msra.mxu0 0
        %986 = vmatprep.subr.bf16.mxu0 0
        %987 = vmatpush1.bf16.msra.mxu0 0
        %988 = vmatprep.subr.bf16.mxu0 0
        %989 = vmatpush1.bf16.msra.mxu0 0
        %990 = vmatprep.subr.bf16.mxu0 0
        %991 = vmatpush1.bf16.msra.mxu0 0
        %992 = vmatprep.subr.bf16.mxu0 0
        %993 = vmatpush1.bf16.msra.mxu0 0
        %994 = vmatprep.subr.bf16.mxu0 0
        %995 = vmatpush1.bf16.msra.mxu0 0
        %996 = vmatprep.subr.bf16.mxu0 0
        %997 = vmatpush1.bf16.msra.mxu0 0
        %998 = vmatprep.subr.bf16.mxu0 0
        %999 = vmatpush1.bf16.msra.mxu0 0
        %1000 = vmatprep.subr.bf16.mxu0 0
        %1001 = vmatpush1.bf16.msra.mxu0 0
        %1002 = vmatprep.mubr.bf16.mxu0 0
        %1003 = vmatmul.mubr.bf16.gmra.mrb[0].mxu0 %v968
        %v1004 = vpop.f32.mrb[0].mxu0
        %v1005 = vadd.f32 0.0, %v1004
        %v1006 = vpop.f32.mrb[0].mxu0
        %v1007 = vpop.f32.mrb[0].mxu0
        %v1008 = vpop.f32.mrb[0].mxu0
        %1009 = vdwg.mxu0
        %v1011 = vsel %vm341, %v960, 0
        %1013 = vmatprep.subr.bf16.mxu0 0
        %1014 = vmatpush1.bf16.msra.mxu0 %v964
        %1015 = vmatprep.subr.bf16.mxu0 0
        %1016 = vmatpush1.bf16.msra.mxu0 %v965
        %1017 = vmatprep.subr.bf16.mxu0 0
        %1018 = vmatpush1.bf16.msra.mxu0 %v966
        %1019 = vmatprep.subr.bf16.mxu0 0
        %1020 = vmatpush1.bf16.msra.mxu0 0
        %1021 = vmatprep.subr.bf16.mxu0 0
        %1022 = vmatpush1.bf16.msra.mxu0 0
        %1023 = vmatprep.subr.bf16.mxu0 0
        %1024 = vmatpush1.bf16.msra.mxu0 0
        %1025 = vmatprep.subr.bf16.mxu0 0
        %1026 = vmatpush1.bf16.msra.mxu0 0
        %1027 = vmatprep.subr.bf16.mxu0 0
        %1028 = vmatpush1.bf16.msra.mxu0 0
        %1029 = vmatprep.subr.bf16.mxu0 0
        %1030 = vmatpush1.bf16.msra.mxu0 0
        %1031 = vmatprep.subr.bf16.mxu0 0
        %1032 = vmatpush1.bf16.msra.mxu0 0
        %1033 = vmatprep.subr.bf16.mxu0 0
        %1034 = vmatpush1.bf16.msra.mxu0 0
        %1035 = vmatprep.subr.bf16.mxu0 0
        %1036 = vmatpush1.bf16.msra.mxu0 0
        %1037 = vmatprep.subr.bf16.mxu0 0
        %1038 = vmatpush1.bf16.msra.mxu0 0
        %1039 = vmatprep.subr.bf16.mxu0 0
        %1040 = vmatpush1.bf16.msra.mxu0 0
        %1041 = vmatprep.subr.bf16.mxu0 0
        %1042 = vmatpush1.bf16.msra.mxu0 0
        %1043 = vmatprep.subr.bf16.mxu0 0
        %1044 = vmatpush1.bf16.msra.mxu0 0
        %1045 = vmatprep.mubr.bf16.mxu0 0
        %1046 = vmatmul.mubr.bf16.gmra.mrb[0].mxu0 %v1011
        %v1047 = vpop.f32.mrb[0].mxu0
        %v1048 = vadd.f32 0.0, %v1047
        %v1049 = vpop.f32.mrb[0].mxu0
        %v1050 = vpop.f32.mrb[0].mxu0
        %v1051 = vpop.f32.mrb[0].mxu0
        %1052 = vdwg.mxu0
        %1053 = vst.msk [vmem:[%s5] sm:$0xff] %vm528, %v1005
        %1054 = vst.msk [vmem:[%s5 + $0x8] sm:$0xff] %vm528, %v1048
      $region52: #{hno_forward.3} parent=39 // pred_fallthru
        _
      // Predicated region
      $region53: #{hno_forward.3} parent=39 // pred_check
        %p1055 = pneg %p166
      $region54: #{hno_forward.3} parent=39 // pred_check_branch
        %1057 = sbr.rel (%p1055) target = $region56
      $region55: #{hno_forward.3} parent=39 // pred_region
        _
      $region56: #{hno_forward.3} parent=39 // pred_fallthru
        _
      // Predicated region
      $region57: #{hno_forward.3} parent=39 // pred_check
        %p1058 = pneg %p166
      $region58: #{hno_forward.3} parent=39 // pred_check_branch
        %1060 = sbr.rel (%p1058) target = $region60
      $region59: #{hno_forward.3} parent=39 // pred_region
        _
      $region60: #{hno_forward.3} parent=39 // pred_fallthru
        _
    $region40: #{hno_forward.3} parent=5 // pred_fallthru
      _
    %p1061 = scmp.le.s32.totalorder 2, %s11
    // Predicated region
    $region61: #{hno_forward.3} parent=5 // pred_check
      %p1062 = pneg %p1061
    $region62: #{hno_forward.3} parent=5 // pred_check_branch
      %1064 = sbr.rel (%p1062) target = $region64
    $region63: #{hno_forward.3} parent=5 // pred_region
      %s1065 = ssub.s32 %s11, 2
    $region64: #{hno_forward.3} parent=5 // pred_fallthru
      _
  $region6: #{hno_forward.3} parent=0 // loop_footer
    %s15 = sadd.s32 1, %s11
  $region7: #{hno_forward.3} parent=0 // loop_footer_branch
    %10 = sbr.rel target = $region3
  $region8: #{hno_forward.3} parent=0 // loop_exit
    _

// kernel: hno_forward.4
$region0: #{hno_forward.4}
  #allocation0 [shape = 'u32[]', space=smem, size = 0x4, offset = 0x4, fixed_abs, tag = 'smem constant byte address 0x4 - core index']
  #allocation1 [shape = 'u32[144,128]{1,0:T(1,128)}', space=vmem, size = 0x12000, scoped, tag = 'internal scratch']
  %s0 = inlined_call_operand.vmem [shape: bf16[64,64], index: 0, kind: input, shape index: {}]
  %s1 = inlined_call_operand.vmem [shape: f32[64,32], index: 1, kind: input, shape index: {}]
  %s2 = inlined_call_operand.vmem [shape: f32[3,96,32], index: 2, kind: input, shape index: {}]
  %s3 = inlined_call_operand.vmem [shape: f32[3,1,32], index: 3, kind: input, shape index: {}]
  %s4 = inlined_call_operand.vmem [shape: f32[32,32], index: 4, kind: input, shape index: {}]
  %s5 = inlined_call_operand.vmem [shape: f32[1,32], index: 5, kind: input, shape index: {}]
  %s6 = inlined_call_operand.vmem [shape: f32[32,32], index: 6, kind: input, shape index: {}]
  %s7 = inlined_call_operand.vmem [shape: f32[1,32], index: 7, kind: input, shape index: {}]
  %s8 = inlined_call_operand.vmem [shape: f32[32,32], index: 8, kind: input, shape index: {}]
  %s9 = inlined_call_operand.vmem [shape: f32[64,32], index: 9, kind: output, shape index: {}]
  %s10 = sld [smem:[#allocation0]]
  $region77: #{hno_forward.4} parent=0
    _
  %s12 = ssub.s32 1, %s10
  %s13 = scalar_select 0, %s12, %s10
  loop: start=0, step=1, limit=5
  $region2: #{hno_forward.4} parent=0 // loop_pre_header
    _
  $region3: #{hno_forward.4} parent=0 // loop_header
    %s15 = sphi 0, %s19
    %p16 = scmp.ge.s32.totalorder %s15, 5
    %s23 = sphi 0, %s23
    %s25 = sphi 0, %s23
    %s26 = sphi 0, %s25
    %s40 = sphi 0, %s26
    %s44 = sphi 0, %s44
    %s46 = sphi 0, %s44
    %s47 = sphi 0, %s46
    %s61 = sphi 0, %s47
    %s67 = sphi 0, %s69
    %s70 = sphi 0, %s67
    %s71 = sphi 0, %s70
    %s87 = sphi 0, %s71
    %s93 = sphi 0, %s95
    %s96 = sphi 0, %s93
    %s97 = sphi 0, %s96
    %s113 = sphi 0, %s97
    %s117 = sphi 0, %s117
    %s119 = sphi 0, %s117
    %s120 = sphi 0, %s119
    %s134 = sphi 0, %s120
    %s138 = sphi 0, %s138
    %s140 = sphi 0, %s138
    %s141 = sphi 0, %s140
    %s155 = sphi 0, %s141
    %s159 = sphi 0, %s159
    %s161 = sphi 0, %s159
    %s162 = sphi 0, %s161
    %s176 = sphi 0, %s162
    %s180 = sphi 0, %s180
    %s182 = sphi 0, %s180
    %s183 = sphi 0, %s182
    %s197 = sphi 0, %s183
    %s201 = sphi 0, %s201
    %s203 = sphi 0, %s201
    %s204 = sphi 0, %s203
    %s218 = sphi 0, %s204
    %s222 = sphi 0, %s222
    %s224 = sphi 0, %s222
    %s225 = sphi 0, %s224
    %s239 = sphi 0, %s225
  $region4: #{hno_forward.4} parent=0 // loop_header_branch
    %18 = sbr.rel (%p16) target = $region8
  $region5: #{hno_forward.4} parent=0 // loop_body
    %s20 = ssub.s32 %s15, 1
    %s21 = ssub.s32 %s15, 2
    %s22 = sadd.s32 %s15, 1
    %s24 = sadd.s32 %s23, 1
    %p27 = scmp.eq.s32.totalorder %s15, 2
    %p28 = scmp.ne.s32.totalorder %s23, %s25
    %p29 = scmp.eq.s32.totalorder %s15, 0
    %p30 = por %p28, %p29
    %p31 = scmp.ne.s32.totalorder %s23, %s25
    %p32 = scmp.eq.s32.totalorder %s20, 2
    %p33 = por %p31, %p32
    %p34 = scmp.ne.s32.totalorder %s25, %s26
    %p35 = scmp.eq.s32.totalorder %s20, 0
    %p36 = por %p34, %p35
    %p37 = scmp.ne.s32.totalorder %s25, %s26
    %p38 = scmp.eq.s32.totalorder %s21, 2
    %p39 = por %p37, %p38
    %p41 = scmp.ne.s32.totalorder %s26, %s40
    %p42 = scmp.eq.s32.totalorder %s21, 0
    %p43 = por %p41, %p42
    %s45 = sadd.s32 %s44, 1
    %p48 = scmp.eq.s32.totalorder %s15, 2
    %p49 = scmp.ne.s32.totalorder %s44, %s46
    %p50 = scmp.eq.s32.totalorder %s15, 0
    %p51 = por %p49, %p50
    %p52 = scmp.ne.s32.totalorder %s44, %s46
    %p53 = scmp.eq.s32.totalorder %s20, 2
    %p54 = por %p52, %p53
    %p55 = scmp.ne.s32.totalorder %s46, %s47
    %p56 = scmp.eq.s32.totalorder %s20, 0
    %p57 = por %p55, %p56
    %p58 = scmp.ne.s32.totalorder %s46, %s47
    %p59 = scmp.eq.s32.totalorder %s21, 2
    %p60 = por %p58, %p59
    %p62 = scmp.ne.s32.totalorder %s47, %s61
    %p63 = scmp.eq.s32.totalorder %s21, 0
    %p64 = por %p62, %p63
    %s65 = ssub.s32 %s15, %s22
    %p66 = scmp.eq.s32.totalorder %s65, 0
    %s68 = sadd.s32 %s67, 1
    %s69 = scalar_select %p66, %s67, %s68
    %p72 = pneg %p66
    %p73 = scmp.eq.s32.totalorder %s15, 2
    %p74 = por %p72, %p73
    %p75 = scmp.ne.s32.totalorder %s67, %s70
    %p76 = scmp.eq.s32.totalorder %s15, 0
    %p77 = por %p75, %p76
    %p78 = scmp.ne.s32.totalorder %s67, %s70
    %p79 = scmp.eq.s32.totalorder %s20, 2
    %p80 = por %p78, %p79
    %p81 = scmp.ne.s32.totalorder %s70, %s71
    %p82 = scmp.eq.s32.totalorder %s20, 0
    %p83 = por %p81, %p82
    %p84 = scmp.ne.s32.totalorder %s70, %s71
    %p85 = scmp.eq.s32.totalorder %s21, 2
    %p86 = por %p84, %p85
    %p88 = scmp.ne.s32.totalorder %s71, %s87
    %p89 = scmp.eq.s32.totalorder %s21, 0
    %p90 = por %p88, %p89
    %s91 = ssub.s32 %s15, %s22
    %p92 = scmp.eq.s32.totalorder %s91, 0
    %s94 = sadd.s32 %s93, 1
    %s95 = scalar_select %p92, %s93, %s94
    %p98 = pneg %p92
    %p99 = scmp.eq.s32.totalorder %s15, 2
    %p100 = por %p98, %p99
    %p101 = scmp.ne.s32.totalorder %s93, %s96
    %p102 = scmp.eq.s32.totalorder %s15, 0
    %p103 = por %p101, %p102
    %p104 = scmp.ne.s32.totalorder %s93, %s96
    %p105 = scmp.eq.s32.totalorder %s20, 2
    %p106 = por %p104, %p105
    %p107 = scmp.ne.s32.totalorder %s96, %s97
    %p108 = scmp.eq.s32.totalorder %s20, 0
    %p109 = por %p107, %p108
    %p110 = scmp.ne.s32.totalorder %s96, %s97
    %p111 = scmp.eq.s32.totalorder %s21, 2
    %p112 = por %p110, %p111
    %p114 = scmp.ne.s32.totalorder %s97, %s113
    %p115 = scmp.eq.s32.totalorder %s21, 0
    %p116 = por %p114, %p115
    %s118 = sadd.s32 %s117, 1
    %p121 = scmp.eq.s32.totalorder %s15, 2
    %p122 = scmp.ne.s32.totalorder %s117, %s119
    %p123 = scmp.eq.s32.totalorder %s15, 0
    %p124 = por %p122, %p123
    %p125 = scmp.ne.s32.totalorder %s117, %s119
    %p126 = scmp.eq.s32.totalorder %s20, 2
    %p127 = por %p125, %p126
    %p128 = scmp.ne.s32.totalorder %s119, %s120
    %p129 = scmp.eq.s32.totalorder %s20, 0
    %p130 = por %p128, %p129
    %p131 = scmp.ne.s32.totalorder %s119, %s120
    %p132 = scmp.eq.s32.totalorder %s21, 2
    %p133 = por %p131, %p132
    %p135 = scmp.ne.s32.totalorder %s120, %s134
    %p136 = scmp.eq.s32.totalorder %s21, 0
    %p137 = por %p135, %p136
    %s139 = sadd.s32 %s138, 1
    %p142 = scmp.eq.s32.totalorder %s15, 2
    %p143 = scmp.ne.s32.totalorder %s138, %s140
    %p144 = scmp.eq.s32.totalorder %s15, 0
    %p145 = por %p143, %p144
    %p146 = scmp.ne.s32.totalorder %s138, %s140
    %p147 = scmp.eq.s32.totalorder %s20, 2
    %p148 = por %p146, %p147
    %p149 = scmp.ne.s32.totalorder %s140, %s141
    %p150 = scmp.eq.s32.totalorder %s20, 0
    %p151 = por %p149, %p150
    %p152 = scmp.ne.s32.totalorder %s140, %s141
    %p153 = scmp.eq.s32.totalorder %s21, 2
    %p154 = por %p152, %p153
    %p156 = scmp.ne.s32.totalorder %s141, %s155
    %p157 = scmp.eq.s32.totalorder %s21, 0
    %p158 = por %p156, %p157
    %s160 = sadd.s32 %s159, 1
    %p163 = scmp.eq.s32.totalorder %s15, 2
    %p164 = scmp.ne.s32.totalorder %s159, %s161
    %p165 = scmp.eq.s32.totalorder %s15, 0
    %p166 = por %p164, %p165
    %p167 = scmp.ne.s32.totalorder %s159, %s161
    %p168 = scmp.eq.s32.totalorder %s20, 2
    %p169 = por %p167, %p168
    %p170 = scmp.ne.s32.totalorder %s161, %s162
    %p171 = scmp.eq.s32.totalorder %s20, 0
    %p172 = por %p170, %p171
    %p173 = scmp.ne.s32.totalorder %s161, %s162
    %p174 = scmp.eq.s32.totalorder %s21, 2
    %p175 = por %p173, %p174
    %p177 = scmp.ne.s32.totalorder %s162, %s176
    %p178 = scmp.eq.s32.totalorder %s21, 0
    %p179 = por %p177, %p178
    %s181 = sadd.s32 %s180, 1
    %p184 = scmp.eq.s32.totalorder %s15, 2
    %p185 = scmp.ne.s32.totalorder %s180, %s182
    %p186 = scmp.eq.s32.totalorder %s15, 0
    %p187 = por %p185, %p186
    %p188 = scmp.ne.s32.totalorder %s180, %s182
    %p189 = scmp.eq.s32.totalorder %s20, 2
    %p190 = por %p188, %p189
    %p191 = scmp.ne.s32.totalorder %s182, %s183
    %p192 = scmp.eq.s32.totalorder %s20, 0
    %p193 = por %p191, %p192
    %p194 = scmp.ne.s32.totalorder %s182, %s183
    %p195 = scmp.eq.s32.totalorder %s21, 2
    %p196 = por %p194, %p195
    %p198 = scmp.ne.s32.totalorder %s183, %s197
    %p199 = scmp.eq.s32.totalorder %s21, 0
    %p200 = por %p198, %p199
    %s202 = sadd.s32 %s201, 1
    %p205 = scmp.eq.s32.totalorder %s15, 2
    %p206 = scmp.ne.s32.totalorder %s201, %s203
    %p207 = scmp.eq.s32.totalorder %s15, 0
    %p208 = por %p206, %p207
    %p209 = scmp.ne.s32.totalorder %s201, %s203
    %p210 = scmp.eq.s32.totalorder %s20, 2
    %p211 = por %p209, %p210
    %p212 = scmp.ne.s32.totalorder %s203, %s204
    %p213 = scmp.eq.s32.totalorder %s20, 0
    %p214 = por %p212, %p213
    %p215 = scmp.ne.s32.totalorder %s203, %s204
    %p216 = scmp.eq.s32.totalorder %s21, 2
    %p217 = por %p215, %p216
    %p219 = scmp.ne.s32.totalorder %s204, %s218
    %p220 = scmp.eq.s32.totalorder %s21, 0
    %p221 = por %p219, %p220
    %s223 = sadd.s32 %s222, 1
    %p226 = scmp.eq.s32.totalorder %s15, 2
    %p227 = scmp.ne.s32.totalorder %s222, %s224
    %p228 = scmp.eq.s32.totalorder %s15, 0
    %p229 = por %p227, %p228
    %p230 = scmp.ne.s32.totalorder %s222, %s224
    %p231 = scmp.eq.s32.totalorder %s20, 2
    %p232 = por %p230, %p231
    %p233 = scmp.ne.s32.totalorder %s224, %s225
    %p234 = scmp.eq.s32.totalorder %s20, 0
    %p235 = por %p233, %p234
    %p236 = scmp.ne.s32.totalorder %s224, %s225
    %p237 = scmp.eq.s32.totalorder %s21, 2
    %p238 = por %p236, %p237
    %p240 = scmp.ne.s32.totalorder %s225, %s239
    %p241 = scmp.eq.s32.totalorder %s21, 0
    %p242 = por %p240, %p241
    %p243 = scmp.le.s32.totalorder 1, %s15
    %p244 = scmp.lt.s32.totalorder %s15, 4
    %p245 = pnand %p243, %p244
    %p246 = pneg %p245
    // Predicated region
    $region9: #{hno_forward.4} parent=5 // pred_check
      _
    $region10: #{hno_forward.4} parent=5 // pred_check_branch
      %248 = sbr.rel (%p245) target = $region12
    $region11: #{hno_forward.4} parent=5 // pred_region
      %s249 = ssub.s32 %s15, 1
      // Predicated region
      $region13: #{hno_forward.4} parent=11 // pred_check
        %p250 = pneg %p36
      $region14: #{hno_forward.4} parent=11 // pred_check_branch
        %252 = sbr.rel (%p250) target = $region16
      $region15: #{hno_forward.4} parent=11 // pred_region
        _
      $region16: #{hno_forward.4} parent=11 // pred_fallthru
        _
      // Predicated region
      $region17: #{hno_forward.4} parent=11 // pred_check
        %p253 = pneg %p57
      $region18: #{hno_forward.4} parent=11 // pred_check_branch
        %255 = sbr.rel (%p253) target = $region20
      $region19: #{hno_forward.4} parent=11 // pred_region
        _
      $region20: #{hno_forward.4} parent=11 // pred_fallthru
        _
      // Predicated region
      $region21: #{hno_forward.4} parent=11 // pred_check
        %p256 = pneg %p130
      $region22: #{hno_forward.4} parent=11 // pred_check_branch
        %258 = sbr.rel (%p256) target = $region24
      $region23: #{hno_forward.4} parent=11 // pred_region
        _
      $region24: #{hno_forward.4} parent=11 // pred_fallthru
        _
      // Predicated region
      $region25: #{hno_forward.4} parent=11 // pred_check
        %p259 = pneg %p151
      $region26: #{hno_forward.4} parent=11 // pred_check_branch
        %261 = sbr.rel (%p259) target = $region28
      $region27: #{hno_forward.4} parent=11 // pred_region
        _
      $region28: #{hno_forward.4} parent=11 // pred_fallthru
        _
      // Predicated region
      $region29: #{hno_forward.4} parent=11 // pred_check
        %p262 = pneg %p172
      $region30: #{hno_forward.4} parent=11 // pred_check_branch
        %264 = sbr.rel (%p262) target = $region32
      $region31: #{hno_forward.4} parent=11 // pred_region
        _
      $region32: #{hno_forward.4} parent=11 // pred_fallthru
        _
      // Predicated region
      $region33: #{hno_forward.4} parent=11 // pred_check
        %p265 = pneg %p193
      $region34: #{hno_forward.4} parent=11 // pred_check_branch
        %267 = sbr.rel (%p265) target = $region36
      $region35: #{hno_forward.4} parent=11 // pred_region
        _
      $region36: #{hno_forward.4} parent=11 // pred_fallthru
        _
      // Predicated region
      $region37: #{hno_forward.4} parent=11 // pred_check
        %p268 = pneg %p214
      $region38: #{hno_forward.4} parent=11 // pred_check_branch
        %270 = sbr.rel (%p268) target = $region40
      $region39: #{hno_forward.4} parent=11 // pred_region
        _
      $region40: #{hno_forward.4} parent=11 // pred_fallthru
        _
    $region12: #{hno_forward.4} parent=5 // pred_fallthru
      _
    %p271 = scmp.lt.s32.totalorder %s15, 3
    // Predicated region
    $region41: #{hno_forward.4} parent=5 // pred_check
      %p272 = pneg %p271
    $region42: #{hno_forward.4} parent=5 // pred_check_branch
      %274 = sbr.rel (%p272) target = $region44
    $region43: #{hno_forward.4} parent=5 // pred_region
      // Predicated region
      $region45: #{hno_forward.4} parent=43 // pred_check
        %p275 = pneg %p77
      $region46: #{hno_forward.4} parent=43 // pred_check_branch
        %277 = sbr.rel (%p275) target = $region48
      $region47: #{hno_forward.4} parent=43 // pred_region
        %p278 = scmp.lt.s32.totalorder %s15, 2
        %s279 = scalar_select %p278, %s15, 2
        %s280 = smul.addr %s279, 12
        %s281 = smul.addr %s280, 8
        %s282 = scalar_lea.vmem %s2, %s281
      $region48: #{hno_forward.4} parent=43 // pred_fallthru
        _
      // Predicated region
      $region49: #{hno_forward.4} parent=43 // pred_check
        %p283 = pneg %p103
      $region50: #{hno_forward.4} parent=43 // pred_check_branch
        %285 = sbr.rel (%p283) target = $region52
      $region51: #{hno_forward.4} parent=43 // pred_region
        %p286 = scmp.lt.s32.totalorder %s15, 2
        %s287 = scalar_select %p286, %s15, 2
        %s288 = scalar_lea.vmem %s3, %s287
      $region52: #{hno_forward.4} parent=43 // pred_fallthru
        _
    $region44: #{hno_forward.4} parent=5 // pred_fallthru
      _
    %p289 = scmp.le.s32.totalorder 1, %s15
    %p290 = scmp.lt.s32.totalorder %s15, 4
    %p291 = pnand %p289, %p290
    %p292 = pneg %p291
    // Predicated region
    $region53: #{hno_forward.4} parent=5 // pred_check
      _
    $region54: #{hno_forward.4} parent=5 // pred_check_branch
      %294 = sbr.rel (%p291) target = $region56
    $region55: #{hno_forward.4} parent=5 // pred_region
      %s295 = ssub.s32 %s15, 1
      %p296 = pneg %p36
      %p297 = pneg %p33
      %p298 = pneg %p57
      %p299 = pneg %p54
      %p300 = scmp.lt.s32.totalorder %s20, 2
      %s301 = scalar_select %p300, %s20, 2
      %s302 = smul.addr %s301, 12
      %s303 = smul.addr %s302, 8
      %s304 = scalar_lea.vmem %s2, %s303
      %p305 = pneg %p83
      %p306 = pneg %p80
      %p307 = scmp.lt.s32.totalorder %s20, 2
      %s308 = scalar_select %p307, %s20, 2
      %s309 = scalar_lea.vmem %s3, %s308
      %p310 = pneg %p109
      %p311 = pneg %p106
      %p312 = pneg %p130
      %p313 = pneg %p127
      %p314 = pneg %p151
      %p315 = pneg %p148
      %p316 = pneg %p172
      %p317 = pneg %p169
      %p318 = pneg %p193
      %p319 = pneg %p190
      %p320 = pneg %p214
      %p321 = pneg %p211
      %p322 = pneg %p235
      %p323 = pneg %p232
      %p324 = scmp.lt.s32.totalorder %s20, 2
      %s325 = scalar_select %p324, %s20, 2
      %s326 = smul.addr %s325, 12
      %s327 = smul.addr %s326, 8
      %s328 = scalar_lea.vmem %s2, %s327
      %p329 = scmp.lt.s32.totalorder %s20, 2
      %s330 = scalar_select %p329, %s20, 2
      %s331 = scalar_lea.vmem %s3, %s330
      %p333 = scmp.eq.s32.totalorder %s20, 0
      // Predicated region
      $region57: #{hno_forward.4} parent=55 // pred_check
        %p334 = pneg %p333
      $region58: #{hno_forward.4} parent=55 // pred_check_branch
        %336 = sbr.rel (%p334) target = $region60
      $region59: #{hno_forward.4} parent=55 // pred_region
        %v337 = vld [vmem:[%s1] sm:$0xff]
        %v338 = vld [vmem:[%s1 + $0x8] sm:$0xff]
        %v339 = vld [vmem:[%s1 + $0x10] sm:$0xff]
        %v340 = vld [vmem:[%s1 + $0x18] sm:$0xff]
        %v341 = vld [vmem:[%s1 + $0x20] sm:$0xff]
        %v342 = vld [vmem:[%s1 + $0x28] sm:$0xff]
        %v343 = vld [vmem:[%s1 + $0x30] sm:$0xff]
        %v344 = vld [vmem:[%s1 + $0x38] sm:$0xff]
        %vm345 = vcmask 261120
        %346 = vst.msk [vmem:[%s9] sm:$0xff] %vm345, %v337
        %347 = vst.msk [vmem:[%s9 + $0x8] sm:$0xff] %vm345, %v338
        %348 = vst.msk [vmem:[%s9 + $0x10] sm:$0xff] %vm345, %v339
        %349 = vst.msk [vmem:[%s9 + $0x18] sm:$0xff] %vm345, %v340
        %350 = vst.msk [vmem:[%s9 + $0x20] sm:$0xff] %vm345, %v341
        %351 = vst.msk [vmem:[%s9 + $0x28] sm:$0xff] %vm345, %v342
        %352 = vst.msk [vmem:[%s9 + $0x30] sm:$0xff] %vm345, %v343
        %353 = vst.msk [vmem:[%s9 + $0x38] sm:$0xff] %vm345, %v344
      $region60: #{hno_forward.4} parent=55 // pred_fallthru
        _
      %v354 = vld [vmem:[%s0] sm:$0xf]
      %v355 = vld [vmem:[%s0 + $0x4] sm:$0xf]
      %v356 = vld [vmem:[%s0 + $0x8] sm:$0xf]
      %v357 = vld [vmem:[%s0 + $0xc] sm:$0xf]
      %v358 = vld [vmem:[%s0 + $0x10] sm:$0xf]
      %v359 = vld [vmem:[%s0 + $0x14] sm:$0xf]
      %v360 = vld [vmem:[%s0 + $0x18] sm:$0xf]
      %v361 = vld [vmem:[%s0 + $0x1c] sm:$0xf]
      %v362 = vld [vmem:[%s9] sm:$0xff]
      %v363 = vld [vmem:[%s9 + $0x8] sm:$0xff]
      %v364 = vld [vmem:[%s9 + $0x10] sm:$0xff]
      %v365 = vld [vmem:[%s9 + $0x18] sm:$0xff]
      %v366 = vld [vmem:[%s9 + $0x20] sm:$0xff]
      %v367 = vld [vmem:[%s9 + $0x28] sm:$0xff]
      %v368 = vld [vmem:[%s9 + $0x30] sm:$0xff]
      %v369 = vld [vmem:[%s9 + $0x38] sm:$0xff]
      %v370 = vld [vmem:[%s328] sm:$0xff]
      %v371 = vld [vmem:[%s328 + $0x8] sm:$0xff]
      %v372 = vld [vmem:[%s328 + $0x10] sm:$0xff]
      %v373 = vld [vmem:[%s328 + $0x18] sm:$0xff]
      %v374 = vld [vmem:[%s328 + $0x20] sm:$0xff]
      %v375 = vld [vmem:[%s328 + $0x28] sm:$0xff]
      %v376 = vld [vmem:[%s328 + $0x30] sm:$0xff]
      %v377 = vld [vmem:[%s328 + $0x38] sm:$0xff]
      %v378 = vld [vmem:[%s328 + $0x40] sm:$0xff]
      %v379 = vld [vmem:[%s328 + $0x48] sm:$0xff]
      %v380 = vld [vmem:[%s328 + $0x50] sm:$0xff]
      %v381 = vld [vmem:[%s328 + $0x58] sm:$0xff]
      %v382 = vld [vmem:[%s331] sm:$0x1]
      %v383 = vpack.c.bf16 %v363, %v362
      %v384 = vpack.c.bf16 %v365, %v364
      %v385 = vpack.c.bf16 %v367, %v366
      %v386 = vpack.c.bf16 %v369, %v368
      %v395 = vunpack.c.l.b16 %v354
      %v396 = vunpack.c.l.b16 %v355
      %v397 = vunpack.c.l.b16 %v356
      %v398 = vunpack.c.l.b16 %v357
      %v399 = vunpack.c.l.b16 %v358
      %v400 = vunpack.c.l.b16 %v359
      %v401 = vunpack.c.l.b16 %v360
      %v402 = vunpack.c.l.b16 %v361
      %v403 = vpack.c.b16 %v396, %v395
      %v404 = vpack.c.b16 %v398, %v397
      %v405 = vpack.c.b16 %v400, %v399
      %v406 = vpack.c.b16 %v402, %v401
      %vm407 = vcmask 523264
      %v409 = vsel %vm407, %v403, 0
      %v412 = vsel %vm407, %v404, 0
      %v415 = vsel %vm407, %v405, 0
      %v418 = vsel %vm407, %v406, 0
      %420 = vmatprep.subr.bf16.mxu0 0
      %421 = vmatpush1.bf16.msra.mxu0 %v383
      %422 = vmatprep.subr.bf16.mxu0 0
      %423 = vmatpush1.bf16.msra.mxu0 %v384
      %424 = vmatprep.subr.bf16.mxu0 0
      %425 = vmatpush1.bf16.msra.mxu0 %v385
      %426 = vmatprep.subr.bf16.mxu0 0
      %427 = vmatpush1.bf16.msra.mxu0 %v386
      %428 = vmatprep.subr.bf16.mxu0 0
      %429 = vmatpush1.bf16.msra.mxu0 0
      %430 = vmatprep.subr.bf16.mxu0 0
      %431 = vmatpush1.bf16.msra.mxu0 0
      %432 = vmatprep.subr.bf16.mxu0 0
      %433 = vmatpush1.bf16.msra.mxu0 0
      %434 = vmatprep.subr.bf16.mxu0 0
      %435 = vmatpush1.bf16.msra.mxu0 0
      %436 = vmatprep.subr.bf16.mxu0 0
      %437 = vmatpush1.bf16.msra.mxu0 0
      %438 = vmatprep.subr.bf16.mxu0 0
      %439 = vmatpush1.bf16.msra.mxu0 0
      %440 = vmatprep.subr.bf16.mxu0 0
      %441 = vmatpush1.bf16.msra.mxu0 0
      %442 = vmatprep.subr.bf16.mxu0 0
      %443 = vmatpush1.bf16.msra.mxu0 0
      %444 = vmatprep.subr.bf16.mxu0 0
      %445 = vmatpush1.bf16.msra.mxu0 0
      %446 = vmatprep.subr.bf16.mxu0 0
      %447 = vmatpush1.bf16.msra.mxu0 0
      %448 = vmatprep.subr.bf16.mxu0 0
      %449 = vmatpush1.bf16.msra.mxu0 0
      %450 = vmatprep.subr.bf16.mxu0 0
      %451 = vmatpush1.bf16.msra.mxu0 0
      %452 = vmatprep.mubr.bf16.mxu0 0
      %453 = vmatmul.mubr.bf16.gmra.mrb[0].mxu0 %v409
      %v454 = vpop.f32.mrb[0].mxu0
      %v455 = vadd.f32 0.0, %v454
      %v456 = vpop.f32.mrb[0].mxu0
      %v457 = vpop.f32.mrb[0].mxu0
      %v458 = vadd.f32 0.0, %v457
      %v459 = vpop.f32.mrb[0].mxu0
      %460 = vmatprep.mubr.bf16.mxu0 0
      %461 = vmatmul.mubr.bf16.gmra.mrb[0].mxu0 %v412
      %v462 = vpop.f32.mrb[0].mxu0
      %v463 = vadd.f32 0.0, %v462
      %v464 = vpop.f32.mrb[0].mxu0
      %v465 = vpop.f32.mrb[0].mxu0
      %v466 = vadd.f32 0.0, %v465
      %v467 = vpop.f32.mrb[0].mxu0
      %468 = vmatprep.mubr.bf16.mxu0 0
      %469 = vmatmul.mubr.bf16.gmra.mrb[0].mxu0 %v415
      %v470 = vpop.f32.mrb[0].mxu0
      %v471 = vadd.f32 0.0, %v470
      %v472 = vpop.f32.mrb[0].mxu0
      %v473 = vpop.f32.mrb[0].mxu0
      %v474 = vadd.f32 0.0, %v473
      %v475 = vpop.f32.mrb[0].mxu0
      %476 = vmatprep.mubr.bf16.mxu0 0
      %477 = vmatmul.mubr.bf16.gmra.mrb[0].mxu0 %v418
      %v478 = vpop.f32.mrb[0].mxu0
      %v479 = vadd.f32 0.0, %v478
      %v480 = vpop.f32.mrb[0].mxu0
      %v481 = vpop.f32.mrb[0].mxu0
      %v482 = vadd.f32 0.0, %v481
      %v483 = vpop.f32.mrb[0].mxu0
      %484 = vdwg.mxu0
      %v485 = vpack.c.bf16 %v458, %v455
      %v486 = vpack.c.bf16 %v466, %v463
      %v487 = vpack.c.bf16 %v474, %v471
      %v488 = vpack.c.bf16 %v482, %v479
      %489 = vmatprep.subr.bf16.mxu0 0
      %490 = vmatpush1.bf16.msra.mxu0 %v485
      %491 = vmatprep.subr.bf16.mxu0 0
      %492 = vmatpush1.bf16.msra.mxu0 %v486
      %493 = vmatprep.subr.bf16.mxu0 0
      %494 = vmatpush1.bf16.msra.mxu0 %v487
      %495 = vmatprep.subr.bf16.mxu0 0
      %496 = vmatpush1.bf16.msra.mxu0 %v488
      %497 = vmatprep.subr.bf16.mxu0 0
      %498 = vmatpush1.bf16.msra.mxu0 0
      %499 = vmatprep.subr.bf16.mxu0 0
      %500 = vmatpush1.bf16.msra.mxu0 0
      %501 = vmatprep.subr.bf16.mxu0 0
      %502 = vmatpush1.bf16.msra.mxu0 0
      %503 = vmatprep.subr.bf16.mxu0 0
      %504 = vmatpush1.bf16.msra.mxu0 0
      %505 = vmatprep.subr.bf16.mxu0 0
      %506 = vmatpush1.bf16.msra.mxu0 0
      %507 = vmatprep.subr.bf16.mxu0 0
      %508 = vmatpush1.bf16.msra.mxu0 0
      %509 = vmatprep.subr.bf16.mxu0 0
      %510 = vmatpush1.bf16.msra.mxu0 0
      %511 = vmatprep.subr.bf16.mxu0 0
      %512 = vmatpush1.bf16.msra.mxu0 0
      %513 = vmatprep.subr.bf16.mxu0 0
      %514 = vmatpush1.bf16.msra.mxu0 0
      %515 = vmatprep.subr.bf16.mxu0 0
      %516 = vmatpush1.bf16.msra.mxu0 0
      %517 = vmatprep.subr.bf16.mxu0 0
      %518 = vmatpush1.bf16.msra.mxu0 0
      %519 = vmatprep.subr.bf16.mxu0 0
      %520 = vmatpush1.bf16.msra.mxu0 0
      %521 = vmatprep.mubr.bf16.mxu0 0
      %522 = vmatmul.mubr.bf16.gmra.mrb[0].mxu0 %v409
      %v523 = vpop.f32.mrb[0].mxu0
      %v524 = vadd.f32 0.0, %v523
      %v525 = vpop.f32.mrb[0].mxu0
      %v526 = vpop.f32.mrb[0].mxu0
      %v527 = vadd.f32 0.0, %v526
      %v528 = vpop.f32.mrb[0].mxu0
      %529 = vmatprep.mubr.bf16.mxu0 0
      %530 = vmatmul.mubr.bf16.gmra.mrb[0].mxu0 %v412
      %v531 = vpop.f32.mrb[0].mxu0
      %v532 = vadd.f32 0.0, %v531
      %v533 = vpop.f32.mrb[0].mxu0
      %v534 = vpop.f32.mrb[0].mxu0
      %v535 = vadd.f32 0.0, %v534
      %v536 = vpop.f32.mrb[0].mxu0
      %537 = vmatprep.mubr.bf16.mxu0 0
      %538 = vmatmul.mubr.bf16.gmra.mrb[0].mxu0 %v415
      %v539 = vpop.f32.mrb[0].mxu0
      %v540 = vadd.f32 0.0, %v539
      %v541 = vpop.f32.mrb[0].mxu0
      %v542 = vpop.f32.mrb[0].mxu0
      %v543 = vadd.f32 0.0, %v542
      %v544 = vpop.f32.mrb[0].mxu0
      %545 = vmatprep.mubr.bf16.mxu0 0
      %546 = vmatmul.mubr.bf16.gmra.mrb[0].mxu0 %v418
      %v547 = vpop.f32.mrb[0].mxu0
      %v548 = vadd.f32 0.0, %v547
      %v549 = vpop.f32.mrb[0].mxu0
      %v550 = vpop.f32.mrb[0].mxu0
      %v551 = vadd.f32 0.0, %v550
      %v552 = vpop.f32.mrb[0].mxu0
      %553 = vdwg.mxu0
      %v554 = vmul.f32 %v524, 2.0
      %v555 = vmul.f32 %v527, 2.0
      %v556 = vmul.f32 %v532, 2.0
      %v557 = vmul.f32 %v535, 2.0
      %v558 = vmul.f32 %v540, 2.0
      %v559 = vmul.f32 %v543, 2.0
      %v560 = vmul.f32 %v548, 2.0
      %v561 = vmul.f32 %v551, 2.0
      %v562 = vsub.f32 %v554, %v362
      %v563 = vsub.f32 %v555, %v363
      %v564 = vsub.f32 %v556, %v364
      %v565 = vsub.f32 %v557, %v365
      %v566 = vsub.f32 %v558, %v366
      %v567 = vsub.f32 %v559, %v367
      %v568 = vsub.f32 %v560, %v368
      %v569 = vsub.f32 %v561, %v369
      %578 = vrot.lane.b32.xlu0 %v455, 32
      %v579 = vpop.permute.xlu0 %578
      %580 = vrot.lane.b32.xlu0 %v458, 32
      %v581 = vpop.permute.xlu0 %580
      %582 = vrot.lane.b32.xlu0 %v463, 32
      %v583 = vpop.permute.xlu0 %582
      %584 = vrot.lane.b32.xlu0 %v466, 32
      %v585 = vpop.permute.xlu0 %584
      %586 = vrot.lane.b32.xlu0 %v471, 32
      %v587 = vpop.permute.xlu0 %586
      %588 = vrot.lane.b32.xlu0 %v474, 32
      %v589 = vpop.permute.xlu0 %588
      %590 = vrot.lane.b32.xlu0 %v479, 32
      %v591 = vpop.permute.xlu0 %590
      %592 = vrot.lane.b32.xlu0 %v482, 32
      %v593 = vpop.permute.xlu0 %592
      %610 = vrot.lane.b32.xlu0 %v562, 64
      %v611 = vpop.permute.xlu0 %610
      %612 = vrot.lane.b32.xlu0 %v563, 64
      %v613 = vpop.permute.xlu0 %612
      %614 = vrot.lane.b32.xlu0 %v564, 64
      %v615 = vpop.permute.xlu0 %614
      %616 = vrot.lane.b32.xlu0 %v565, 64
      %v617 = vpop.permute.xlu0 %616
      %618 = vrot.lane.b32.xlu0 %v566, 64
      %v619 = vpop.permute.xlu0 %618
      %620 = vrot.lane.b32.xlu0 %v567, 64
      %v621 = vpop.permute.xlu0 %620
      %622 = vrot.lane.b32.xlu0 %v568, 64
      %v623 = vpop.permute.xlu0 %622
      %624 = vrot.lane.b32.xlu0 %v569, 64
      %v625 = vpop.permute.xlu0 %624
      %vm634 = vcmask 261120
      %v635 = vsel %vm634, %v362, %v579
      %v636 = vsel %vm634, %v363, %v581
      %v637 = vsel %vm634, %v364, %v583
      %v638 = vsel %vm634, %v365, %v585
      %v639 = vsel %vm634, %v366, %v587
      %v640 = vsel %vm634, %v367, %v589
      %v641 = vsel %vm634, %v368, %v591
      %v642 = vsel %vm634, %v369, %v593
      %v643 = vsel %vm407, %v635, %v611
      %v644 = vsel %vm407, %v636, %v613
      %v645 = vsel %vm407, %v637, %v615
      %v646 = vsel %vm407, %v638, %v617
      %v647 = vsel %vm407, %v639, %v619
      %v648 = vsel %vm407, %v640, %v621
      %v649 = vsel %vm407, %v641, %v623
      %v650 = vsel %vm407, %v642, %v625
      %v652 = vlaneseq
      %v653 = vshrl.u32 %v652, 7
      %v654 = vsub.s32 0, %v653
      %v655 = vrot.slane %v382, %v654
      %vm657 = vcmask 785408
      %v659 = vsel %vm657, %v643, 0
      %v662 = vsel %vm657, %v644, 0
      %v665 = vsel %vm657, %v645, 0
      %v668 = vsel %vm657, %v646, 0
      %v671 = vsel %vm657, %v647, 0
      %v674 = vsel %vm657, %v648, 0
      %v677 = vsel %vm657, %v649, 0
      %v680 = vsel %vm657, %v650, 0
      %682 = vmatprep.subr.mxu0 0.0
      %683 = vmatpush1.msra.mxu0 %v370
      %684 = vmatprep.subr.mxu0 0.0
      %685 = vmatpush1.msra.mxu0 %v371
      %686 = vmatprep.subr.mxu0 0.0
      %687 = vmatpush1.msra.mxu0 %v372
      %688 = vmatprep.subr.mxu0 0.0
      %689 = vmatpush1.msra.mxu0 %v373
      %690 = vmatprep.subr.mxu0 0.0
      %691 = vmatpush1.msra.mxu0 %v374
      %692 = vmatprep.subr.mxu0 0.0
      %693 = vmatpush1.msra.mxu0 %v375
      %694 = vmatprep.subr.mxu0 0.0
      %695 = vmatpush1.msra.mxu0 %v376
      %696 = vmatprep.subr.mxu0 0.0
      %697 = vmatpush1.msra.mxu0 %v377
      %698 = vmatprep.subr.mxu0 0.0
      %699 = vmatpush1.msra.mxu0 %v378
      %700 = vmatprep.subr.mxu0 0.0
      %701 = vmatpush1.msra.mxu0 %v379
      %702 = vmatprep.subr.mxu0 0.0
      %703 = vmatpush1.msra.mxu0 %v380
      %704 = vmatprep.subr.mxu0 0.0
      %705 = vmatpush1.msra.mxu0 %v381
      %706 = vmatprep.subr.mxu0 0.0
      %707 = vmatpush1.msra.mxu0 0.0
      %708 = vmatprep.subr.mxu0 0.0
      %709 = vmatpush1.msra.mxu0 0.0
      %710 = vmatprep.subr.mxu0 0.0
      %711 = vmatpush1.msra.mxu0 0.0
      %712 = vmatprep.subr.mxu0 0.0
      %713 = vmatpush1.msra.mxu0 0.0
      %714 = vmatprep.subr.mxu0 0.0
      %715 = vmatpush1.msra.mxu0 0.0
      %716 = vmatprep.subr.mxu0 0.0
      %717 = vmatpush1.msra.mxu0 0.0
      %718 = vmatprep.subr.mxu0 0.0
      %719 = vmatpush1.msra.mxu0 0.0
      %720 = vmatprep.subr.mxu0 0.0
      %721 = vmatpush1.msra.mxu0 0.0
      %722 = vmatprep.subr.mxu0 0.0
      %723 = vmatpush1.msra.mxu0 0.0
      %724 = vmatprep.subr.mxu0 0.0
      %725 = vmatpush1.msra.mxu0 0.0
      %726 = vmatprep.subr.mxu0 0.0
      %727 = vmatpush1.msra.mxu0 0.0
      %728 = vmatprep.subr.mxu0 0.0
      %729 = vmatpush1.msra.mxu0 0.0
      %730 = vmatprep.subr.mxu0 0.0
      %731 = vmatpush1.msra.mxu0 0.0
      %732 = vmatprep.subr.mxu0 0.0
      %733 = vmatpush1.msra.mxu0 0.0
      %734 = vmatprep.subr.mxu0 0.0
      %735 = vmatpush1.msra.mxu0 0.0
      %736 = vmatprep.subr.mxu0 0.0
      %737 = vmatpush1.msra.mxu0 0.0
      %738 = vmatprep.subr.mxu0 0.0
      %739 = vmatpush1.msra.mxu0 0.0
      %740 = vmatprep.subr.mxu0 0.0
      %741 = vmatpush1.msra.mxu0 0.0
      %742 = vmatprep.subr.mxu0 0.0
      %743 = vmatpush1.msra.mxu0 0.0
      %744 = vmatprep.subr.mxu0 0.0
      %745 = vmatpush1.msra.mxu0 0.0
      %746 = vmatprep.mubr.f32.mxu0 0.0
      %747 = vmatmul.mubr.f32.gmra.mrb[0].mxu0 %v659
      %v748 = vpop.f32.mrb[0].mxu0
      %v749 = vadd.f32 %v655, %v748
      %v750 = vpop.f32.mrb[0].mxu0
      %751 = vmatprep.mubr.f32.mxu0 0.0
      %752 = vmatmul.mubr.f32.gmra.mrb[0].mxu0 %v662
      %v753 = vpop.f32.mrb[0].mxu0
      %v754 = vadd.f32 %v655, %v753
      %v755 = vpop.f32.mrb[0].mxu0
      %756 = vmatprep.mubr.f32.mxu0 0.0
      %757 = vmatmul.mubr.f32.gmra.mrb[0].mxu0 %v665
      %v758 = vpop.f32.mrb[0].mxu0
      %v759 = vadd.f32 %v655, %v758
      %v760 = vpop.f32.mrb[0].mxu0
      %761 = vmatprep.mubr.f32.mxu0 0.0
      %762 = vmatmul.mubr.f32.gmra.mrb[0].mxu0 %v668
      %v763 = vpop.f32.mrb[0].mxu0
      %v764 = vadd.f32 %v655, %v763
      %v765 = vpop.f32.mrb[0].mxu0
      %766 = vmatprep.mubr.f32.mxu0 0.0
      %767 = vmatmul.mubr.f32.gmra.mrb[0].mxu0 %v671
      %v768 = vpop.f32.mrb[0].mxu0
      %v769 = vadd.f32 %v655, %v768
      %v770 = vpop.f32.mrb[0].mxu0
      %771 = vmatprep.mubr.f32.mxu0 0.0
      %772 = vmatmul.mubr.f32.gmra.mrb[0].mxu0 %v674
      %v773 = vpop.f32.mrb[0].mxu0
      %v774 = vadd.f32 %v655, %v773
      %v775 = vpop.f32.mrb[0].mxu0
      %776 = vmatprep.mubr.f32.mxu0 0.0
      %777 = vmatmul.mubr.f32.gmra.mrb[0].mxu0 %v677
      %v778 = vpop.f32.mrb[0].mxu0
      %v779 = vadd.f32 %v655, %v778
      %v780 = vpop.f32.mrb[0].mxu0
      %781 = vmatprep.mubr.f32.mxu0 0.0
      %782 = vmatmul.mubr.f32.gmra.mrb[0].mxu0 %v680
      %v783 = vpop.f32.mrb[0].mxu0
      %v784 = vadd.f32 %v655, %v783
      %v785 = vpop.f32.mrb[0].mxu0
      %786 = vdwg.mxu0
      %v787 = vtanh.pop %v749
      %v788 = vtanh.pop %v754
      %v789 = vtanh.pop %v759
      %v790 = vtanh.pop %v764
      %v791 = vtanh.pop %v769
      %v792 = vtanh.pop %v774
      %v793 = vtanh.pop %v779
      %v794 = vtanh.pop %v784
      %v795 = vmul.f32 %v787, %v787
      %v796 = vmul.f32 %v788, %v788
      %v797 = vmul.f32 %v789, %v789
      %v798 = vmul.f32 %v790, %v790
      %v799 = vmul.f32 %v791, %v791
      %v800 = vmul.f32 %v792, %v792
      %v801 = vmul.f32 %v793, %v793
      %v802 = vmul.f32 %v794, %v794
      %v803 = vsel %vm634, %v787, 0.0
      %v804 = vsel %vm634, %v788, 0.0
      %v805 = vadd.f32 %v803, %v804
      %v806 = vsel %vm634, %v789, 0.0
      %v807 = vadd.f32 %v805, %v806
      %v808 = vsel %vm634, %v790, 0.0
      %v809 = vadd.f32 %v807, %v808
      %v810 = vsel %vm634, %v791, 0.0
      %v811 = vadd.f32 %v809, %v810
      %v812 = vsel %vm634, %v792, 0.0
      %v813 = vadd.f32 %v811, %v812
      %v814 = vsel %vm634, %v793, 0.0
      %v815 = vadd.f32 %v813, %v814
      %v816 = vsel %vm634, %v794, 0.0
      %v817 = vadd.f32 %v815, %v816
      %v818 = vrot.slane %v817, 4
      %v819 = vadd.f32 %v817, %v818
      %v820 = vrot.slane %v819, 2
      %v821 = vadd.f32 %v819, %v820
      %v822 = vrot.slane %v821, 1
      %v823 = vadd.f32 %v821, %v822
      %v824 = vsel %vm634, %v795, 0.0
      %v825 = vsel %vm634, %v796, 0.0
      %v826 = vadd.f32 %v824, %v825
      %v827 = vsel %vm634, %v797, 0.0
      %v828 = vadd.f32 %v826, %v827
      %v829 = vsel %vm634, %v798, 0.0
      %v830 = vadd.f32 %v828, %v829
      %v831 = vsel %vm634, %v799, 0.0
      %v832 = vadd.f32 %v830, %v831
      %v833 = vsel %vm634, %v800, 0.0
      %v834 = vadd.f32 %v832, %v833
      %v835 = vsel %vm634, %v801, 0.0
      %v836 = vadd.f32 %v834, %v835
      %v837 = vsel %vm634, %v802, 0.0
      %v838 = vadd.f32 %v836, %v837
      %v839 = vrot.slane %v838, 4
      %v840 = vadd.f32 %v838, %v839
      %v841 = vrot.slane %v840, 2
      %v842 = vadd.f32 %v840, %v841
      %v843 = vrot.slane %v842, 1
      %v844 = vadd.f32 %v842, %v843
      %v845 = vmul.f32 %v823, 0.015625
      %v846 = vmul.f32 %v844, 0.015625
      %v847 = vmul.f32 %v845, %v845
      %v848 = vsub.f32 %v846, %v847
      %v849 = vmax.f32 %v848, 0.0
      %v850 = vsub.f32 %v787, %v845
      %v851 = vsub.f32 %v788, %v845
      %v852 = vsub.f32 %v789, %v845
      %v853 = vsub.f32 %v790, %v845
      %v854 = vsub.f32 %v791, %v845
      %v855 = vsub.f32 %v792, %v845
      %v856 = vsub.f32 %v793, %v845
      %v857 = vsub.f32 %v794, %v845
      %v858 = vadd.f32 %v849, 1e-05
      %v859 = vrsqrt.pop %v858
      %v860 = vmul.f32 %v850, %v859
      %v861 = vmul.f32 %v851, %v859
      %v862 = vmul.f32 %v852, %v859
      %v863 = vmul.f32 %v853, %v859
      %v864 = vmul.f32 %v854, %v859
      %v865 = vmul.f32 %v855, %v859
      %v866 = vmul.f32 %v856, %v859
      %v867 = vmul.f32 %v857, %v859
      %868 = vst.msk [vmem:[%s9] sm:$0xff] %vm634, %v860
      %869 = vst.msk [vmem:[%s9 + $0x8] sm:$0xff] %vm634, %v861
      %870 = vst.msk [vmem:[%s9 + $0x10] sm:$0xff] %vm634, %v862
      %871 = vst.msk [vmem:[%s9 + $0x18] sm:$0xff] %vm634, %v863
      %872 = vst.msk [vmem:[%s9 + $0x20] sm:$0xff] %vm634, %v864
      %873 = vst.msk [vmem:[%s9 + $0x28] sm:$0xff] %vm634, %v865
      %874 = vst.msk [vmem:[%s9 + $0x30] sm:$0xff] %vm634, %v866
      %875 = vst.msk [vmem:[%s9 + $0x38] sm:$0xff] %vm634, %v867
      %p876 = scmp.eq.s32.totalorder %s20, 2
      // Predicated region
      $region61: #{hno_forward.4} parent=55 // pred_check
        %p877 = pneg %p876
      $region62: #{hno_forward.4} parent=55 // pred_check_branch
        %879 = sbr.rel (%p877) target = $region64
      $region63: #{hno_forward.4} parent=55 // pred_region
        %v880 = vld [vmem:[%s4] sm:$0xff]
        %v881 = vld [vmem:[%s4 + $0x8] sm:$0xff]
        %v882 = vld [vmem:[%s4 + $0x10] sm:$0xff]
        %v883 = vld [vmem:[%s4 + $0x18] sm:$0xff]
        %v884 = vld [vmem:[%s5] sm:$0x1]
        %v886 = vlaneseq
        %v887 = vshrl.u32 %v886, 7
        %v888 = vsub.s32 0, %v887
        %v889 = vrot.slane %v884, %v888
        %v892 = vsel %vm634, %v860, 0
        %v895 = vsel %vm634, %v861, 0
        %v898 = vsel %vm634, %v862, 0
        %v901 = vsel %vm634, %v863, 0
        %v904 = vsel %vm634, %v864, 0
        %v907 = vsel %vm634, %v865, 0
        %v910 = vsel %vm634, %v866, 0
        %v913 = vsel %vm634, %v867, 0
        %915 = vmatprep.subr.mxu0 0.0
        %916 = vmatpush1.msra.mxu0 %v880
        %917 = vmatprep.subr.mxu0 0.0
        %918 = vmatpush1.msra.mxu0 %v881
        %919 = vmatprep.subr.mxu0 0.0
        %920 = vmatpush1.msra.mxu0 %v882
        %921 = vmatprep.subr.mxu0 0.0
        %922 = vmatpush1.msra.mxu0 %v883
        %923 = vmatprep.subr.mxu0 0.0
        %924 = vmatpush1.msra.mxu0 0.0
        %925 = vmatprep.subr.mxu0 0.0
        %926 = vmatpush1.msra.mxu0 0.0
        %927 = vmatprep.subr.mxu0 0.0
        %928 = vmatpush1.msra.mxu0 0.0
        %929 = vmatprep.subr.mxu0 0.0
        %930 = vmatpush1.msra.mxu0 0.0
        %931 = vmatprep.subr.mxu0 0.0
        %932 = vmatpush1.msra.mxu0 0.0
        %933 = vmatprep.subr.mxu0 0.0
        %934 = vmatpush1.msra.mxu0 0.0
        %935 = vmatprep.subr.mxu0 0.0
        %936 = vmatpush1.msra.mxu0 0.0
        %937 = vmatprep.subr.mxu0 0.0
        %938 = vmatpush1.msra.mxu0 0.0
        %939 = vmatprep.subr.mxu0 0.0
        %940 = vmatpush1.msra.mxu0 0.0
        %941 = vmatprep.subr.mxu0 0.0
        %942 = vmatpush1.msra.mxu0 0.0
        %943 = vmatprep.subr.mxu0 0.0
        %944 = vmatpush1.msra.mxu0 0.0
        %945 = vmatprep.subr.mxu0 0.0
        %946 = vmatpush1.msra.mxu0 0.0
        %947 = vmatprep.subr.mxu0 0.0
        %948 = vmatpush1.msra.mxu0 0.0
        %949 = vmatprep.subr.mxu0 0.0
        %950 = vmatpush1.msra.mxu0 0.0
        %951 = vmatprep.subr.mxu0 0.0
        %952 = vmatpush1.msra.mxu0 0.0
        %953 = vmatprep.subr.mxu0 0.0
        %954 = vmatpush1.msra.mxu0 0.0
        %955 = vmatprep.subr.mxu0 0.0
        %956 = vmatpush1.msra.mxu0 0.0
        %957 = vmatprep.subr.mxu0 0.0
        %958 = vmatpush1.msra.mxu0 0.0
        %959 = vmatprep.subr.mxu0 0.0
        %960 = vmatpush1.msra.mxu0 0.0
        %961 = vmatprep.subr.mxu0 0.0
        %962 = vmatpush1.msra.mxu0 0.0
        %963 = vmatprep.subr.mxu0 0.0
        %964 = vmatpush1.msra.mxu0 0.0
        %965 = vmatprep.subr.mxu0 0.0
        %966 = vmatpush1.msra.mxu0 0.0
        %967 = vmatprep.subr.mxu0 0.0
        %968 = vmatpush1.msra.mxu0 0.0
        %969 = vmatprep.subr.mxu0 0.0
        %970 = vmatpush1.msra.mxu0 0.0
        %971 = vmatprep.subr.mxu0 0.0
        %972 = vmatpush1.msra.mxu0 0.0
        %973 = vmatprep.subr.mxu0 0.0
        %974 = vmatpush1.msra.mxu0 0.0
        %975 = vmatprep.subr.mxu0 0.0
        %976 = vmatpush1.msra.mxu0 0.0
        %977 = vmatprep.subr.mxu0 0.0
        %978 = vmatpush1.msra.mxu0 0.0
        %979 = vmatprep.mubr.f32.mxu0 0.0
        %980 = vmatmul.mubr.f32.gmra.mrb[0].mxu0 %v892
        %v981 = vpop.f32.mrb[0].mxu0
        %v982 = vadd.f32 %v889, %v981
        %v983 = vpop.f32.mrb[0].mxu0
        %984 = vmatprep.mubr.f32.mxu0 0.0
        %985 = vmatmul.mubr.f32.gmra.mrb[0].mxu0 %v895
        %v986 = vpop.f32.mrb[0].mxu0
        %v987 = vadd.f32 %v889, %v986
        %v988 = vpop.f32.mrb[0].mxu0
        %989 = vmatprep.mubr.f32.mxu0 0.0
        %990 = vmatmul.mubr.f32.gmra.mrb[0].mxu0 %v898
        %v991 = vpop.f32.mrb[0].mxu0
        %v992 = vadd.f32 %v889, %v991
        %v993 = vpop.f32.mrb[0].mxu0
        %994 = vmatprep.mubr.f32.mxu0 0.0
        %995 = vmatmul.mubr.f32.gmra.mrb[0].mxu0 %v901
        %v996 = vpop.f32.mrb[0].mxu0
        %v997 = vadd.f32 %v889, %v996
        %v998 = vpop.f32.mrb[0].mxu0
        %999 = vmatprep.mubr.f32.mxu0 0.0
        %1000 = vmatmul.mubr.f32.gmra.mrb[0].mxu0 %v904
        %v1001 = vpop.f32.mrb[0].mxu0
        %v1002 = vadd.f32 %v889, %v1001
        %v1003 = vpop.f32.mrb[0].mxu0
        %1004 = vmatprep.mubr.f32.mxu0 0.0
        %1005 = vmatmul.mubr.f32.gmra.mrb[0].mxu0 %v907
        %v1006 = vpop.f32.mrb[0].mxu0
        %v1007 = vadd.f32 %v889, %v1006
        %v1008 = vpop.f32.mrb[0].mxu0
        %1009 = vmatprep.mubr.f32.mxu0 0.0
        %1010 = vmatmul.mubr.f32.gmra.mrb[0].mxu0 %v910
        %v1011 = vpop.f32.mrb[0].mxu0
        %v1012 = vadd.f32 %v889, %v1011
        %v1013 = vpop.f32.mrb[0].mxu0
        %1014 = vmatprep.mubr.f32.mxu0 0.0
        %1015 = vmatmul.mubr.f32.gmra.mrb[0].mxu0 %v913
        %v1016 = vpop.f32.mrb[0].mxu0
        %v1017 = vadd.f32 %v889, %v1016
        %v1018 = vpop.f32.mrb[0].mxu0
        %1019 = vdwg.mxu0
        %v1020 = vld [vmem:[%s6] sm:$0xff]
        %v1021 = vld [vmem:[%s6 + $0x8] sm:$0xff]
        %v1022 = vld [vmem:[%s6 + $0x10] sm:$0xff]
        %v1023 = vld [vmem:[%s6 + $0x18] sm:$0xff]
        %v1024 = vld [vmem:[%s7] sm:$0x1]
        %v1026 = vlaneseq
        %v1027 = vshrl.u32 %v1026, 7
        %v1028 = vsub.s32 0, %v1027
        %v1029 = vrot.slane %v1024, %v1028
        %v1032 = vsel %vm634, %v982, 0
        %v1035 = vsel %vm634, %v987, 0
        %v1038 = vsel %vm634, %v992, 0
        %v1041 = vsel %vm634, %v997, 0
        %v1044 = vsel %vm634, %v1002, 0
        %v1047 = vsel %vm634, %v1007, 0
        %v1050 = vsel %vm634, %v1012, 0
        %v1053 = vsel %vm634, %v1017, 0
        %1055 = vmatprep.subr.mxu0 0.0
        %1056 = vmatpush1.msra.mxu0 %v1020
        %1057 = vmatprep.subr.mxu0 0.0
        %1058 = vmatpush1.msra.mxu0 %v1021
        %1059 = vmatprep.subr.mxu0 0.0
        %1060 = vmatpush1.msra.mxu0 %v1022
        %1061 = vmatprep.subr.mxu0 0.0
        %1062 = vmatpush1.msra.mxu0 %v1023
        %1063 = vmatprep.subr.mxu0 0.0
        %1064 = vmatpush1.msra.mxu0 0.0
        %1065 = vmatprep.subr.mxu0 0.0
        %1066 = vmatpush1.msra.mxu0 0.0
        %1067 = vmatprep.subr.mxu0 0.0
        %1068 = vmatpush1.msra.mxu0 0.0
        %1069 = vmatprep.subr.mxu0 0.0
        %1070 = vmatpush1.msra.mxu0 0.0
        %1071 = vmatprep.subr.mxu0 0.0
        %1072 = vmatpush1.msra.mxu0 0.0
        %1073 = vmatprep.subr.mxu0 0.0
        %1074 = vmatpush1.msra.mxu0 0.0
        %1075 = vmatprep.subr.mxu0 0.0
        %1076 = vmatpush1.msra.mxu0 0.0
        %1077 = vmatprep.subr.mxu0 0.0
        %1078 = vmatpush1.msra.mxu0 0.0
        %1079 = vmatprep.subr.mxu0 0.0
        %1080 = vmatpush1.msra.mxu0 0.0
        %1081 = vmatprep.subr.mxu0 0.0
        %1082 = vmatpush1.msra.mxu0 0.0
        %1083 = vmatprep.subr.mxu0 0.0
        %1084 = vmatpush1.msra.mxu0 0.0
        %1085 = vmatprep.subr.mxu0 0.0
        %1086 = vmatpush1.msra.mxu0 0.0
        %1087 = vmatprep.subr.mxu0 0.0
        %1088 = vmatpush1.msra.mxu0 0.0
        %1089 = vmatprep.subr.mxu0 0.0
        %1090 = vmatpush1.msra.mxu0 0.0
        %1091 = vmatprep.subr.mxu0 0.0
        %1092 = vmatpush1.msra.mxu0 0.0
        %1093 = vmatprep.subr.mxu0 0.0
        %1094 = vmatpush1.msra.mxu0 0.0
        %1095 = vmatprep.subr.mxu0 0.0
        %1096 = vmatpush1.msra.mxu0 0.0
        %1097 = vmatprep.subr.mxu0 0.0
        %1098 = vmatpush1.msra.mxu0 0.0
        %1099 = vmatprep.subr.mxu0 0.0
        %1100 = vmatpush1.msra.mxu0 0.0
        %1101 = vmatprep.subr.mxu0 0.0
        %1102 = vmatpush1.msra.mxu0 0.0
        %1103 = vmatprep.subr.mxu0 0.0
        %1104 = vmatpush1.msra.mxu0 0.0
        %1105 = vmatprep.subr.mxu0 0.0
        %1106 = vmatpush1.msra.mxu0 0.0
        %1107 = vmatprep.subr.mxu0 0.0
        %1108 = vmatpush1.msra.mxu0 0.0
        %1109 = vmatprep.subr.mxu0 0.0
        %1110 = vmatpush1.msra.mxu0 0.0
        %1111 = vmatprep.subr.mxu0 0.0
        %1112 = vmatpush1.msra.mxu0 0.0
        %1113 = vmatprep.subr.mxu0 0.0
        %1114 = vmatpush1.msra.mxu0 0.0
        %1115 = vmatprep.subr.mxu0 0.0
        %1116 = vmatpush1.msra.mxu0 0.0
        %1117 = vmatprep.subr.mxu0 0.0
        %1118 = vmatpush1.msra.mxu0 0.0
        %1119 = vmatprep.mubr.f32.mxu0 0.0
        %1120 = vmatmul.mubr.f32.gmra.mrb[0].mxu0 %v1032
        %v1121 = vpop.f32.mrb[0].mxu0
        %v1122 = vadd.f32 %v1029, %v1121
        %v1123 = vpop.f32.mrb[0].mxu0
        %1124 = vmatprep.mubr.f32.mxu0 0.0
        %1125 = vmatmul.mubr.f32.gmra.mrb[0].mxu0 %v1035
        %v1126 = vpop.f32.mrb[0].mxu0
        %v1127 = vadd.f32 %v1029, %v1126
        %v1128 = vpop.f32.mrb[0].mxu0
        %1129 = vmatprep.mubr.f32.mxu0 0.0
        %1130 = vmatmul.mubr.f32.gmra.mrb[0].mxu0 %v1038
        %v1131 = vpop.f32.mrb[0].mxu0
        %v1132 = vadd.f32 %v1029, %v1131
        %v1133 = vpop.f32.mrb[0].mxu0
        %1134 = vmatprep.mubr.f32.mxu0 0.0
        %1135 = vmatmul.mubr.f32.gmra.mrb[0].mxu0 %v1041
        %v1136 = vpop.f32.mrb[0].mxu0
        %v1137 = vadd.f32 %v1029, %v1136
        %v1138 = vpop.f32.mrb[0].mxu0
        %1139 = vmatprep.mubr.f32.mxu0 0.0
        %1140 = vmatmul.mubr.f32.gmra.mrb[0].mxu0 %v1044
        %v1141 = vpop.f32.mrb[0].mxu0
        %v1142 = vadd.f32 %v1029, %v1141
        %v1143 = vpop.f32.mrb[0].mxu0
        %1144 = vmatprep.mubr.f32.mxu0 0.0
        %1145 = vmatmul.mubr.f32.gmra.mrb[0].mxu0 %v1047
        %v1146 = vpop.f32.mrb[0].mxu0
        %v1147 = vadd.f32 %v1029, %v1146
        %v1148 = vpop.f32.mrb[0].mxu0
        %1149 = vmatprep.mubr.f32.mxu0 0.0
        %1150 = vmatmul.mubr.f32.gmra.mrb[0].mxu0 %v1050
        %v1151 = vpop.f32.mrb[0].mxu0
        %v1152 = vadd.f32 %v1029, %v1151
        %v1153 = vpop.f32.mrb[0].mxu0
        %1154 = vmatprep.mubr.f32.mxu0 0.0
        %1155 = vmatmul.mubr.f32.gmra.mrb[0].mxu0 %v1053
        %v1156 = vpop.f32.mrb[0].mxu0
        %v1157 = vadd.f32 %v1029, %v1156
        %v1158 = vpop.f32.mrb[0].mxu0
        %1159 = vdwg.mxu0
        %v1160 = vld [vmem:[%s8] sm:$0xff]
        %v1161 = vld [vmem:[%s8 + $0x8] sm:$0xff]
        %v1162 = vld [vmem:[%s8 + $0x10] sm:$0xff]
        %v1163 = vld [vmem:[%s8 + $0x18] sm:$0xff]
        %v1165 = vsel %vm634, %v1122, 0
        %v1168 = vsel %vm634, %v1127, 0
        %v1171 = vsel %vm634, %v1132, 0
        %v1174 = vsel %vm634, %v1137, 0
        %v1177 = vsel %vm634, %v1142, 0
        %v1180 = vsel %vm634, %v1147, 0
        %v1183 = vsel %vm634, %v1152, 0
        %v1186 = vsel %vm634, %v1157, 0
        %1188 = vmatprep.subr.mxu0 0.0
        %1189 = vmatpush1.msra.mxu0 %v1160
        %1190 = vmatprep.subr.mxu0 0.0
        %1191 = vmatpush1.msra.mxu0 %v1161
        %1192 = vmatprep.subr.mxu0 0.0
        %1193 = vmatpush1.msra.mxu0 %v1162
        %1194 = vmatprep.subr.mxu0 0.0
        %1195 = vmatpush1.msra.mxu0 %v1163
        %1196 = vmatprep.subr.mxu0 0.0
        %1197 = vmatpush1.msra.mxu0 0.0
        %1198 = vmatprep.subr.mxu0 0.0
        %1199 = vmatpush1.msra.mxu0 0.0
        %1200 = vmatprep.subr.mxu0 0.0
        %1201 = vmatpush1.msra.mxu0 0.0
        %1202 = vmatprep.subr.mxu0 0.0
        %1203 = vmatpush1.msra.mxu0 0.0
        %1204 = vmatprep.subr.mxu0 0.0
        %1205 = vmatpush1.msra.mxu0 0.0
        %1206 = vmatprep.subr.mxu0 0.0
        %1207 = vmatpush1.msra.mxu0 0.0
        %1208 = vmatprep.subr.mxu0 0.0
        %1209 = vmatpush1.msra.mxu0 0.0
        %1210 = vmatprep.subr.mxu0 0.0
        %1211 = vmatpush1.msra.mxu0 0.0
        %1212 = vmatprep.subr.mxu0 0.0
        %1213 = vmatpush1.msra.mxu0 0.0
        %1214 = vmatprep.subr.mxu0 0.0
        %1215 = vmatpush1.msra.mxu0 0.0
        %1216 = vmatprep.subr.mxu0 0.0
        %1217 = vmatpush1.msra.mxu0 0.0
        %1218 = vmatprep.subr.mxu0 0.0
        %1219 = vmatpush1.msra.mxu0 0.0
        %1220 = vmatprep.subr.mxu0 0.0
        %1221 = vmatpush1.msra.mxu0 0.0
        %1222 = vmatprep.subr.mxu0 0.0
        %1223 = vmatpush1.msra.mxu0 0.0
        %1224 = vmatprep.subr.mxu0 0.0
        %1225 = vmatpush1.msra.mxu0 0.0
        %1226 = vmatprep.subr.mxu0 0.0
        %1227 = vmatpush1.msra.mxu0 0.0
        %1228 = vmatprep.subr.mxu0 0.0
        %1229 = vmatpush1.msra.mxu0 0.0
        %1230 = vmatprep.subr.mxu0 0.0
        %1231 = vmatpush1.msra.mxu0 0.0
        %1232 = vmatprep.subr.mxu0 0.0
        %1233 = vmatpush1.msra.mxu0 0.0
        %1234 = vmatprep.subr.mxu0 0.0
        %1235 = vmatpush1.msra.mxu0 0.0
        %1236 = vmatprep.subr.mxu0 0.0
        %1237 = vmatpush1.msra.mxu0 0.0
        %1238 = vmatprep.subr.mxu0 0.0
        %1239 = vmatpush1.msra.mxu0 0.0
        %1240 = vmatprep.subr.mxu0 0.0
        %1241 = vmatpush1.msra.mxu0 0.0
        %1242 = vmatprep.subr.mxu0 0.0
        %1243 = vmatpush1.msra.mxu0 0.0
        %1244 = vmatprep.subr.mxu0 0.0
        %1245 = vmatpush1.msra.mxu0 0.0
        %1246 = vmatprep.subr.mxu0 0.0
        %1247 = vmatpush1.msra.mxu0 0.0
        %1248 = vmatprep.subr.mxu0 0.0
        %1249 = vmatpush1.msra.mxu0 0.0
        %1250 = vmatprep.subr.mxu0 0.0
        %1251 = vmatpush1.msra.mxu0 0.0
        %1252 = vmatprep.mubr.f32.mxu0 0.0
        %1253 = vmatmul.mubr.f32.gmra.mrb[0].mxu0 %v1165
        %v1254 = vpop.f32.mrb[0].mxu0
        %v1255 = vadd.f32 0.0, %v1254
        %v1256 = vpop.f32.mrb[0].mxu0
        %1257 = vmatprep.mubr.f32.mxu0 0.0
        %1258 = vmatmul.mubr.f32.gmra.mrb[0].mxu0 %v1168
        %v1259 = vpop.f32.mrb[0].mxu0
        %v1260 = vadd.f32 0.0, %v1259
        %v1261 = vpop.f32.mrb[0].mxu0
        %1262 = vmatprep.mubr.f32.mxu0 0.0
        %1263 = vmatmul.mubr.f32.gmra.mrb[0].mxu0 %v1171
        %v1264 = vpop.f32.mrb[0].mxu0
        %v1265 = vadd.f32 0.0, %v1264
        %v1266 = vpop.f32.mrb[0].mxu0
        %1267 = vmatprep.mubr.f32.mxu0 0.0
        %1268 = vmatmul.mubr.f32.gmra.mrb[0].mxu0 %v1174
        %v1269 = vpop.f32.mrb[0].mxu0
        %v1270 = vadd.f32 0.0, %v1269
        %v1271 = vpop.f32.mrb[0].mxu0
        %1272 = vmatprep.mubr.f32.mxu0 0.0
        %1273 = vmatmul.mubr.f32.gmra.mrb[0].mxu0 %v1177
        %v1274 = vpop.f32.mrb[0].mxu0
        %v1275 = vadd.f32 0.0, %v1274
        %v1276 = vpop.f32.mrb[0].mxu0
        %1277 = vmatprep.mubr.f32.mxu0 0.0
        %1278 = vmatmul.mubr.f32.gmra.mrb[0].mxu0 %v1180
        %v1279 = vpop.f32.mrb[0].mxu0
        %v1280 = vadd.f32 0.0, %v1279
        %v1281 = vpop.f32.mrb[0].mxu0
        %1282 = vmatprep.mubr.f32.mxu0 0.0
        %1283 = vmatmul.mubr.f32.gmra.mrb[0].mxu0 %v1183
        %v1284 = vpop.f32.mrb[0].mxu0
        %v1285 = vadd.f32 0.0, %v1284
        %v1286 = vpop.f32.mrb[0].mxu0
        %1287 = vmatprep.mubr.f32.mxu0 0.0
        %1288 = vmatmul.mubr.f32.gmra.mrb[0].mxu0 %v1186
        %v1289 = vpop.f32.mrb[0].mxu0
        %v1290 = vadd.f32 0.0, %v1289
        %v1291 = vpop.f32.mrb[0].mxu0
        %1292 = vdwg.mxu0
        %1293 = vst.msk [vmem:[%s9] sm:$0xff] %vm634, %v1255
        %1294 = vst.msk [vmem:[%s9 + $0x8] sm:$0xff] %vm634, %v1260
        %1295 = vst.msk [vmem:[%s9 + $0x10] sm:$0xff] %vm634, %v1265
        %1296 = vst.msk [vmem:[%s9 + $0x18] sm:$0xff] %vm634, %v1270
        %1297 = vst.msk [vmem:[%s9 + $0x20] sm:$0xff] %vm634, %v1275
        %1298 = vst.msk [vmem:[%s9 + $0x28] sm:$0xff] %vm634, %v1280
        %1299 = vst.msk [vmem:[%s9 + $0x30] sm:$0xff] %vm634, %v1285
        %1300 = vst.msk [vmem:[%s9 + $0x38] sm:$0xff] %vm634, %v1290
      $region64: #{hno_forward.4} parent=55 // pred_fallthru
        _
      // Predicated region
      $region65: #{hno_forward.4} parent=55 // pred_check
        %p1301 = pneg %p232
      $region66: #{hno_forward.4} parent=55 // pred_check_branch
        %1303 = sbr.rel (%p1301) target = $region68
      $region67: #{hno_forward.4} parent=55 // pred_region
        _
      $region68: #{hno_forward.4} parent=55 // pred_fallthru
        _
      // Predicated region
      $region69: #{hno_forward.4} parent=55 // pred_check
        %p1304 = pneg %p232
      $region70: #{hno_forward.4} parent=55 // pred_check_branch
        %1306 = sbr.rel (%p1304) target = $region72
      $region71: #{hno_forward.4} parent=55 // pred_region
        _
      $region72: #{hno_forward.4} parent=55 // pred_fallthru
        _
    $region56: #{hno_forward.4} parent=5 // pred_fallthru
      _
    %p1307 = scmp.le.s32.totalorder 2, %s15
    // Predicated region
    $region73: #{hno_forward.4} parent=5 // pred_check
      %p1308 = pneg %p1307
    $region74: #{hno_forward.4} parent=5 // pred_check_branch
      %1310 = sbr.rel (%p1308) target = $region76
    $region75: #{hno_forward.4} parent=5 // pred_region
      %s1311 = ssub.s32 %s15, 2
    $region76: #{hno_forward.4} parent=5 // pred_fallthru
      _
  $region6: #{hno_forward.4} parent=0 // loop_footer
    %s19 = sadd.s32 1, %s15
  $region7: #{hno_forward.4} parent=0 // loop_footer_branch
    %14 = sbr.rel target = $region3
  $region8: #{hno_forward.4} parent=0 // loop_exit
    _

</llo_original>
